<compile_context>
chip_gen: v6e
topology: v6e:2x2x1
jax: 0.10.0
libtpu: 0.0.40
codegen_flags: <defaults>
</compile_context>

<pallas_src>
import math
import functools

import jax
import jax.numpy as jnp
from jax import lax
from jax.experimental import pallas as pl
from jax.experimental.pallas import tpu as pltpu

LN_EPS = 1e-5  # PyTorch nn.LayerNorm default


def _layernorm(x, gamma, beta):
    mean = jnp.mean(x, axis=-1, keepdims=True)
    var = jnp.mean((x - mean) ** 2, axis=-1, keepdims=True)  # biased, as PyTorch
    return (x - mean) * lax.rsqrt(var + LN_EPS) * gamma + beta


def _self_attn_block_kernel(
    srcq_ref, srckv_ref,
    wq_ref, bq_ref, wk_ref, bk_ref, wv_ref, bv_ref, wo_ref, bo_ref,
    w1_ref, b1_ref, w2_ref, b2_ref,
    g1_ref, be1_ref, g2_ref, be2_ref,
    out_ref,
    *, nhead: int, d_k: int,
):
    f32 = jnp.float32
    bf16 = jnp.bfloat16

    xq = srcq_ref[0].astype(f32)      # (TQ, D)  query rows for this grid step
    xkv = srckv_ref[0].astype(f32)    # (L,  D)  full sequence (key/value source)
    xq_b = xq.astype(bf16)
    xkv_b = xkv.astype(bf16)

    # --- QKV projections: full-width lane-dense bf16 matmuls, f32 accumulation ---
    q = jnp.dot(xq_b, wq_ref[...], preferred_element_type=f32) + bq_ref[...]
    k = jnp.dot(xkv_b, wk_ref[...], preferred_element_type=f32) + bk_ref[...]
    v = jnp.dot(xkv_b, wv_ref[...], preferred_element_type=f32) + bv_ref[...]

    qb = q.astype(bf16)
    kb = k.astype(bf16)
    vb = v.astype(bf16)
    wo = wo_ref[...]                   # (D, D) bf16; row-sliced per head below

    scale = 1.0 / math.sqrt(d_k)
    dn_qkT = (((1,), (1,)), ((), ()))  # contract last dims: q @ k^T without a transpose

    # Static unroll over heads; output projection fused per head so no concat.
    attn = None
    for h in range(nhead):
        lo, hi = h * d_k, (h + 1) * d_k
        qh, kh, vh = qb[:, lo:hi], kb[:, lo:hi], vb[:, lo:hi]
        s = lax.dot_general(qh, kh, dn_qkT, preferred_element_type=f32) * scale  # (TQ, L)
        s = s - jnp.max(s, axis=-1, keepdims=True)
        e = jnp.exp(s)
        p = e * pl.reciprocal(jnp.sum(e, axis=-1, keepdims=True), approx=True)
        ctx = jnp.dot(p.astype(bf16), vh, preferred_element_type=f32)            # (TQ, d_k)
        contrib = jnp.dot(ctx.astype(bf16), wo[lo:hi, :],
                          preferred_element_type=f32)                            # (TQ, D)
        attn = contrib if attn is None else attn + contrib
    attn = attn + bo_ref[...]

    # --- residual + LayerNorm1 (f32) ---
    y = _layernorm(xq + attn, g1_ref[...], be1_ref[...])

    # --- MLP: Linear -> ReLU -> Linear (bf16 MXU, f32 accumulation) ---
    h1 = jnp.dot(y.astype(bf16), w1_ref[...], preferred_element_type=f32) + b1_ref[...]
    h1 = jnp.maximum(h1, 0.0)
    h2 = jnp.dot(h1.astype(bf16), w2_ref[...], preferred_element_type=f32) + b2_ref[...]

    # --- residual + LayerNorm2 ---
    z = _layernorm(y + h2, g2_ref[...], be2_ref[...])
    out_ref[0] = z.astype(out_ref.dtype)


def self_attn_layer(src, params, *, nhead: int):
    """src: (B, L, D) float32.  params: dict of f32 weights (see init_params)."""
    B, L, D = src.shape
    H = params["w1"].shape[1]
    assert D % nhead == 0
    d_k = D // nhead

    # Query-row tile: extra parallel grid axis (DMA/compute pipelining and
    # megacore sharding) and bounded per-step VMEM.  K/V are re-projected from
    # the full sequence each step (cheap relative to attention for L >> D).
    tq = L
    for cand in (256, 128):
        if L % cand == 0:
            tq = cand
            break

    bf16 = jnp.bfloat16
    wq = params["wq"].astype(bf16)
    wk = params["wk"].astype(bf16)
    wv = params["wv"].astype(bf16)
    wo = params["wo"].astype(bf16)
    w1 = params["w1"].astype(bf16)
    w2 = params["w2"].astype(bf16)

    def wspec(shape):
        return pl.BlockSpec(shape, lambda qi, b: (0, 0))

    in_specs = [
        pl.BlockSpec((1, tq, D), lambda qi, b: (b, qi, 0)),   # src (query rows)
        pl.BlockSpec((1, L, D), lambda qi, b: (b, 0, 0)),     # src (full seq for K/V)
        wspec((D, D)), wspec((1, D)),                         # wq, bq
        wspec((D, D)), wspec((1, D)),                         # wk, bk
        wspec((D, D)), wspec((1, D)),                         # wv, bv
        wspec((D, D)), wspec((1, D)),                         # wo, bo
        wspec((D, H)), wspec((1, H)),                         # w1, b1
        wspec((H, D)), wspec((1, D)),                         # w2, b2
        wspec((1, D)), wspec((1, D)),                         # gamma1, beta1
        wspec((1, D)), wspec((1, D)),                         # gamma2, beta2
    ]

    # VMEM budget: bf16 weights (double-buffered) + f32 activation blocks + temporaries.
    est = (
        2 * 2 * (4 * D * D + 2 * D * H)                      # bf16 weights, x2 buffers
        + 2 * 4 * (2 * tq * D + L * D)                       # src_q / out / src_kv blocks
        + 4 * (3 * L * D + tq * L + tq * H + 6 * tq * D)     # in-kernel temporaries
        + (4 << 20)                                          # headroom
    )
    vmem_limit = int(min(max(est, 32 * 1024 * 1024), 64 * 1024 * 1024))

    kernel = functools.partial(_self_attn_block_kernel, nhead=nhead, d_k=d_k)

    return pl.pallas_call(
        kernel,
        out_shape=jax.ShapeDtypeStruct((B, L, D), src.dtype),
        grid_spec=pltpu.PrefetchScalarGridSpec(
            num_scalar_prefetch=0,
            grid=(L // tq, B),            # query-block axis leading (even 2-TC split)
            in_specs=in_specs,
            out_specs=pl.BlockSpec((1, tq, D), lambda qi, b: (b, qi, 0)),
        ),
        compiler_params=pltpu.CompilerParams(
            dimension_semantics=("parallel", "parallel"),
            vmem_limit_bytes=vmem_limit,
        ),
    )(
        src, src,
        wq, params["bq"], wk, params["bk"], wv, params["bv"], wo, params["bo"],
        w1, params["b1"], w2, params["b2"],
        params["g1"], params["be1"], params["g2"], params["be2"],
    )


def init_params(key, in_dim, hidden_dim):
    """Deterministic synthetic weights.  Linear weights stored (in, out), f32."""
    ks = jax.random.split(key, 12)
    s = 0.05

    def lin(kw, kb, din, dout):
        w = jax.random.normal(kw, (din, dout), jnp.float32) * s
        b = jax.random.normal(kb, (1, dout), jnp.float32) * s
        return w, b

    wq, bq = lin(ks[0], ks[1], in_dim, in_dim)
    wk, bk = lin(ks[2], ks[3], in_dim, in_dim)
    wv, bv = lin(ks[4], ks[5], in_dim, in_dim)
    wo, bo = lin(ks[6], ks[7], in_dim, in_dim)
    w1, b1 = lin(ks[8], ks[9], in_dim, hidden_dim)
    w2, b2 = lin(ks[10], ks[11], hidden_dim, in_dim)
    return dict(
        wq=wq, bq=bq, wk=wk, bk=bk, wv=wv, bv=bv, wo=wo, bo=bo,
        w1=w1, b1=b1, w2=w2, b2=b2,
        g1=jnp.ones((1, in_dim), jnp.float32), be1=jnp.zeros((1, in_dim), jnp.float32),
        g2=jnp.ones((1, in_dim), jnp.float32), be2=jnp.zeros((1, in_dim), jnp.float32),
    )


def reference(src, params, *, nhead):
    """Pure-JAX f32 reference of SelfAttnLayer.forward_post (eval mode)."""
    B, L, D = src.shape
    d_k = D // nhead

    def proj(x, w, b):
        return x @ w + b

    q = proj(src, params["wq"], params["bq"]).reshape(B, L, nhead, d_k).transpose(0, 2, 1, 3)
    k = proj(src, params["wk"], params["bk"]).reshape(B, L, nhead, d_k).transpose(0, 2, 1, 3)
    v = proj(src, params["wv"], params["bv"]).reshape(B, L, nhead, d_k).transpose(0, 2, 1, 3)
    scores = jnp.einsum("bhqd,bhkd->bhqk", q, k) / math.sqrt(d_k)
    p = jax.nn.softmax(scores, axis=-1)
    o = jnp.einsum("bhqk,bhkd->bhqd", p, v).transpose(0, 2, 1, 3).reshape(B, L, D)
    o = proj(o, params["wo"], params["bo"])

    def ln(x, g, b):
        m = jnp.mean(x, -1, keepdims=True)
        var = jnp.mean((x - m) ** 2, -1, keepdims=True)
        return (x - m) / jnp.sqrt(var + LN_EPS) * g + b

    x = ln(src + o, params["g1"], params["be1"])
    h = jnp.maximum(proj(x, params["w1"], params["b1"]), 0.0)
    h = proj(h, params["w2"], params["b2"])
    return ln(x + h, params["g2"], params["be2"])


if __name__ == "__main__":
    # Lane-dense small shapes: D and HID multiples of 128.
    B, L, D, HID, NHEAD = 2, 128, 128, 256, 4
    key = jax.random.PRNGKey(0)
    k_src, k_par = jax.random.split(key)
    src = jax.random.normal(k_src, (B, L, D), jnp.float32)
    params = init_params(k_par, D, HID)

    out = self_attn_layer(src, params, nhead=NHEAD)
    out = jax.block_until_ready(out)

    ref = reference(src, params, nhead=NHEAD)
    assert out.shape == (B, L, D)
    err = float(jnp.max(jnp.abs(out - ref)))
    # bf16 MXU operands vs. an all-f32 reference -> looser tolerance than pure f32.
    assert err < 5e-2, err
    print("KERNEL_OK")
</pallas_src>

<mosaic_0001>
module attributes {stable_mosaic.version = 11 : i64} {
  func.func @_self_attn_block_kernel(%arg0: i32, %arg1: i32, %arg2: memref<1x128x128xf32, #tpu.memory_space<vmem>>, %arg3: memref<1x128x128xf32, #tpu.memory_space<vmem>>, %arg4: memref<128x128xbf16, #tpu.memory_space<vmem>>, %arg5: memref<1x128xf32, #tpu.memory_space<vmem>>, %arg6: memref<128x128xbf16, #tpu.memory_space<vmem>>, %arg7: memref<1x128xf32, #tpu.memory_space<vmem>>, %arg8: memref<128x128xbf16, #tpu.memory_space<vmem>>, %arg9: memref<1x128xf32, #tpu.memory_space<vmem>>, %arg10: memref<128x128xbf16, #tpu.memory_space<vmem>>, %arg11: memref<1x128xf32, #tpu.memory_space<vmem>>, %arg12: memref<128x256xbf16, #tpu.memory_space<vmem>>, %arg13: memref<1x256xf32, #tpu.memory_space<vmem>>, %arg14: memref<256x128xbf16, #tpu.memory_space<vmem>>, %arg15: memref<1x128xf32, #tpu.memory_space<vmem>>, %arg16: memref<1x128xf32, #tpu.memory_space<vmem>>, %arg17: memref<1x128xf32, #tpu.memory_space<vmem>>, %arg18: memref<1x128xf32, #tpu.memory_space<vmem>>, %arg19: memref<1x128xf32, #tpu.memory_space<vmem>>, %arg20: memref<1x128x128xf32, #tpu.memory_space<vmem>>) attributes {dimension_semantics = [#tpu.dimension_semantics<parallel>, #tpu.dimension_semantics<parallel>], iteration_bounds = array<i64: 1, 2>, scalar_prefetch = 0 : i64, scratch_operands = 0 : i64, tpu.core_type = #tpu.core_type<tc>, window_params = [{transform_indices = @transform_0, window_bounds = array<i64: 1, 128, 128>}, {transform_indices = @transform_1, window_bounds = array<i64: 1, 128, 128>}, {pipeline_mode = #tpu.pipeline_mode<synchronous>, transform_indices = @transform_2, window_bounds = array<i64: 128, 128>}, {pipeline_mode = #tpu.pipeline_mode<synchronous>, transform_indices = @transform_3, window_bounds = array<i64: 1, 128>}, {pipeline_mode = #tpu.pipeline_mode<synchronous>, transform_indices = @transform_4, window_bounds = array<i64: 128, 128>}, {pipeline_mode = #tpu.pipeline_mode<synchronous>, transform_indices = @transform_5, window_bounds = array<i64: 1, 128>}, {pipeline_mode = #tpu.pipeline_mode<synchronous>, transform_indices = @transform_6, window_bounds = array<i64: 128, 128>}, {pipeline_mode = #tpu.pipeline_mode<synchronous>, transform_indices = @transform_7, window_bounds = array<i64: 1, 128>}, {pipeline_mode = #tpu.pipeline_mode<synchronous>, transform_indices = @transform_8, window_bounds = array<i64: 128, 128>}, {pipeline_mode = #tpu.pipeline_mode<synchronous>, transform_indices = @transform_9, window_bounds = array<i64: 1, 128>}, {pipeline_mode = #tpu.pipeline_mode<synchronous>, transform_indices = @transform_10, window_bounds = array<i64: 128, 256>}, {pipeline_mode = #tpu.pipeline_mode<synchronous>, transform_indices = @transform_11, window_bounds = array<i64: 1, 256>}, {pipeline_mode = #tpu.pipeline_mode<synchronous>, transform_indices = @transform_12, window_bounds = array<i64: 256, 128>}, {pipeline_mode = #tpu.pipeline_mode<synchronous>, transform_indices = @transform_13, window_bounds = array<i64: 1, 128>}, {pipeline_mode = #tpu.pipeline_mode<synchronous>, transform_indices = @transform_14, window_bounds = array<i64: 1, 128>}, {pipeline_mode = #tpu.pipeline_mode<synchronous>, transform_indices = @transform_15, window_bounds = array<i64: 1, 128>}, {pipeline_mode = #tpu.pipeline_mode<synchronous>, transform_indices = @transform_16, window_bounds = array<i64: 1, 128>}, {pipeline_mode = #tpu.pipeline_mode<synchronous>, transform_indices = @transform_17, window_bounds = array<i64: 1, 128>}, {transform_indices = @transform_18, window_bounds = array<i64: 1, 128, 128>}]} {
    %c0 = arith.constant 0 : index
    %c0_0 = arith.constant 0 : index
    %c0_1 = arith.constant 0 : index
    %0 = vector.load %arg2[%c0, %c0_0, %c0_1] : memref<1x128x128xf32, #tpu.memory_space<vmem>>, vector<1x128x128xf32>
    %1 = vector.shape_cast %0 : vector<1x128x128xf32> to vector<128x128xf32>
    %c0_2 = arith.constant 0 : index
    %c0_3 = arith.constant 0 : index
    %c0_4 = arith.constant 0 : index
    %2 = vector.load %arg3[%c0_2, %c0_3, %c0_4] : memref<1x128x128xf32, #tpu.memory_space<vmem>>, vector<1x128x128xf32>
    %3 = vector.shape_cast %2 : vector<1x128x128xf32> to vector<128x128xf32>
    %4 = arith.truncf %1 : vector<128x128xf32> to vector<128x128xbf16>
    %5 = arith.truncf %3 : vector<128x128xf32> to vector<128x128xbf16>
    %c0_5 = arith.constant 0 : index
    %c0_6 = arith.constant 0 : index
    %6 = vector.load %arg4[%c0_5, %c0_6] : memref<128x128xbf16, #tpu.memory_space<vmem>>, vector<128x128xbf16>
    %cst = arith.constant dense<0.000000e+00> : vector<128x128xf32>
    %7 = tpu.matmul %4, %6, %cst {dimension_numbers = #tpu.dot_dimension_numbers<[1], [0], [0], [1], [0, 0, 1, 1], [], []>} : vector<128x128xbf16>, vector<128x128xbf16>, vector<128x128xf32> -> vector<128x128xf32>
    %c0_7 = arith.constant 0 : index
    %c0_8 = arith.constant 0 : index
    %8 = vector.load %arg5[%c0_7, %c0_8] : memref<1x128xf32, #tpu.memory_space<vmem>>, vector<1x128xf32>
    %9 = vector.broadcast %8 : vector<1x128xf32> to vector<128x128xf32>
    %10 = arith.addf %7, %9 : vector<128x128xf32>
    %c0_9 = arith.constant 0 : index
    %c0_10 = arith.constant 0 : index
    %11 = vector.load %arg6[%c0_9, %c0_10] : memref<128x128xbf16, #tpu.memory_space<vmem>>, vector<128x128xbf16>
    %cst_11 = arith.constant dense<0.000000e+00> : vector<128x128xf32>
    %12 = tpu.matmul %5, %11, %cst_11 {dimension_numbers = #tpu.dot_dimension_numbers<[1], [0], [0], [1], [0, 0, 1, 1], [], []>} : vector<128x128xbf16>, vector<128x128xbf16>, vector<128x128xf32> -> vector<128x128xf32>
    %c0_12 = arith.constant 0 : index
    %c0_13 = arith.constant 0 : index
    %13 = vector.load %arg7[%c0_12, %c0_13] : memref<1x128xf32, #tpu.memory_space<vmem>>, vector<1x128xf32>
    %14 = vector.broadcast %13 : vector<1x128xf32> to vector<128x128xf32>
    %15 = arith.addf %12, %14 : vector<128x128xf32>
    %c0_14 = arith.constant 0 : index
    %c0_15 = arith.constant 0 : index
    %16 = vector.load %arg8[%c0_14, %c0_15] : memref<128x128xbf16, #tpu.memory_space<vmem>>, vector<128x128xbf16>
    %cst_16 = arith.constant dense<0.000000e+00> : vector<128x128xf32>
    %17 = tpu.matmul %5, %16, %cst_16 {dimension_numbers = #tpu.dot_dimension_numbers<[1], [0], [0], [1], [0, 0, 1, 1], [], []>} : vector<128x128xbf16>, vector<128x128xbf16>, vector<128x128xf32> -> vector<128x128xf32>
    %c0_17 = arith.constant 0 : index
    %c0_18 = arith.constant 0 : index
    %18 = vector.load %arg9[%c0_17, %c0_18] : memref<1x128xf32, #tpu.memory_space<vmem>>, vector<1x128xf32>
    %19 = vector.broadcast %18 : vector<1x128xf32> to vector<128x128xf32>
    %20 = arith.addf %17, %19 : vector<128x128xf32>
    %21 = arith.truncf %10 : vector<128x128xf32> to vector<128x128xbf16>
    %22 = arith.truncf %15 : vector<128x128xf32> to vector<128x128xbf16>
    %23 = arith.truncf %20 : vector<128x128xf32> to vector<128x128xbf16>
    %c0_19 = arith.constant 0 : index
    %c0_20 = arith.constant 0 : index
    %24 = vector.load %arg10[%c0_19, %c0_20] : memref<128x128xbf16, #tpu.memory_space<vmem>>, vector<128x128xbf16>
    %25 = vector.extract_strided_slice %21 {offsets = [0, 0], sizes = [128, 32], strides = [1, 1]} : vector<128x128xbf16> to vector<128x32xbf16>
    %26 = vector.extract_strided_slice %22 {offsets = [0, 0], sizes = [128, 32], strides = [1, 1]} : vector<128x128xbf16> to vector<128x32xbf16>
    %27 = vector.extract_strided_slice %23 {offsets = [0, 0], sizes = [128, 32], strides = [1, 1]} : vector<128x128xbf16> to vector<128x32xbf16>
    %cst_21 = arith.constant dense<0.000000e+00> : vector<128x128xf32>
    %28 = tpu.matmul %25, %26, %cst_21 {dimension_numbers = #tpu.dot_dimension_numbers<[1], [1], [0], [0], [0, 0, 1, 0], [], []>} : vector<128x32xbf16>, vector<128x32xbf16>, vector<128x128xf32> -> vector<128x128xf32>
    %cst_22 = arith.constant 0.176776692 : f32
    %29 = vector.broadcast %cst_22 : f32 to vector<128x128xf32>
    %30 = arith.mulf %28, %29 : vector<128x128xf32>
    %cst_23 = arith.constant dense<0xFF800000> : vector<128xf32>
    %31 = vector.multi_reduction <maximumf>, %30, %cst_23 [1] : vector<128x128xf32> to vector<128xf32>
    %32 = vector.shape_cast %31 : vector<128xf32> to vector<128x1xf32>
    %33 = vector.broadcast %32 : vector<128x1xf32> to vector<128x128xf32>
    %34 = arith.subf %30, %33 : vector<128x128xf32>
    %35 = math.exp %34 : vector<128x128xf32>
    %cst_24 = arith.constant dense<0.000000e+00> : vector<128xf32>
    %36 = vector.multi_reduction <add>, %35, %cst_24 [1] : vector<128x128xf32> to vector<128xf32>
    %37 = vector.shape_cast %36 : vector<128xf32> to vector<128x1xf32>
    %38 = tpu.reciprocal %37 {approx = true} : vector<128x1xf32> -> vector<128x1xf32>
    %39 = vector.broadcast %38 : vector<128x1xf32> to vector<128x128xf32>
    %40 = arith.mulf %35, %39 : vector<128x128xf32>
    %41 = arith.truncf %40 : vector<128x128xf32> to vector<128x128xbf16>
    %cst_25 = arith.constant dense<0.000000e+00> : vector<128x32xf32>
    %42 = tpu.matmul %41, %27, %cst_25 {dimension_numbers = #tpu.dot_dimension_numbers<[1], [0], [0], [1], [0, 0, 1, 1], [], []>} : vector<128x128xbf16>, vector<128x32xbf16>, vector<128x32xf32> -> vector<128x32xf32>
    %43 = arith.truncf %42 : vector<128x32xf32> to vector<128x32xbf16>
    %44 = vector.extract_strided_slice %24 {offsets = [0, 0], sizes = [32, 128], strides = [1, 1]} : vector<128x128xbf16> to vector<32x128xbf16>
    %cst_26 = arith.constant dense<0.000000e+00> : vector<128x128xf32>
    %45 = tpu.matmul %43, %44, %cst_26 {dimension_numbers = #tpu.dot_dimension_numbers<[1], [0], [0], [1], [0, 0, 1, 1], [], []>} : vector<128x32xbf16>, vector<32x128xbf16>, vector<128x128xf32> -> vector<128x128xf32>
    %46 = vector.extract_strided_slice %21 {offsets = [0, 32], sizes = [128, 32], strides = [1, 1]} : vector<128x128xbf16> to vector<128x32xbf16>
    %47 = vector.extract_strided_slice %22 {offsets = [0, 32], sizes = [128, 32], strides = [1, 1]} : vector<128x128xbf16> to vector<128x32xbf16>
    %48 = vector.extract_strided_slice %23 {offsets = [0, 32], sizes = [128, 32], strides = [1, 1]} : vector<128x128xbf16> to vector<128x32xbf16>
    %cst_27 = arith.constant dense<0.000000e+00> : vector<128x128xf32>
    %49 = tpu.matmul %46, %47, %cst_27 {dimension_numbers = #tpu.dot_dimension_numbers<[1], [1], [0], [0], [0, 0, 1, 0], [], []>} : vector<128x32xbf16>, vector<128x32xbf16>, vector<128x128xf32> -> vector<128x128xf32>
    %cst_28 = arith.constant 0.176776692 : f32
    %50 = vector.broadcast %cst_28 : f32 to vector<128x128xf32>
    %51 = arith.mulf %49, %50 : vector<128x128xf32>
    %cst_29 = arith.constant dense<0xFF800000> : vector<128xf32>
    %52 = vector.multi_reduction <maximumf>, %51, %cst_29 [1] : vector<128x128xf32> to vector<128xf32>
    %53 = vector.shape_cast %52 : vector<128xf32> to vector<128x1xf32>
    %54 = vector.broadcast %53 : vector<128x1xf32> to vector<128x128xf32>
    %55 = arith.subf %51, %54 : vector<128x128xf32>
    %56 = math.exp %55 : vector<128x128xf32>
    %cst_30 = arith.constant dense<0.000000e+00> : vector<128xf32>
    %57 = vector.multi_reduction <add>, %56, %cst_30 [1] : vector<128x128xf32> to vector<128xf32>
    %58 = vector.shape_cast %57 : vector<128xf32> to vector<128x1xf32>
    %59 = tpu.reciprocal %58 {approx = true} : vector<128x1xf32> -> vector<128x1xf32>
    %60 = vector.broadcast %59 : vector<128x1xf32> to vector<128x128xf32>
    %61 = arith.mulf %56, %60 : vector<128x128xf32>
    %62 = arith.truncf %61 : vector<128x128xf32> to vector<128x128xbf16>
    %cst_31 = arith.constant dense<0.000000e+00> : vector<128x32xf32>
    %63 = tpu.matmul %62, %48, %cst_31 {dimension_numbers = #tpu.dot_dimension_numbers<[1], [0], [0], [1], [0, 0, 1, 1], [], []>} : vector<128x128xbf16>, vector<128x32xbf16>, vector<128x32xf32> -> vector<128x32xf32>
    %64 = arith.truncf %63 : vector<128x32xf32> to vector<128x32xbf16>
    %65 = vector.extract_strided_slice %24 {offsets = [32, 0], sizes = [32, 128], strides = [1, 1]} : vector<128x128xbf16> to vector<32x128xbf16>
    %cst_32 = arith.constant dense<0.000000e+00> : vector<128x128xf32>
    %66 = tpu.matmul %64, %65, %cst_32 {dimension_numbers = #tpu.dot_dimension_numbers<[1], [0], [0], [1], [0, 0, 1, 1], [], []>} : vector<128x32xbf16>, vector<32x128xbf16>, vector<128x128xf32> -> vector<128x128xf32>
    %67 = arith.addf %45, %66 : vector<128x128xf32>
    %68 = vector.extract_strided_slice %21 {offsets = [0, 64], sizes = [128, 32], strides = [1, 1]} : vector<128x128xbf16> to vector<128x32xbf16>
    %69 = vector.extract_strided_slice %22 {offsets = [0, 64], sizes = [128, 32], strides = [1, 1]} : vector<128x128xbf16> to vector<128x32xbf16>
    %70 = vector.extract_strided_slice %23 {offsets = [0, 64], sizes = [128, 32], strides = [1, 1]} : vector<128x128xbf16> to vector<128x32xbf16>
    %cst_33 = arith.constant dense<0.000000e+00> : vector<128x128xf32>
    %71 = tpu.matmul %68, %69, %cst_33 {dimension_numbers = #tpu.dot_dimension_numbers<[1], [1], [0], [0], [0, 0, 1, 0], [], []>} : vector<128x32xbf16>, vector<128x32xbf16>, vector<128x128xf32> -> vector<128x128xf32>
    %cst_34 = arith.constant 0.176776692 : f32
    %72 = vector.broadcast %cst_34 : f32 to vector<128x128xf32>
    %73 = arith.mulf %71, %72 : vector<128x128xf32>
    %cst_35 = arith.constant dense<0xFF800000> : vector<128xf32>
    %74 = vector.multi_reduction <maximumf>, %73, %cst_35 [1] : vector<128x128xf32> to vector<128xf32>
    %75 = vector.shape_cast %74 : vector<128xf32> to vector<128x1xf32>
    %76 = vector.broadcast %75 : vector<128x1xf32> to vector<128x128xf32>
    %77 = arith.subf %73, %76 : vector<128x128xf32>
    %78 = math.exp %77 : vector<128x128xf32>
    %cst_36 = arith.constant dense<0.000000e+00> : vector<128xf32>
    %79 = vector.multi_reduction <add>, %78, %cst_36 [1] : vector<128x128xf32> to vector<128xf32>
    %80 = vector.shape_cast %79 : vector<128xf32> to vector<128x1xf32>
    %81 = tpu.reciprocal %80 {approx = true} : vector<128x1xf32> -> vector<128x1xf32>
    %82 = vector.broadcast %81 : vector<128x1xf32> to vector<128x128xf32>
    %83 = arith.mulf %78, %82 : vector<128x128xf32>
    %84 = arith.truncf %83 : vector<128x128xf32> to vector<128x128xbf16>
    %cst_37 = arith.constant dense<0.000000e+00> : vector<128x32xf32>
    %85 = tpu.matmul %84, %70, %cst_37 {dimension_numbers = #tpu.dot_dimension_numbers<[1], [0], [0], [1], [0, 0, 1, 1], [], []>} : vector<128x128xbf16>, vector<128x32xbf16>, vector<128x32xf32> -> vector<128x32xf32>
    %86 = arith.truncf %85 : vector<128x32xf32> to vector<128x32xbf16>
    %87 = vector.extract_strided_slice %24 {offsets = [64, 0], sizes = [32, 128], strides = [1, 1]} : vector<128x128xbf16> to vector<32x128xbf16>
    %cst_38 = arith.constant dense<0.000000e+00> : vector<128x128xf32>
    %88 = tpu.matmul %86, %87, %cst_38 {dimension_numbers = #tpu.dot_dimension_numbers<[1], [0], [0], [1], [0, 0, 1, 1], [], []>} : vector<128x32xbf16>, vector<32x128xbf16>, vector<128x128xf32> -> vector<128x128xf32>
    %89 = arith.addf %67, %88 : vector<128x128xf32>
    %90 = vector.extract_strided_slice %21 {offsets = [0, 96], sizes = [128, 32], strides = [1, 1]} : vector<128x128xbf16> to vector<128x32xbf16>
    %91 = vector.extract_strided_slice %22 {offsets = [0, 96], sizes = [128, 32], strides = [1, 1]} : vector<128x128xbf16> to vector<128x32xbf16>
    %92 = vector.extract_strided_slice %23 {offsets = [0, 96], sizes = [128, 32], strides = [1, 1]} : vector<128x128xbf16> to vector<128x32xbf16>
    %cst_39 = arith.constant dense<0.000000e+00> : vector<128x128xf32>
    %93 = tpu.matmul %90, %91, %cst_39 {dimension_numbers = #tpu.dot_dimension_numbers<[1], [1], [0], [0], [0, 0, 1, 0], [], []>} : vector<128x32xbf16>, vector<128x32xbf16>, vector<128x128xf32> -> vector<128x128xf32>
    %cst_40 = arith.constant 0.176776692 : f32
    %94 = vector.broadcast %cst_40 : f32 to vector<128x128xf32>
    %95 = arith.mulf %93, %94 : vector<128x128xf32>
    %cst_41 = arith.constant dense<0xFF800000> : vector<128xf32>
    %96 = vector.multi_reduction <maximumf>, %95, %cst_41 [1] : vector<128x128xf32> to vector<128xf32>
    %97 = vector.shape_cast %96 : vector<128xf32> to vector<128x1xf32>
    %98 = vector.broadcast %97 : vector<128x1xf32> to vector<128x128xf32>
    %99 = arith.subf %95, %98 : vector<128x128xf32>
    %100 = math.exp %99 : vector<128x128xf32>
    %cst_42 = arith.constant dense<0.000000e+00> : vector<128xf32>
    %101 = vector.multi_reduction <add>, %100, %cst_42 [1] : vector<128x128xf32> to vector<128xf32>
    %102 = vector.shape_cast %101 : vector<128xf32> to vector<128x1xf32>
    %103 = tpu.reciprocal %102 {approx = true} : vector<128x1xf32> -> vector<128x1xf32>
    %104 = vector.broadcast %103 : vector<128x1xf32> to vector<128x128xf32>
    %105 = arith.mulf %100, %104 : vector<128x128xf32>
    %106 = arith.truncf %105 : vector<128x128xf32> to vector<128x128xbf16>
    %cst_43 = arith.constant dense<0.000000e+00> : vector<128x32xf32>
    %107 = tpu.matmul %106, %92, %cst_43 {dimension_numbers = #tpu.dot_dimension_numbers<[1], [0], [0], [1], [0, 0, 1, 1], [], []>} : vector<128x128xbf16>, vector<128x32xbf16>, vector<128x32xf32> -> vector<128x32xf32>
    %108 = arith.truncf %107 : vector<128x32xf32> to vector<128x32xbf16>
    %109 = vector.extract_strided_slice %24 {offsets = [96, 0], sizes = [32, 128], strides = [1, 1]} : vector<128x128xbf16> to vector<32x128xbf16>
    %cst_44 = arith.constant dense<0.000000e+00> : vector<128x128xf32>
    %110 = tpu.matmul %108, %109, %cst_44 {dimension_numbers = #tpu.dot_dimension_numbers<[1], [0], [0], [1], [0, 0, 1, 1], [], []>} : vector<128x32xbf16>, vector<32x128xbf16>, vector<128x128xf32> -> vector<128x128xf32>
    %111 = arith.addf %89, %110 : vector<128x128xf32>
    %c0_45 = arith.constant 0 : index
    %c0_46 = arith.constant 0 : index
    %112 = vector.load %arg11[%c0_45, %c0_46] : memref<1x128xf32, #tpu.memory_space<vmem>>, vector<1x128xf32>
    %113 = vector.broadcast %112 : vector<1x128xf32> to vector<128x128xf32>
    %114 = arith.addf %111, %113 : vector<128x128xf32>
    %115 = arith.addf %1, %114 : vector<128x128xf32>
    %c0_47 = arith.constant 0 : index
    %c0_48 = arith.constant 0 : index
    %116 = vector.load %arg16[%c0_47, %c0_48] : memref<1x128xf32, #tpu.memory_space<vmem>>, vector<1x128xf32>
    %c0_49 = arith.constant 0 : index
    %c0_50 = arith.constant 0 : index
    %117 = vector.load %arg17[%c0_49, %c0_50] : memref<1x128xf32, #tpu.memory_space<vmem>>, vector<1x128xf32>
    %cst_51 = arith.constant dense<0.000000e+00> : vector<128xf32>
    %118 = vector.multi_reduction <add>, %115, %cst_51 [1] : vector<128x128xf32> to vector<128xf32>
    %119 = vector.shape_cast %118 : vector<128xf32> to vector<128x1xf32>
    %cst_52 = arith.constant 1.280000e+02 : f32
    %120 = vector.broadcast %cst_52 : f32 to vector<128x1xf32>
    %121 = arith.divf %119, %120 : vector<128x1xf32>
    %122 = vector.broadcast %121 : vector<128x1xf32> to vector<128x128xf32>
    %123 = arith.subf %115, %122 : vector<128x128xf32>
    %124 = arith.mulf %123, %123 : vector<128x128xf32>
    %cst_53 = arith.constant dense<0.000000e+00> : vector<128xf32>
    %125 = vector.multi_reduction <add>, %124, %cst_53 [1] : vector<128x128xf32> to vector<128xf32>
    %126 = vector.shape_cast %125 : vector<128xf32> to vector<128x1xf32>
    %cst_54 = arith.constant 1.280000e+02 : f32
    %127 = vector.broadcast %cst_54 : f32 to vector<128x1xf32>
    %128 = arith.divf %126, %127 : vector<128x1xf32>
    %129 = vector.broadcast %121 : vector<128x1xf32> to vector<128x128xf32>
    %130 = arith.subf %115, %129 : vector<128x128xf32>
    %cst_55 = arith.constant 9.99999974E-6 : f32
    %131 = vector.broadcast %cst_55 : f32 to vector<128x1xf32>
    %132 = arith.addf %128, %131 : vector<128x1xf32>
    %133 = math.rsqrt %132 : vector<128x1xf32>
    %134 = vector.broadcast %133 : vector<128x1xf32> to vector<128x128xf32>
    %135 = arith.mulf %130, %134 : vector<128x128xf32>
    %136 = vector.broadcast %116 : vector<1x128xf32> to vector<128x128xf32>
    %137 = arith.mulf %135, %136 : vector<128x128xf32>
    %138 = vector.broadcast %117 : vector<1x128xf32> to vector<128x128xf32>
    %139 = arith.addf %137, %138 : vector<128x128xf32>
    %140 = arith.truncf %139 : vector<128x128xf32> to vector<128x128xbf16>
    %c0_56 = arith.constant 0 : index
    %c0_57 = arith.constant 0 : index
    %141 = vector.load %arg12[%c0_56, %c0_57] : memref<128x256xbf16, #tpu.memory_space<vmem>>, vector<128x256xbf16>
    %cst_58 = arith.constant dense<0.000000e+00> : vector<128x256xf32>
    %142 = tpu.matmul %140, %141, %cst_58 {dimension_numbers = #tpu.dot_dimension_numbers<[1], [0], [0], [1], [0, 0, 1, 1], [], []>} : vector<128x128xbf16>, vector<128x256xbf16>, vector<128x256xf32> -> vector<128x256xf32>
    %c0_59 = arith.constant 0 : index
    %c0_60 = arith.constant 0 : index
    %143 = vector.load %arg13[%c0_59, %c0_60] : memref<1x256xf32, #tpu.memory_space<vmem>>, vector<1x256xf32>
    %144 = vector.broadcast %143 : vector<1x256xf32> to vector<128x256xf32>
    %145 = arith.addf %142, %144 : vector<128x256xf32>
    %cst_61 = arith.constant 0.000000e+00 : f32
    %146 = vector.broadcast %cst_61 : f32 to vector<128x256xf32>
    %147 = arith.maximumf %145, %146 : vector<128x256xf32>
    %148 = arith.truncf %147 : vector<128x256xf32> to vector<128x256xbf16>
    %c0_62 = arith.constant 0 : index
    %c0_63 = arith.constant 0 : index
    %149 = vector.load %arg14[%c0_62, %c0_63] : memref<256x128xbf16, #tpu.memory_space<vmem>>, vector<256x128xbf16>
    %cst_64 = arith.constant dense<0.000000e+00> : vector<128x128xf32>
    %150 = tpu.matmul %148, %149, %cst_64 {dimension_numbers = #tpu.dot_dimension_numbers<[1], [0], [0], [1], [0, 0, 1, 1], [], []>} : vector<128x256xbf16>, vector<256x128xbf16>, vector<128x128xf32> -> vector<128x128xf32>
    %c0_65 = arith.constant 0 : index
    %c0_66 = arith.constant 0 : index
    %151 = vector.load %arg15[%c0_65, %c0_66] : memref<1x128xf32, #tpu.memory_space<vmem>>, vector<1x128xf32>
    %152 = vector.broadcast %151 : vector<1x128xf32> to vector<128x128xf32>
    %153 = arith.addf %150, %152 : vector<128x128xf32>
    %154 = arith.addf %139, %153 : vector<128x128xf32>
    %c0_67 = arith.constant 0 : index
    %c0_68 = arith.constant 0 : index
    %155 = vector.load %arg18[%c0_67, %c0_68] : memref<1x128xf32, #tpu.memory_space<vmem>>, vector<1x128xf32>
    %c0_69 = arith.constant 0 : index
    %c0_70 = arith.constant 0 : index
    %156 = vector.load %arg19[%c0_69, %c0_70] : memref<1x128xf32, #tpu.memory_space<vmem>>, vector<1x128xf32>
    %cst_71 = arith.constant dense<0.000000e+00> : vector<128xf32>
    %157 = vector.multi_reduction <add>, %154, %cst_71 [1] : vector<128x128xf32> to vector<128xf32>
    %158 = vector.shape_cast %157 : vector<128xf32> to vector<128x1xf32>
    %cst_72 = arith.constant 1.280000e+02 : f32
    %159 = vector.broadcast %cst_72 : f32 to vector<128x1xf32>
    %160 = arith.divf %158, %159 : vector<128x1xf32>
    %161 = vector.broadcast %160 : vector<128x1xf32> to vector<128x128xf32>
    %162 = arith.subf %154, %161 : vector<128x128xf32>
    %163 = arith.mulf %162, %162 : vector<128x128xf32>
    %cst_73 = arith.constant dense<0.000000e+00> : vector<128xf32>
    %164 = vector.multi_reduction <add>, %163, %cst_73 [1] : vector<128x128xf32> to vector<128xf32>
    %165 = vector.shape_cast %164 : vector<128xf32> to vector<128x1xf32>
    %cst_74 = arith.constant 1.280000e+02 : f32
    %166 = vector.broadcast %cst_74 : f32 to vector<128x1xf32>
    %167 = arith.divf %165, %166 : vector<128x1xf32>
    %168 = vector.broadcast %160 : vector<128x1xf32> to vector<128x128xf32>
    %169 = arith.subf %154, %168 : vector<128x128xf32>
    %cst_75 = arith.constant 9.99999974E-6 : f32
    %170 = vector.broadcast %cst_75 : f32 to vector<128x1xf32>
    %171 = arith.addf %167, %170 : vector<128x1xf32>
    %172 = math.rsqrt %171 : vector<128x1xf32>
    %173 = vector.broadcast %172 : vector<128x1xf32> to vector<128x128xf32>
    %174 = arith.mulf %169, %173 : vector<128x128xf32>
    %175 = vector.broadcast %155 : vector<1x128xf32> to vector<128x128xf32>
    %176 = arith.mulf %174, %175 : vector<128x128xf32>
    %177 = vector.broadcast %156 : vector<1x128xf32> to vector<128x128xf32>
    %178 = arith.addf %176, %177 : vector<128x128xf32>
    %c0_76 = arith.constant 0 : index
    %c0_77 = arith.constant 0 : index
    %c0_78 = arith.constant 0 : index
    %179 = vector.load %arg20[%c0_76, %c0_77, %c0_78] : memref<1x128x128xf32, #tpu.memory_space<vmem>>, vector<1x128x128xf32>
    %180 = vector.shape_cast %179 : vector<1x128x128xf32> to vector<128x128xf32>
    %181 = vector.shape_cast %178 : vector<128x128xf32> to vector<1x128x128xf32>
    tpu.vector_store %arg20[%c0_76, %c0_77, %c0_78], %181 {strides = array<i32>} : memref<1x128x128xf32, #tpu.memory_space<vmem>>, vector<1x128x128xf32>,
    return
  }
  func.func @transform_0(%arg0: i32, %arg1: i32) -> (i32, i32, i32) {
    %c0_i32 = arith.constant 0 : i32
    %c0_i32_0 = arith.constant 0 : i32
    return %arg1, %arg0, %c0_i32 : i32, i32, i32
  }
  func.func @transform_1(%arg0: i32, %arg1: i32) -> (i32, i32, i32) {
    %c0_i32 = arith.constant 0 : i32
    %c0_i32_0 = arith.constant 0 : i32
    %c0_i32_1 = arith.constant 0 : i32
    return %arg1, %c0_i32, %c0_i32_0 : i32, i32, i32
  }
  func.func @transform_2(%arg0: i32, %arg1: i32) -> (i32, i32) {
    %c0_i32 = arith.constant 0 : i32
    %c0_i32_0 = arith.constant 0 : i32
    %c0_i32_1 = arith.constant 0 : i32
    return %c0_i32, %c0_i32_0 : i32, i32
  }
  func.func @transform_3(%arg0: i32, %arg1: i32) -> (i32, i32) {
    %c0_i32 = arith.constant 0 : i32
    %c0_i32_0 = arith.constant 0 : i32
    %c0_i32_1 = arith.constant 0 : i32
    return %c0_i32, %c0_i32_0 : i32, i32
  }
  func.func @transform_4(%arg0: i32, %arg1: i32) -> (i32, i32) {
    %c0_i32 = arith.constant 0 : i32
    %c0_i32_0 = arith.constant 0 : i32
    %c0_i32_1 = arith.constant 0 : i32
    return %c0_i32, %c0_i32_0 : i32, i32
  }
  func.func @transform_5(%arg0: i32, %arg1: i32) -> (i32, i32) {
    %c0_i32 = arith.constant 0 : i32
    %c0_i32_0 = arith.constant 0 : i32
    %c0_i32_1 = arith.constant 0 : i32
    return %c0_i32, %c0_i32_0 : i32, i32
  }
  func.func @transform_6(%arg0: i32, %arg1: i32) -> (i32, i32) {
    %c0_i32 = arith.constant 0 : i32
    %c0_i32_0 = arith.constant 0 : i32
    %c0_i32_1 = arith.constant 0 : i32
    return %c0_i32, %c0_i32_0 : i32, i32
  }
  func.func @transform_7(%arg0: i32, %arg1: i32) -> (i32, i32) {
    %c0_i32 = arith.constant 0 : i32
    %c0_i32_0 = arith.constant 0 : i32
    %c0_i32_1 = arith.constant 0 : i32
    return %c0_i32, %c0_i32_0 : i32, i32
  }
  func.func @transform_8(%arg0: i32, %arg1: i32) -> (i32, i32) {
    %c0_i32 = arith.constant 0 : i32
    %c0_i32_0 = arith.constant 0 : i32
    %c0_i32_1 = arith.constant 0 : i32
    return %c0_i32, %c0_i32_0 : i32, i32
  }
  func.func @transform_9(%arg0: i32, %arg1: i32) -> (i32, i32) {
    %c0_i32 = arith.constant 0 : i32
    %c0_i32_0 = arith.constant 0 : i32
    %c0_i32_1 = arith.constant 0 : i32
    return %c0_i32, %c0_i32_0 : i32, i32
  }
  func.func @transform_10(%arg0: i32, %arg1: i32) -> (i32, i32) {
    %c0_i32 = arith.constant 0 : i32
    %c0_i32_0 = arith.constant 0 : i32
    %c0_i32_1 = arith.constant 0 : i32
    return %c0_i32, %c0_i32_0 : i32, i32
  }
  func.func @transform_11(%arg0: i32, %arg1: i32) -> (i32, i32) {
    %c0_i32 = arith.constant 0 : i32
    %c0_i32_0 = arith.constant 0 : i32
    %c0_i32_1 = arith.constant 0 : i32
    return %c0_i32, %c0_i32_0 : i32, i32
  }
  func.func @transform_12(%arg0: i32, %arg1: i32) -> (i32, i32) {
    %c0_i32 = arith.constant 0 : i32
    %c0_i32_0 = arith.constant 0 : i32
    %c0_i32_1 = arith.constant 0 : i32
    return %c0_i32, %c0_i32_0 : i32, i32
  }
  func.func @transform_13(%arg0: i32, %arg1: i32) -> (i32, i32) {
    %c0_i32 = arith.constant 0 : i32
    %c0_i32_0 = arith.constant 0 : i32
    %c0_i32_1 = arith.constant 0 : i32
    return %c0_i32, %c0_i32_0 : i32, i32
  }
  func.func @transform_14(%arg0: i32, %arg1: i32) -> (i32, i32) {
    %c0_i32 = arith.constant 0 : i32
    %c0_i32_0 = arith.constant 0 : i32
    %c0_i32_1 = arith.constant 0 : i32
    return %c0_i32, %c0_i32_0 : i32, i32
  }
  func.func @transform_15(%arg0: i32, %arg1: i32) -> (i32, i32) {
    %c0_i32 = arith.constant 0 : i32
    %c0_i32_0 = arith.constant 0 : i32
    %c0_i32_1 = arith.constant 0 : i32
    return %c0_i32, %c0_i32_0 : i32, i32
  }
  func.func @transform_16(%arg0: i32, %arg1: i32) -> (i32, i32) {
    %c0_i32 = arith.constant 0 : i32
    %c0_i32_0 = arith.constant 0 : i32
    %c0_i32_1 = arith.constant 0 : i32
    return %c0_i32, %c0_i32_0 : i32, i32
  }
  func.func @transform_17(%arg0: i32, %arg1: i32) -> (i32, i32) {
    %c0_i32 = arith.constant 0 : i32
    %c0_i32_0 = arith.constant 0 : i32
    %c0_i32_1 = arith.constant 0 : i32
    return %c0_i32, %c0_i32_0 : i32, i32
  }
  func.func @transform_18(%arg0: i32, %arg1: i32) -> (i32, i32, i32) {
    %c0_i32 = arith.constant 0 : i32
    %c0_i32_0 = arith.constant 0 : i32
    return %arg1, %arg0, %c0_i32 : i32, i32, i32
  }
}

</mosaic_0001>

<llo_original>
// kernel: tpu_custom_call.1
$region0: #{tpu_custom_call.1}
  #allocation0 [shape = 'u32[]', space=smem, size = 0x4, offset = 0x4, fixed_abs, tag = 'smem constant byte address 0x4 - core index']
  #allocation1 [shape = 'u32[144,128]{1,0:T(1,128)}', space=vmem, size = 0x12000, scoped, tag = 'internal scratch']
  %s0 = inlined_call_operand.hbm [shape: f32[2,128,128], index: 0, kind: input, shape index: {}]
  %s1 = inlined_call_operand.hbm [shape: f32[2,128,128], index: 1, kind: input, shape index: {}]
  %s2 = inlined_call_operand.hbm [shape: bf16[128,128], index: 2, kind: input, shape index: {}]
  %s3 = inlined_call_operand.vmem [shape: f32[1,128], index: 3, kind: input, shape index: {}]
  %s4 = inlined_call_operand.hbm [shape: bf16[128,128], index: 4, kind: input, shape index: {}]
  %s5 = inlined_call_operand.vmem [shape: f32[1,128], index: 5, kind: input, shape index: {}]
  %s6 = inlined_call_operand.hbm [shape: bf16[128,128], index: 6, kind: input, shape index: {}]
  %s7 = inlined_call_operand.vmem [shape: f32[1,128], index: 7, kind: input, shape index: {}]
  %s8 = inlined_call_operand.hbm [shape: bf16[128,128], index: 8, kind: input, shape index: {}]
  %s9 = inlined_call_operand.vmem [shape: f32[1,128], index: 9, kind: input, shape index: {}]
  %s10 = inlined_call_operand.hbm [shape: bf16[128,256], index: 10, kind: input, shape index: {}]
  %s11 = inlined_call_operand.vmem [shape: f32[1,256], index: 11, kind: input, shape index: {}]
  %s12 = inlined_call_operand.hbm [shape: bf16[256,128], index: 12, kind: input, shape index: {}]
  %s13 = inlined_call_operand.vmem [shape: f32[1,128], index: 13, kind: input, shape index: {}]
  %s14 = inlined_call_operand.vmem [shape: f32[1,128], index: 14, kind: input, shape index: {}]
  %s15 = inlined_call_operand.vmem [shape: f32[1,128], index: 15, kind: input, shape index: {}]
  %s16 = inlined_call_operand.vmem [shape: f32[1,128], index: 16, kind: input, shape index: {}]
  %s17 = inlined_call_operand.vmem [shape: f32[1,128], index: 17, kind: input, shape index: {}]
  %s18 = inlined_call_operand.hbm [shape: f32[2,128,128], index: 18, kind: output, shape index: {}]
  %s19 = sld [smem:[#allocation0]]
  $region137: #{tpu_custom_call.1} parent=0
    _
  %s21 = ssub.s32 1, %s19
  %s22 = scalar_select 0, %s21, %s19
  $region1: #{tpu_custom_call.1} parent=0
    #allocation2 [shape = 'u8[131072]{0}', space=vmem, size = 0x20000, scoped, tag = 'input window, operand 0']
    #allocation3 [shape = 's32[2]{0}', space=sflag, size = 0x8, scoped, tag = 'scoped memory for tpu_custom_call.1']
    #allocation4 [shape = 's32[2]{0}', space=sflag, size = 0x8, scoped, tag = 'scoped memory for tpu_custom_call.1']
    #allocation5 [shape = 'u8[131072]{0}', space=vmem, size = 0x20000, scoped, tag = 'input window, operand 1']
    #allocation6 [shape = 's32[2]{0}', space=sflag, size = 0x8, scoped, tag = 'scoped memory for tpu_custom_call.1']
    #allocation7 [shape = 'u8[32768]{0}', space=vmem, size = 0x8000, scoped, tag = 'input window, operand 2, single buffered']
    #allocation8 [shape = 'u8[32768]{0}', space=vmem, size = 0x8000, scoped, tag = 'input window, operand 4, single buffered']
    #allocation9 [shape = 's32[1]{0}', space=sflag, size = 0x4, scoped, tag = 'scoped memory for tpu_custom_call.1']
    #allocation10 [shape = 'u8[32768]{0}', space=vmem, size = 0x8000, scoped, tag = 'input window, operand 6, single buffered']
    #allocation11 [shape = 'u8[32768]{0}', space=vmem, size = 0x8000, scoped, tag = 'input window, operand 8, single buffered']
    #allocation12 [shape = 's32[1]{0}', space=sflag, size = 0x4, scoped, tag = 'scoped memory for tpu_custom_call.1']
    #allocation13 [shape = 'u8[65536]{0}', space=vmem, size = 0x10000, scoped, tag = 'input window, operand 10, single buffered']
    #allocation14 [shape = 'u8[65536]{0}', space=vmem, size = 0x10000, scoped, tag = 'input window, operand 12, single buffered']
    #allocation15 [shape = 's32[1]{0}', space=sflag, size = 0x4, scoped, tag = 'scoped memory for tpu_custom_call.1']
    #allocation16 [shape = 'u8[131072]{0}', space=vmem, size = 0x20000, scoped, tag = 'output window, operand 0']
    %23 = vsyncpa [#allocation3], 0
    %s24 = scalar_lea.sflag [#allocation3], 1
    %25 = vsyncpa %s24, 0
    %26 = vsyncpa [#allocation6], 0
    %s27 = scalar_lea.sflag [#allocation6], 1
    %28 = vsyncpa %s27, 0
    %29 = vsyncpa [#allocation9], 0
    %30 = vsyncpa [#allocation12], 0
    %31 = vsyncpa [#allocation15], 0
    %32 = vsyncpa [#allocation4], 0
    %s33 = scalar_lea.sflag [#allocation4], 1
    %34 = vsyncpa %s33, 0
    loop: start=0, step=1, limit=4
    $region2: #{tpu_custom_call.1} parent=1 // loop_pre_header
      _
    $region3: #{tpu_custom_call.1} parent=1 // loop_header
      %s36 = sphi 0, %s40
      %p37 = scmp.ge.s32.totalorder %s36, 4
      %s43 = sphi 0, %s55
      %s44 = sphi 0, %s51
      %s45 = sphi 0, %s43
      %s46 = sphi 0, %s44
      %s47 = sphi 0, %s45
      %s48 = sphi 0, %s46
      %s60 = sphi 0, %s62
      %s63 = sphi 0, %s60
      %s64 = sphi 0, %s63
      %s80 = sphi 0, %s64
      %s86 = sphi 0, %s88
      %s89 = sphi 0, %s86
      %s90 = sphi 0, %s89
      %s106 = sphi 0, %s90
      %s110 = sphi 0, %s110
      %s112 = sphi 0, %s110
      %s113 = sphi 0, %s112
      %s127 = sphi 0, %s113
      %s131 = sphi 0, %s131
      %s133 = sphi 0, %s131
      %s134 = sphi 0, %s133
      %s148 = sphi 0, %s134
      %s152 = sphi 0, %s152
      %s154 = sphi 0, %s152
      %s155 = sphi 0, %s154
      %s169 = sphi 0, %s155
      %s173 = sphi 0, %s173
      %s175 = sphi 0, %s173
      %s176 = sphi 0, %s175
      %s190 = sphi 0, %s176
      %s194 = sphi 0, %s194
      %s196 = sphi 0, %s194
      %s197 = sphi 0, %s196
      %s211 = sphi 0, %s197
      %s215 = sphi 0, %s215
      %s217 = sphi 0, %s215
      %s218 = sphi 0, %s217
      %s232 = sphi 0, %s218
      %s236 = sphi 0, %s236
      %s238 = sphi 0, %s236
      %s239 = sphi 0, %s238
      %s253 = sphi 0, %s239
      %s257 = sphi 0, %s257
      %s259 = sphi 0, %s257
      %s260 = sphi 0, %s259
      %s274 = sphi 0, %s260
      %s278 = sphi 0, %s278
      %s280 = sphi 0, %s278
      %s281 = sphi 0, %s280
      %s295 = sphi 0, %s281
      %s299 = sphi 0, %s299
      %s301 = sphi 0, %s299
      %s302 = sphi 0, %s301
      %s316 = sphi 0, %s302
      %s320 = sphi 0, %s320
      %s322 = sphi 0, %s320
      %s323 = sphi 0, %s322
      %s337 = sphi 0, %s323
      %s341 = sphi 0, %s341
      %s343 = sphi 0, %s341
      %s344 = sphi 0, %s343
      %s358 = sphi 0, %s344
      %s362 = sphi 0, %s362
      %s364 = sphi 0, %s362
      %s365 = sphi 0, %s364
      %s379 = sphi 0, %s365
      %s383 = sphi 0, %s383
      %s385 = sphi 0, %s383
      %s386 = sphi 0, %s385
      %s400 = sphi 0, %s386
      %s404 = sphi 0, %s404
      %s406 = sphi 0, %s404
      %s407 = sphi 0, %s406
      %s421 = sphi 0, %s407
      %s425 = sphi 0, %s425
      %s427 = sphi 0, %s425
      %s428 = sphi 0, %s427
      %s442 = sphi 0, %s428
      %s450 = sphi 0, %s452
      %s453 = sphi 0, %s450
      %s454 = sphi 0, %s453
      %s470 = sphi 0, %s454
    $region4: #{tpu_custom_call.1} parent=1 // loop_header_branch
      %39 = sbr.rel (%p37) target = $region8
    $region5: #{tpu_custom_call.1} parent=1 // loop_body
      %s41 = ssub.s32 %s36, 1
      %s42 = ssub.s32 %s36, 2
      %s49 = sadd.s32 1, %s44
      %p50 = scmp.ge.s32.totalorder %s49, 2
      %s51 = scalar_select %p50, 0, %s49
      %s52 = sadd.s32 1, %s43
      %s53 = scalar_select %p50, %s52, %s43
      %p54 = scmp.ge.s32.totalorder %s53, 1
      %s55 = scalar_select %p54, 0, %s53
      %s56 = ssub.s32 %s44, %s51
      %s57 = ssub.s32 %s43, %s55
      %s58 = sor.u32 %s56, %s57
      %p59 = scmp.eq.s32.totalorder %s58, 0
      %s61 = sadd.s32 %s60, 1
      %s62 = scalar_select %p59, %s60, %s61
      %p65 = pneg %p59
      %p66 = scmp.eq.s32.totalorder %s36, 1
      %p67 = por %p65, %p66
      %p68 = scmp.ne.s32.totalorder %s60, %s63
      %p69 = scmp.eq.s32.totalorder %s36, 0
      %p70 = por %p68, %p69
      %p71 = scmp.ne.s32.totalorder %s60, %s63
      %p72 = scmp.eq.s32.totalorder %s41, 1
      %p73 = por %p71, %p72
      %p74 = scmp.ne.s32.totalorder %s63, %s64
      %p75 = scmp.eq.s32.totalorder %s41, 0
      %p76 = por %p74, %p75
      %p77 = scmp.ne.s32.totalorder %s63, %s64
      %p78 = scmp.eq.s32.totalorder %s42, 1
      %p79 = por %p77, %p78
      %p81 = scmp.ne.s32.totalorder %s64, %s80
      %p82 = scmp.eq.s32.totalorder %s42, 0
      %p83 = por %p81, %p82
      %s84 = ssub.s32 %s44, %s51
      %p85 = scmp.eq.s32.totalorder %s84, 0
      %s87 = sadd.s32 %s86, 1
      %s88 = scalar_select %p85, %s86, %s87
      %p91 = pneg %p85
      %p92 = scmp.eq.s32.totalorder %s36, 1
      %p93 = por %p91, %p92
      %p94 = scmp.ne.s32.totalorder %s86, %s89
      %p95 = scmp.eq.s32.totalorder %s36, 0
      %p96 = por %p94, %p95
      %p97 = scmp.ne.s32.totalorder %s86, %s89
      %p98 = scmp.eq.s32.totalorder %s41, 1
      %p99 = por %p97, %p98
      %p100 = scmp.ne.s32.totalorder %s89, %s90
      %p101 = scmp.eq.s32.totalorder %s41, 0
      %p102 = por %p100, %p101
      %p103 = scmp.ne.s32.totalorder %s89, %s90
      %p104 = scmp.eq.s32.totalorder %s42, 1
      %p105 = por %p103, %p104
      %p107 = scmp.ne.s32.totalorder %s90, %s106
      %p108 = scmp.eq.s32.totalorder %s42, 0
      %p109 = por %p107, %p108
      %s111 = sadd.s32 %s110, 1
      %p114 = scmp.eq.s32.totalorder %s36, 1
      %p115 = scmp.ne.s32.totalorder %s110, %s112
      %p116 = scmp.eq.s32.totalorder %s36, 0
      %p117 = por %p115, %p116
      %p118 = scmp.ne.s32.totalorder %s110, %s112
      %p119 = scmp.eq.s32.totalorder %s41, 1
      %p120 = por %p118, %p119
      %p121 = scmp.ne.s32.totalorder %s112, %s113
      %p122 = scmp.eq.s32.totalorder %s41, 0
      %p123 = por %p121, %p122
      %p124 = scmp.ne.s32.totalorder %s112, %s113
      %p125 = scmp.eq.s32.totalorder %s42, 1
      %p126 = por %p124, %p125
      %p128 = scmp.ne.s32.totalorder %s113, %s127
      %p129 = scmp.eq.s32.totalorder %s42, 0
      %p130 = por %p128, %p129
      %s132 = sadd.s32 %s131, 1
      %p135 = scmp.eq.s32.totalorder %s36, 1
      %p136 = scmp.ne.s32.totalorder %s131, %s133
      %p137 = scmp.eq.s32.totalorder %s36, 0
      %p138 = por %p136, %p137
      %p139 = scmp.ne.s32.totalorder %s131, %s133
      %p140 = scmp.eq.s32.totalorder %s41, 1
      %p141 = por %p139, %p140
      %p142 = scmp.ne.s32.totalorder %s133, %s134
      %p143 = scmp.eq.s32.totalorder %s41, 0
      %p144 = por %p142, %p143
      %p145 = scmp.ne.s32.totalorder %s133, %s134
      %p146 = scmp.eq.s32.totalorder %s42, 1
      %p147 = por %p145, %p146
      %p149 = scmp.ne.s32.totalorder %s134, %s148
      %p150 = scmp.eq.s32.totalorder %s42, 0
      %p151 = por %p149, %p150
      %s153 = sadd.s32 %s152, 1
      %p156 = scmp.eq.s32.totalorder %s36, 1
      %p157 = scmp.ne.s32.totalorder %s152, %s154
      %p158 = scmp.eq.s32.totalorder %s36, 0
      %p159 = por %p157, %p158
      %p160 = scmp.ne.s32.totalorder %s152, %s154
      %p161 = scmp.eq.s32.totalorder %s41, 1
      %p162 = por %p160, %p161
      %p163 = scmp.ne.s32.totalorder %s154, %s155
      %p164 = scmp.eq.s32.totalorder %s41, 0
      %p165 = por %p163, %p164
      %p166 = scmp.ne.s32.totalorder %s154, %s155
      %p167 = scmp.eq.s32.totalorder %s42, 1
      %p168 = por %p166, %p167
      %p170 = scmp.ne.s32.totalorder %s155, %s169
      %p171 = scmp.eq.s32.totalorder %s42, 0
      %p172 = por %p170, %p171
      %s174 = sadd.s32 %s173, 1
      %p177 = scmp.eq.s32.totalorder %s36, 1
      %p178 = scmp.ne.s32.totalorder %s173, %s175
      %p179 = scmp.eq.s32.totalorder %s36, 0
      %p180 = por %p178, %p179
      %p181 = scmp.ne.s32.totalorder %s173, %s175
      %p182 = scmp.eq.s32.totalorder %s41, 1
      %p183 = por %p181, %p182
      %p184 = scmp.ne.s32.totalorder %s175, %s176
      %p185 = scmp.eq.s32.totalorder %s41, 0
      %p186 = por %p184, %p185
      %p187 = scmp.ne.s32.totalorder %s175, %s176
      %p188 = scmp.eq.s32.totalorder %s42, 1
      %p189 = por %p187, %p188
      %p191 = scmp.ne.s32.totalorder %s176, %s190
      %p192 = scmp.eq.s32.totalorder %s42, 0
      %p193 = por %p191, %p192
      %s195 = sadd.s32 %s194, 1
      %p198 = scmp.eq.s32.totalorder %s36, 1
      %p199 = scmp.ne.s32.totalorder %s194, %s196
      %p200 = scmp.eq.s32.totalorder %s36, 0
      %p201 = por %p199, %p200
      %p202 = scmp.ne.s32.totalorder %s194, %s196
      %p203 = scmp.eq.s32.totalorder %s41, 1
      %p204 = por %p202, %p203
      %p205 = scmp.ne.s32.totalorder %s196, %s197
      %p206 = scmp.eq.s32.totalorder %s41, 0
      %p207 = por %p205, %p206
      %p208 = scmp.ne.s32.totalorder %s196, %s197
      %p209 = scmp.eq.s32.totalorder %s42, 1
      %p210 = por %p208, %p209
      %p212 = scmp.ne.s32.totalorder %s197, %s211
      %p213 = scmp.eq.s32.totalorder %s42, 0
      %p214 = por %p212, %p213
      %s216 = sadd.s32 %s215, 1
      %p219 = scmp.eq.s32.totalorder %s36, 1
      %p220 = scmp.ne.s32.totalorder %s215, %s217
      %p221 = scmp.eq.s32.totalorder %s36, 0
      %p222 = por %p220, %p221
      %p223 = scmp.ne.s32.totalorder %s215, %s217
      %p224 = scmp.eq.s32.totalorder %s41, 1
      %p225 = por %p223, %p224
      %p226 = scmp.ne.s32.totalorder %s217, %s218
      %p227 = scmp.eq.s32.totalorder %s41, 0
      %p228 = por %p226, %p227
      %p229 = scmp.ne.s32.totalorder %s217, %s218
      %p230 = scmp.eq.s32.totalorder %s42, 1
      %p231 = por %p229, %p230
      %p233 = scmp.ne.s32.totalorder %s218, %s232
      %p234 = scmp.eq.s32.totalorder %s42, 0
      %p235 = por %p233, %p234
      %s237 = sadd.s32 %s236, 1
      %p240 = scmp.eq.s32.totalorder %s36, 1
      %p241 = scmp.ne.s32.totalorder %s236, %s238
      %p242 = scmp.eq.s32.totalorder %s36, 0
      %p243 = por %p241, %p242
      %p244 = scmp.ne.s32.totalorder %s236, %s238
      %p245 = scmp.eq.s32.totalorder %s41, 1
      %p246 = por %p244, %p245
      %p247 = scmp.ne.s32.totalorder %s238, %s239
      %p248 = scmp.eq.s32.totalorder %s41, 0
      %p249 = por %p247, %p248
      %p250 = scmp.ne.s32.totalorder %s238, %s239
      %p251 = scmp.eq.s32.totalorder %s42, 1
      %p252 = por %p250, %p251
      %p254 = scmp.ne.s32.totalorder %s239, %s253
      %p255 = scmp.eq.s32.totalorder %s42, 0
      %p256 = por %p254, %p255
      %s258 = sadd.s32 %s257, 1
      %p261 = scmp.eq.s32.totalorder %s36, 1
      %p262 = scmp.ne.s32.totalorder %s257, %s259
      %p263 = scmp.eq.s32.totalorder %s36, 0
      %p264 = por %p262, %p263
      %p265 = scmp.ne.s32.totalorder %s257, %s259
      %p266 = scmp.eq.s32.totalorder %s41, 1
      %p267 = por %p265, %p266
      %p268 = scmp.ne.s32.totalorder %s259, %s260
      %p269 = scmp.eq.s32.totalorder %s41, 0
      %p270 = por %p268, %p269
      %p271 = scmp.ne.s32.totalorder %s259, %s260
      %p272 = scmp.eq.s32.totalorder %s42, 1
      %p273 = por %p271, %p272
      %p275 = scmp.ne.s32.totalorder %s260, %s274
      %p276 = scmp.eq.s32.totalorder %s42, 0
      %p277 = por %p275, %p276
      %s279 = sadd.s32 %s278, 1
      %p282 = scmp.eq.s32.totalorder %s36, 1
      %p283 = scmp.ne.s32.totalorder %s278, %s280
      %p284 = scmp.eq.s32.totalorder %s36, 0
      %p285 = por %p283, %p284
      %p286 = scmp.ne.s32.totalorder %s278, %s280
      %p287 = scmp.eq.s32.totalorder %s41, 1
      %p288 = por %p286, %p287
      %p289 = scmp.ne.s32.totalorder %s280, %s281
      %p290 = scmp.eq.s32.totalorder %s41, 0
      %p291 = por %p289, %p290
      %p292 = scmp.ne.s32.totalorder %s280, %s281
      %p293 = scmp.eq.s32.totalorder %s42, 1
      %p294 = por %p292, %p293
      %p296 = scmp.ne.s32.totalorder %s281, %s295
      %p297 = scmp.eq.s32.totalorder %s42, 0
      %p298 = por %p296, %p297
      %s300 = sadd.s32 %s299, 1
      %p303 = scmp.eq.s32.totalorder %s36, 1
      %p304 = scmp.ne.s32.totalorder %s299, %s301
      %p305 = scmp.eq.s32.totalorder %s36, 0
      %p306 = por %p304, %p305
      %p307 = scmp.ne.s32.totalorder %s299, %s301
      %p308 = scmp.eq.s32.totalorder %s41, 1
      %p309 = por %p307, %p308
      %p310 = scmp.ne.s32.totalorder %s301, %s302
      %p311 = scmp.eq.s32.totalorder %s41, 0
      %p312 = por %p310, %p311
      %p313 = scmp.ne.s32.totalorder %s301, %s302
      %p314 = scmp.eq.s32.totalorder %s42, 1
      %p315 = por %p313, %p314
      %p317 = scmp.ne.s32.totalorder %s302, %s316
      %p318 = scmp.eq.s32.totalorder %s42, 0
      %p319 = por %p317, %p318
      %s321 = sadd.s32 %s320, 1
      %p324 = scmp.eq.s32.totalorder %s36, 1
      %p325 = scmp.ne.s32.totalorder %s320, %s322
      %p326 = scmp.eq.s32.totalorder %s36, 0
      %p327 = por %p325, %p326
      %p328 = scmp.ne.s32.totalorder %s320, %s322
      %p329 = scmp.eq.s32.totalorder %s41, 1
      %p330 = por %p328, %p329
      %p331 = scmp.ne.s32.totalorder %s322, %s323
      %p332 = scmp.eq.s32.totalorder %s41, 0
      %p333 = por %p331, %p332
      %p334 = scmp.ne.s32.totalorder %s322, %s323
      %p335 = scmp.eq.s32.totalorder %s42, 1
      %p336 = por %p334, %p335
      %p338 = scmp.ne.s32.totalorder %s323, %s337
      %p339 = scmp.eq.s32.totalorder %s42, 0
      %p340 = por %p338, %p339
      %s342 = sadd.s32 %s341, 1
      %p345 = scmp.eq.s32.totalorder %s36, 1
      %p346 = scmp.ne.s32.totalorder %s341, %s343
      %p347 = scmp.eq.s32.totalorder %s36, 0
      %p348 = por %p346, %p347
      %p349 = scmp.ne.s32.totalorder %s341, %s343
      %p350 = scmp.eq.s32.totalorder %s41, 1
      %p351 = por %p349, %p350
      %p352 = scmp.ne.s32.totalorder %s343, %s344
      %p353 = scmp.eq.s32.totalorder %s41, 0
      %p354 = por %p352, %p353
      %p355 = scmp.ne.s32.totalorder %s343, %s344
      %p356 = scmp.eq.s32.totalorder %s42, 1
      %p357 = por %p355, %p356
      %p359 = scmp.ne.s32.totalorder %s344, %s358
      %p360 = scmp.eq.s32.totalorder %s42, 0
      %p361 = por %p359, %p360
      %s363 = sadd.s32 %s362, 1
      %p366 = scmp.eq.s32.totalorder %s36, 1
      %p367 = scmp.ne.s32.totalorder %s362, %s364
      %p368 = scmp.eq.s32.totalorder %s36, 0
      %p369 = por %p367, %p368
      %p370 = scmp.ne.s32.totalorder %s362, %s364
      %p371 = scmp.eq.s32.totalorder %s41, 1
      %p372 = por %p370, %p371
      %p373 = scmp.ne.s32.totalorder %s364, %s365
      %p374 = scmp.eq.s32.totalorder %s41, 0
      %p375 = por %p373, %p374
      %p376 = scmp.ne.s32.totalorder %s364, %s365
      %p377 = scmp.eq.s32.totalorder %s42, 1
      %p378 = por %p376, %p377
      %p380 = scmp.ne.s32.totalorder %s365, %s379
      %p381 = scmp.eq.s32.totalorder %s42, 0
      %p382 = por %p380, %p381
      %s384 = sadd.s32 %s383, 1
      %p387 = scmp.eq.s32.totalorder %s36, 1
      %p388 = scmp.ne.s32.totalorder %s383, %s385
      %p389 = scmp.eq.s32.totalorder %s36, 0
      %p390 = por %p388, %p389
      %p391 = scmp.ne.s32.totalorder %s383, %s385
      %p392 = scmp.eq.s32.totalorder %s41, 1
      %p393 = por %p391, %p392
      %p394 = scmp.ne.s32.totalorder %s385, %s386
      %p395 = scmp.eq.s32.totalorder %s41, 0
      %p396 = por %p394, %p395
      %p397 = scmp.ne.s32.totalorder %s385, %s386
      %p398 = scmp.eq.s32.totalorder %s42, 1
      %p399 = por %p397, %p398
      %p401 = scmp.ne.s32.totalorder %s386, %s400
      %p402 = scmp.eq.s32.totalorder %s42, 0
      %p403 = por %p401, %p402
      %s405 = sadd.s32 %s404, 1
      %p408 = scmp.eq.s32.totalorder %s36, 1
      %p409 = scmp.ne.s32.totalorder %s404, %s406
      %p410 = scmp.eq.s32.totalorder %s36, 0
      %p411 = por %p409, %p410
      %p412 = scmp.ne.s32.totalorder %s404, %s406
      %p413 = scmp.eq.s32.totalorder %s41, 1
      %p414 = por %p412, %p413
      %p415 = scmp.ne.s32.totalorder %s406, %s407
      %p416 = scmp.eq.s32.totalorder %s41, 0
      %p417 = por %p415, %p416
      %p418 = scmp.ne.s32.totalorder %s406, %s407
      %p419 = scmp.eq.s32.totalorder %s42, 1
      %p420 = por %p418, %p419
      %p422 = scmp.ne.s32.totalorder %s407, %s421
      %p423 = scmp.eq.s32.totalorder %s42, 0
      %p424 = por %p422, %p423
      %s426 = sadd.s32 %s425, 1
      %p429 = scmp.eq.s32.totalorder %s36, 1
      %p430 = scmp.ne.s32.totalorder %s425, %s427
      %p431 = scmp.eq.s32.totalorder %s36, 0
      %p432 = por %p430, %p431
      %p433 = scmp.ne.s32.totalorder %s425, %s427
      %p434 = scmp.eq.s32.totalorder %s41, 1
      %p435 = por %p433, %p434
      %p436 = scmp.ne.s32.totalorder %s427, %s428
      %p437 = scmp.eq.s32.totalorder %s41, 0
      %p438 = por %p436, %p437
      %p439 = scmp.ne.s32.totalorder %s427, %s428
      %p440 = scmp.eq.s32.totalorder %s42, 1
      %p441 = por %p439, %p440
      %p443 = scmp.ne.s32.totalorder %s428, %s442
      %p444 = scmp.eq.s32.totalorder %s42, 0
      %p445 = por %p443, %p444
      %s446 = ssub.s32 %s44, %s51
      %s447 = ssub.s32 %s43, %s55
      %s448 = sor.u32 %s446, %s447
      %p449 = scmp.eq.s32.totalorder %s448, 0
      %s451 = sadd.s32 %s450, 1
      %s452 = scalar_select %p449, %s450, %s451
      %p455 = pneg %p449
      %p456 = scmp.eq.s32.totalorder %s36, 1
      %p457 = por %p455, %p456
      %p458 = scmp.ne.s32.totalorder %s450, %s453
      %p459 = scmp.eq.s32.totalorder %s36, 0
      %p460 = por %p458, %p459
      %p461 = scmp.ne.s32.totalorder %s450, %s453
      %p462 = scmp.eq.s32.totalorder %s41, 1
      %p463 = por %p461, %p462
      %p464 = scmp.ne.s32.totalorder %s453, %s454
      %p465 = scmp.eq.s32.totalorder %s41, 0
      %p466 = por %p464, %p465
      %p467 = scmp.ne.s32.totalorder %s453, %s454
      %p468 = scmp.eq.s32.totalorder %s42, 1
      %p469 = por %p467, %p468
      %p471 = scmp.ne.s32.totalorder %s454, %s470
      %p472 = scmp.eq.s32.totalorder %s42, 0
      %p473 = por %p471, %p472
      %p474 = scmp.le.s32.totalorder 1, %s36
      %p475 = scmp.lt.s32.totalorder %s36, 3
      %p476 = pnand %p474, %p475
      %p477 = pneg %p476
      // Predicated region
      $region9: #{tpu_custom_call.1} parent=5 // pred_check
        _
      $region10: #{tpu_custom_call.1} parent=5 // pred_check_branch
        %479 = sbr.rel (%p476) target = $region12
      $region11: #{tpu_custom_call.1} parent=5 // pred_region
        %s480 = ssub.s32 %s36, 1
        // Predicated region
        $region13: #{tpu_custom_call.1} parent=11 // pred_check
          %p481 = pneg %p123
        $region14: #{tpu_custom_call.1} parent=11 // pred_check_branch
          %483 = sbr.rel (%p481) target = $region16
        $region15: #{tpu_custom_call.1} parent=11 // pred_region
          %s485 = ssub.s32 1024, 1024
          %486 = vsyncadd [#allocation6], %s485
          %s487 = sshll.u32 [#allocation7], 4
          %s488 = int_to_ptr.vmem [resolvable:$true] %s487
          %493 = dma.hbm_to_vmem [thread:$0]  %s2, 1024, %s488, [#allocation6], 64, 64, 4
        $region16: #{tpu_custom_call.1} parent=11 // pred_fallthru
          _
        // Predicated region
        $region17: #{tpu_custom_call.1} parent=11 // pred_check
          %p494 = pneg %p144
        $region18: #{tpu_custom_call.1} parent=11 // pred_check_branch
          %496 = sbr.rel (%p494) target = $region20
        $region19: #{tpu_custom_call.1} parent=11 // pred_region
          _
        $region20: #{tpu_custom_call.1} parent=11 // pred_fallthru
          _
        // Predicated region
        $region21: #{tpu_custom_call.1} parent=11 // pred_check
          %p497 = pneg %p165
        $region22: #{tpu_custom_call.1} parent=11 // pred_check_branch
          %499 = sbr.rel (%p497) target = $region24
        $region23: #{tpu_custom_call.1} parent=11 // pred_region
          %s501 = ssub.s32 1024, 1024
          %502 = vsyncadd [#allocation9], %s501
          %s503 = sshll.u32 [#allocation8], 4
          %s504 = int_to_ptr.vmem [resolvable:$true] %s503
          %509 = dma.hbm_to_vmem [thread:$0]  %s4, 1024, %s504, [#allocation9], 64, 64, 4
        $region24: #{tpu_custom_call.1} parent=11 // pred_fallthru
          _
        // Predicated region
        $region25: #{tpu_custom_call.1} parent=11 // pred_check
          %p510 = pneg %p186
        $region26: #{tpu_custom_call.1} parent=11 // pred_check_branch
          %512 = sbr.rel (%p510) target = $region28
        $region27: #{tpu_custom_call.1} parent=11 // pred_region
          _
        $region28: #{tpu_custom_call.1} parent=11 // pred_fallthru
          _
        // Predicated region
        $region29: #{tpu_custom_call.1} parent=11 // pred_check
          %p513 = pneg %p207
        $region30: #{tpu_custom_call.1} parent=11 // pred_check_branch
          %515 = sbr.rel (%p513) target = $region32
        $region31: #{tpu_custom_call.1} parent=11 // pred_region
          %s517 = ssub.s32 1024, 1024
          %518 = vsyncadd [#allocation9], %s517
          %s519 = sshll.u32 [#allocation10], 4
          %s520 = int_to_ptr.vmem [resolvable:$true] %s519
          %525 = dma.hbm_to_vmem [thread:$0]  %s6, 1024, %s520, [#allocation9], 64, 64, 4
        $region32: #{tpu_custom_call.1} parent=11 // pred_fallthru
          _
        // Predicated region
        $region33: #{tpu_custom_call.1} parent=11 // pred_check
          %p526 = pneg %p228
        $region34: #{tpu_custom_call.1} parent=11 // pred_check_branch
          %528 = sbr.rel (%p526) target = $region36
        $region35: #{tpu_custom_call.1} parent=11 // pred_region
          _
        $region36: #{tpu_custom_call.1} parent=11 // pred_fallthru
          _
        // Predicated region
        $region37: #{tpu_custom_call.1} parent=11 // pred_check
          %p529 = pneg %p249
        $region38: #{tpu_custom_call.1} parent=11 // pred_check_branch
          %531 = sbr.rel (%p529) target = $region40
        $region39: #{tpu_custom_call.1} parent=11 // pred_region
          %s533 = ssub.s32 1024, 1024
          %534 = vsyncadd [#allocation12], %s533
          %s535 = sshll.u32 [#allocation11], 4
          %s536 = int_to_ptr.vmem [resolvable:$true] %s535
          %541 = dma.hbm_to_vmem [thread:$0]  %s8, 1024, %s536, [#allocation12], 64, 64, 4
        $region40: #{tpu_custom_call.1} parent=11 // pred_fallthru
          _
        // Predicated region
        $region41: #{tpu_custom_call.1} parent=11 // pred_check
          %p542 = pneg %p270
        $region42: #{tpu_custom_call.1} parent=11 // pred_check_branch
          %544 = sbr.rel (%p542) target = $region44
        $region43: #{tpu_custom_call.1} parent=11 // pred_region
          _
        $region44: #{tpu_custom_call.1} parent=11 // pred_fallthru
          _
        // Predicated region
        $region45: #{tpu_custom_call.1} parent=11 // pred_check
          %p545 = pneg %p291
        $region46: #{tpu_custom_call.1} parent=11 // pred_check_branch
          %547 = sbr.rel (%p545) target = $region48
        $region47: #{tpu_custom_call.1} parent=11 // pred_region
          %s549 = ssub.s32 2048, 2048
          %550 = vsyncadd [#allocation12], %s549
          %s551 = sshll.u32 [#allocation13], 4
          %s552 = int_to_ptr.vmem [resolvable:$true] %s551
          %557 = dma.hbm_to_vmem [thread:$0]  %s10, 2048, %s552, [#allocation12], 128, 128, 8
        $region48: #{tpu_custom_call.1} parent=11 // pred_fallthru
          _
        // Predicated region
        $region49: #{tpu_custom_call.1} parent=11 // pred_check
          %p558 = pneg %p312
        $region50: #{tpu_custom_call.1} parent=11 // pred_check_branch
          %560 = sbr.rel (%p558) target = $region52
        $region51: #{tpu_custom_call.1} parent=11 // pred_region
          _
        $region52: #{tpu_custom_call.1} parent=11 // pred_fallthru
          _
        // Predicated region
        $region53: #{tpu_custom_call.1} parent=11 // pred_check
          %p561 = pneg %p333
        $region54: #{tpu_custom_call.1} parent=11 // pred_check_branch
          %563 = sbr.rel (%p561) target = $region56
        $region55: #{tpu_custom_call.1} parent=11 // pred_region
          %s565 = ssub.s32 2048, 2048
          %566 = vsyncadd [#allocation15], %s565
          %s567 = sshll.u32 [#allocation14], 4
          %s568 = int_to_ptr.vmem [resolvable:$true] %s567
          %573 = dma.hbm_to_vmem [thread:$0]  %s12, 2048, %s568, [#allocation15], 64, 64, 4
        $region56: #{tpu_custom_call.1} parent=11 // pred_fallthru
          _
        // Predicated region
        $region57: #{tpu_custom_call.1} parent=11 // pred_check
          %p574 = pneg %p354
        $region58: #{tpu_custom_call.1} parent=11 // pred_check_branch
          %576 = sbr.rel (%p574) target = $region60
        $region59: #{tpu_custom_call.1} parent=11 // pred_region
          _
        $region60: #{tpu_custom_call.1} parent=11 // pred_fallthru
          _
        // Predicated region
        $region61: #{tpu_custom_call.1} parent=11 // pred_check
          %p577 = pneg %p375
        $region62: #{tpu_custom_call.1} parent=11 // pred_check_branch
          %579 = sbr.rel (%p577) target = $region64
        $region63: #{tpu_custom_call.1} parent=11 // pred_region
          _
        $region64: #{tpu_custom_call.1} parent=11 // pred_fallthru
          _
        // Predicated region
        $region65: #{tpu_custom_call.1} parent=11 // pred_check
          %p580 = pneg %p396
        $region66: #{tpu_custom_call.1} parent=11 // pred_check_branch
          %582 = sbr.rel (%p580) target = $region68
        $region67: #{tpu_custom_call.1} parent=11 // pred_region
          _
        $region68: #{tpu_custom_call.1} parent=11 // pred_fallthru
          _
        // Predicated region
        $region69: #{tpu_custom_call.1} parent=11 // pred_check
          %p583 = pneg %p417
        $region70: #{tpu_custom_call.1} parent=11 // pred_check_branch
          %585 = sbr.rel (%p583) target = $region72
        $region71: #{tpu_custom_call.1} parent=11 // pred_region
          _
        $region72: #{tpu_custom_call.1} parent=11 // pred_fallthru
          _
        // Predicated region
        $region73: #{tpu_custom_call.1} parent=11 // pred_check
          %p586 = pneg %p438
        $region74: #{tpu_custom_call.1} parent=11 // pred_check_branch
          %588 = sbr.rel (%p586) target = $region76
        $region75: #{tpu_custom_call.1} parent=11 // pred_region
          _
        $region76: #{tpu_custom_call.1} parent=11 // pred_fallthru
          _
      $region12: #{tpu_custom_call.1} parent=5 // pred_fallthru
        _
      %p589 = scmp.lt.s32.totalorder %s36, 2
      // Predicated region
      $region77: #{tpu_custom_call.1} parent=5 // pred_check
        %p590 = pneg %p589
      $region78: #{tpu_custom_call.1} parent=5 // pred_check_branch
        %592 = sbr.rel (%p590) target = $region80
      $region79: #{tpu_custom_call.1} parent=5 // pred_region
        // Predicated region
        $region81: #{tpu_custom_call.1} parent=79 // pred_check
          %p593 = pneg %p70
        $region82: #{tpu_custom_call.1} parent=79 // pred_check_branch
          %595 = sbr.rel (%p593) target = $region84
        $region83: #{tpu_custom_call.1} parent=79 // pred_region
          %s596 = sand.u32 %s60, 1
          %s597 = scalar_lea.sflag [#allocation3], %s596
          %s598 = sand.u32 %s60, 1
          %s599 = smul.addr %s598, 128
          %s600 = scalar_lea.vmem [#allocation2], %s599
          %s601 = smul.u32 16, %s43
          %s603 = ssub.s32 2048, 2048
          %604 = vsyncadd %s597, %s603
          %s605 = smul.addr %s44, 16
          %s606 = sadd.s32 %s601, %s605
          %s607 = smul.addr %s606, 128
          %s608 = scalar_lea.hbm %s0, %s607
          %s609 = sshll.u32 %s600, 4
          %s610 = int_to_ptr.vmem [resolvable:$true] %s609
          %615 = dma.hbm_to_vmem [thread:$0]  %s608, 2048, %s610, %s597, 128, 128, 8
        $region84: #{tpu_custom_call.1} parent=79 // pred_fallthru
          _
        // Predicated region
        $region85: #{tpu_custom_call.1} parent=79 // pred_check
          %p616 = pneg %p96
        $region86: #{tpu_custom_call.1} parent=79 // pred_check_branch
          %618 = sbr.rel (%p616) target = $region88
        $region87: #{tpu_custom_call.1} parent=79 // pred_region
          %s619 = sand.u32 %s36, 1
          %s620 = scalar_lea.sflag [#allocation6], %s619
          %s621 = sand.u32 %s86, 1
          %s622 = smul.addr %s621, 128
          %s623 = scalar_lea.vmem [#allocation5], %s622
          %s625 = ssub.s32 2048, 2048
          %626 = vsyncadd %s620, %s625
          %s627 = smul.addr %s44, 16
          %s628 = smul.addr %s627, 128
          %s629 = scalar_lea.hbm %s1, %s628
          %s630 = sshll.u32 %s623, 4
          %s631 = int_to_ptr.vmem [resolvable:$true] %s630
          %636 = dma.hbm_to_vmem [thread:$0]  %s629, 2048, %s631, %s620, 128, 128, 8
        $region88: #{tpu_custom_call.1} parent=79 // pred_fallthru
          _
      $region80: #{tpu_custom_call.1} parent=5 // pred_fallthru
        _
      %p637 = scmp.le.s32.totalorder 1, %s36
      %p638 = scmp.lt.s32.totalorder %s36, 3
      %p639 = pnand %p637, %p638
      %p640 = pneg %p639
      // Predicated region
      $region89: #{tpu_custom_call.1} parent=5 // pred_check
        _
      $region90: #{tpu_custom_call.1} parent=5 // pred_check_branch
        %642 = sbr.rel (%p639) target = $region92
      $region91: #{tpu_custom_call.1} parent=5 // pred_region
        %s643 = ssub.s32 %s36, 1
        %s644 = sand.u32 %s63, 1
        %s645 = scalar_lea.sflag [#allocation3], %s644
        %s646 = sand.u32 %s63, 1
        %s647 = smul.addr %s646, 128
        %s648 = scalar_lea.vmem [#allocation2], %s647
        // Predicated region
        $region93: #{tpu_custom_call.1} parent=91 // pred_check
          %p649 = pneg %p76
        $region94: #{tpu_custom_call.1} parent=91 // pred_check_branch
          %651 = sbr.rel (%p649) target = $region96
        $region95: #{tpu_custom_call.1} parent=91 // pred_region
          %652 = dma.done %s645, 2048
        $region96: #{tpu_custom_call.1} parent=91 // pred_fallthru
          _
        %s653 = sand.u32 %s41, 1
        %s654 = scalar_lea.sflag [#allocation6], %s653
        %s655 = sand.u32 %s89, 1
        %s656 = smul.addr %s655, 128
        %s657 = scalar_lea.vmem [#allocation5], %s656
        // Predicated region
        $region97: #{tpu_custom_call.1} parent=91 // pred_check
          %p658 = pneg %p102
        $region98: #{tpu_custom_call.1} parent=91 // pred_check_branch
          %660 = sbr.rel (%p658) target = $region100
        $region99: #{tpu_custom_call.1} parent=91 // pred_region
          %661 = dma.done %s654, 2048
        $region100: #{tpu_custom_call.1} parent=91 // pred_fallthru
          _
        // Predicated region
        $region101: #{tpu_custom_call.1} parent=91 // pred_check
          %p662 = pneg %p123
        $region102: #{tpu_custom_call.1} parent=91 // pred_check_branch
          %664 = sbr.rel (%p662) target = $region104
        $region103: #{tpu_custom_call.1} parent=91 // pred_region
          %665 = dma.done [#allocation6], 1024
        $region104: #{tpu_custom_call.1} parent=91 // pred_fallthru
          _
        // Predicated region
        $region105: #{tpu_custom_call.1} parent=91 // pred_check
          %p666 = pneg %p165
        $region106: #{tpu_custom_call.1} parent=91 // pred_check_branch
          %668 = sbr.rel (%p666) target = $region108
        $region107: #{tpu_custom_call.1} parent=91 // pred_region
          %669 = dma.done [#allocation9], 1024
        $region108: #{tpu_custom_call.1} parent=91 // pred_fallthru
          _
        // Predicated region
        $region109: #{tpu_custom_call.1} parent=91 // pred_check
          %p670 = pneg %p207
        $region110: #{tpu_custom_call.1} parent=91 // pred_check_branch
          %672 = sbr.rel (%p670) target = $region112
        $region111: #{tpu_custom_call.1} parent=91 // pred_region
          %673 = dma.done [#allocation9], 1024
        $region112: #{tpu_custom_call.1} parent=91 // pred_fallthru
          _
        // Predicated region
        $region113: #{tpu_custom_call.1} parent=91 // pred_check
          %p674 = pneg %p249
        $region114: #{tpu_custom_call.1} parent=91 // pred_check_branch
          %676 = sbr.rel (%p674) target = $region116
        $region115: #{tpu_custom_call.1} parent=91 // pred_region
          %677 = dma.done [#allocation12], 1024
        $region116: #{tpu_custom_call.1} parent=91 // pred_fallthru
          _
        // Predicated region
        $region117: #{tpu_custom_call.1} parent=91 // pred_check
          %p678 = pneg %p291
        $region118: #{tpu_custom_call.1} parent=91 // pred_check_branch
          %680 = sbr.rel (%p678) target = $region120
        $region119: #{tpu_custom_call.1} parent=91 // pred_region
          %681 = dma.done [#allocation12], 2048
        $region120: #{tpu_custom_call.1} parent=91 // pred_fallthru
          _
        // Predicated region
        $region121: #{tpu_custom_call.1} parent=91 // pred_check
          %p682 = pneg %p333
        $region122: #{tpu_custom_call.1} parent=91 // pred_check_branch
          %684 = sbr.rel (%p682) target = $region124
        $region123: #{tpu_custom_call.1} parent=91 // pred_region
          %685 = dma.done [#allocation15], 2048
        $region124: #{tpu_custom_call.1} parent=91 // pred_fallthru
          _
        %s686 = sand.u32 %s63, 1
        %s687 = scalar_lea.sflag [#allocation3], %s686
        %s688 = sand.u32 %s63, 1
        %s689 = smul.addr %s688, 128
        %s690 = scalar_lea.vmem [#allocation2], %s689
        %p691 = pneg %p76
        %p692 = pneg %p73
        %s693 = sand.u32 %s41, 1
        %s694 = scalar_lea.sflag [#allocation6], %s693
        %s695 = sand.u32 %s89, 1
        %s696 = smul.addr %s695, 128
        %s697 = scalar_lea.vmem [#allocation5], %s696
        %p698 = pneg %p102
        %p699 = pneg %p99
        %p700 = pneg %p123
        %p701 = pneg %p120
        %p702 = pneg %p144
        %p703 = pneg %p141
        %p704 = pneg %p165
        %p705 = pneg %p162
        %p706 = pneg %p186
        %p707 = pneg %p183
        %p708 = pneg %p207
        %p709 = pneg %p204
        %p710 = pneg %p228
        %p711 = pneg %p225
        %p712 = pneg %p249
        %p713 = pneg %p246
        %p714 = pneg %p270
        %p715 = pneg %p267
        %p716 = pneg %p291
        %p717 = pneg %p288
        %p718 = pneg %p312
        %p719 = pneg %p309
        %p720 = pneg %p333
        %p721 = pneg %p330
        %p722 = pneg %p354
        %p723 = pneg %p351
        %p724 = pneg %p375
        %p725 = pneg %p372
        %p726 = pneg %p396
        %p727 = pneg %p393
        %p728 = pneg %p417
        %p729 = pneg %p414
        %p730 = pneg %p438
        %p731 = pneg %p435
        %p732 = pneg %p466
        %p733 = pneg %p463
        %s734 = sand.u32 %s453, 1
        %s735 = scalar_lea.sflag [#allocation4], %s734
        %s736 = sand.u32 %s453, 1
        %s737 = smul.addr %s736, 128
        %s738 = scalar_lea.vmem [#allocation16], %s737
        %s739 = smul.u32 16, %s45
        %s740 = smul.u32 16, %s45
        %v742 = vld [vmem:[%s648] sm:$0xff]
        %v743 = vld [vmem:[%s648 + $0x8] sm:$0xff]
        %v744 = vld [vmem:[%s648 + $0x10] sm:$0xff]
        %v745 = vld [vmem:[%s648 + $0x18] sm:$0xff]
        %v746 = vld [vmem:[%s648 + $0x20] sm:$0xff]
        %v747 = vld [vmem:[%s648 + $0x28] sm:$0xff]
        %v748 = vld [vmem:[%s648 + $0x30] sm:$0xff]
        %v749 = vld [vmem:[%s648 + $0x38] sm:$0xff]
        %v750 = vld [vmem:[%s648 + $0x40] sm:$0xff]
        %v751 = vld [vmem:[%s648 + $0x48] sm:$0xff]
        %v752 = vld [vmem:[%s648 + $0x50] sm:$0xff]
        %v753 = vld [vmem:[%s648 + $0x58] sm:$0xff]
        %v754 = vld [vmem:[%s648 + $0x60] sm:$0xff]
        %v755 = vld [vmem:[%s648 + $0x68] sm:$0xff]
        %v756 = vld [vmem:[%s648 + $0x70] sm:$0xff]
        %v757 = vld [vmem:[%s648 + $0x78] sm:$0xff]
        %v758 = vld [vmem:[%s657] sm:$0xff]
        %v759 = vld [vmem:[%s657 + $0x8] sm:$0xff]
        %v760 = vld [vmem:[%s657 + $0x10] sm:$0xff]
        %v761 = vld [vmem:[%s657 + $0x18] sm:$0xff]
        %v762 = vld [vmem:[%s657 + $0x20] sm:$0xff]
        %v763 = vld [vmem:[%s657 + $0x28] sm:$0xff]
        %v764 = vld [vmem:[%s657 + $0x30] sm:$0xff]
        %v765 = vld [vmem:[%s657 + $0x38] sm:$0xff]
        %v766 = vld [vmem:[%s657 + $0x40] sm:$0xff]
        %v767 = vld [vmem:[%s657 + $0x48] sm:$0xff]
        %v768 = vld [vmem:[%s657 + $0x50] sm:$0xff]
        %v769 = vld [vmem:[%s657 + $0x58] sm:$0xff]
        %v770 = vld [vmem:[%s657 + $0x60] sm:$0xff]
        %v771 = vld [vmem:[%s657 + $0x68] sm:$0xff]
        %v772 = vld [vmem:[%s657 + $0x70] sm:$0xff]
        %v773 = vld [vmem:[%s657 + $0x78] sm:$0xff]
        %v774 = vpack.c.bf16 %v743, %v742
        %v775 = vpack.c.bf16 %v745, %v744
        %v776 = vpack.c.bf16 %v747, %v746
        %v777 = vpack.c.bf16 %v749, %v748
        %v778 = vpack.c.bf16 %v751, %v750
        %v779 = vpack.c.bf16 %v753, %v752
        %v780 = vpack.c.bf16 %v755, %v754
        %v781 = vpack.c.bf16 %v757, %v756
        %v782 = vpack.c.bf16 %v759, %v758
        %v783 = vpack.c.bf16 %v761, %v760
        %v784 = vpack.c.bf16 %v763, %v762
        %v785 = vpack.c.bf16 %v765, %v764
        %v786 = vpack.c.bf16 %v767, %v766
        %v787 = vpack.c.bf16 %v769, %v768
        %v788 = vpack.c.bf16 %v771, %v770
        %v789 = vpack.c.bf16 %v773, %v772
        %v790 = vld [vmem:[#allocation7] sm:$0xf]
        %v791 = vld [vmem:[#allocation7 + $0x4] sm:$0xf]
        %v792 = vld [vmem:[#allocation7 + $0x8] sm:$0xf]
        %v793 = vld [vmem:[#allocation7 + $0xc] sm:$0xf]
        %v794 = vld [vmem:[#allocation7 + $0x10] sm:$0xf]
        %v795 = vld [vmem:[#allocation7 + $0x14] sm:$0xf]
        %v796 = vld [vmem:[#allocation7 + $0x18] sm:$0xf]
        %v797 = vld [vmem:[#allocation7 + $0x1c] sm:$0xf]
        %v798 = vld [vmem:[#allocation7 + $0x20] sm:$0xf]
        %v799 = vld [vmem:[#allocation7 + $0x24] sm:$0xf]
        %v800 = vld [vmem:[#allocation7 + $0x28] sm:$0xf]
        %v801 = vld [vmem:[#allocation7 + $0x2c] sm:$0xf]
        %v802 = vld [vmem:[#allocation7 + $0x30] sm:$0xf]
        %v803 = vld [vmem:[#allocation7 + $0x34] sm:$0xf]
        %v804 = vld [vmem:[#allocation7 + $0x38] sm:$0xf]
        %v805 = vld [vmem:[#allocation7 + $0x3c] sm:$0xf]
        %v806 = vld [vmem:[%s3] sm:$0x1]
        %v808 = vlaneseq
        %v809 = vshrl.u32 %v808, 7
        %v810 = vsub.s32 0, %v809
        %v811 = vrot.slane %v806, %v810
        %v829 = vunpack.c.l.b16 %v790
        %v830 = vunpack.c.l.b16 %v791
        %v831 = vunpack.c.l.b16 %v792
        %v832 = vunpack.c.l.b16 %v793
        %v833 = vunpack.c.l.b16 %v794
        %v834 = vunpack.c.l.b16 %v795
        %v835 = vunpack.c.l.b16 %v796
        %v836 = vunpack.c.l.b16 %v797
        %v837 = vunpack.c.l.b16 %v798
        %v838 = vunpack.c.l.b16 %v799
        %v839 = vunpack.c.l.b16 %v800
        %v840 = vunpack.c.l.b16 %v801
        %v841 = vunpack.c.l.b16 %v802
        %v842 = vunpack.c.l.b16 %v803
        %v843 = vunpack.c.l.b16 %v804
        %v844 = vunpack.c.l.b16 %v805
        %v845 = vpack.c.b16 %v830, %v829
        %v846 = vpack.c.b16 %v832, %v831
        %v847 = vpack.c.b16 %v834, %v833
        %v848 = vpack.c.b16 %v836, %v835
        %v849 = vpack.c.b16 %v838, %v837
        %v850 = vpack.c.b16 %v840, %v839
        %v851 = vpack.c.b16 %v842, %v841
        %v852 = vpack.c.b16 %v844, %v843
        %861 = vmatprep.subr.bf16.mxu0 0
        %862 = vmatpush1.bf16.msra.mxu0 %v852
        %863 = vmatprep.subr.bf16.mxu0 0
        %864 = vmatpush1.bf16.msra.mxu0 %v851
        %865 = vmatprep.subr.bf16.mxu0 0
        %866 = vmatpush1.bf16.msra.mxu0 %v850
        %867 = vmatprep.subr.bf16.mxu0 0
        %868 = vmatpush1.bf16.msra.mxu0 %v849
        %869 = vmatprep.subr.bf16.mxu0 0
        %870 = vmatpush1.bf16.msra.mxu0 %v848
        %871 = vmatprep.subr.bf16.mxu0 0
        %872 = vmatpush1.bf16.msra.mxu0 %v847
        %873 = vmatprep.subr.bf16.mxu0 0
        %874 = vmatpush1.bf16.msra.mxu0 %v846
        %875 = vmatprep.subr.bf16.mxu0 0
        %876 = vmatpush1.bf16.msra.mxu0 %v845
        %877 = vmatprep.subr.bf16.mxu0 0
        %878 = vmatpush2.bf16.msra.mxu0 0
        %879 = vmatprep.subr.bf16.mxu0 0
        %880 = vmatpush2.bf16.msra.mxu0 0
        %881 = vmatprep.subr.bf16.mxu0 0
        %882 = vmatpush2.bf16.msra.mxu0 0
        %883 = vmatprep.subr.bf16.mxu0 0
        %884 = vmatpush2.bf16.msra.mxu0 0
        %885 = vmatprep.subr.bf16.mxu0 0
        %886 = vmatpush2.bf16.msra.mxu0 0
        %887 = vmatprep.subr.bf16.mxu0 0
        %888 = vmatpush2.bf16.msra.mxu0 0
        %889 = vmatprep.subr.bf16.mxu0 0
        %890 = vmatpush2.bf16.msra.mxu0 0
        %891 = vmatprep.subr.bf16.mxu0 0
        %892 = vmatpush2.bf16.msra.mxu0 0
        %893 = vmatprep.mubr.bf16.mxu0 0
        %894 = vmatmul.mubr.bf16.gmra.mxu0 %v774
        %v895 = vpop.f32.mrf.mxu0
        %v896 = vadd.f32 %v811, %v895
        %v897 = vpop.f32.mrf.mxu0
        %v898 = vpop.f32.mrf.mxu0
        %v899 = vadd.f32 %v811, %v898
        %v900 = vpop.f32.mrf.mxu0
        %901 = vmatprep.mubr.bf16.mxu0 0
        %902 = vmatmul.mubr.bf16.gmra.mxu0 %v775
        %v903 = vpop.f32.mrf.mxu0
        %v904 = vadd.f32 %v811, %v903
        %v905 = vpop.f32.mrf.mxu0
        %v906 = vpop.f32.mrf.mxu0
        %v907 = vadd.f32 %v811, %v906
        %v908 = vpop.f32.mrf.mxu0
        %909 = vmatprep.mubr.bf16.mxu0 0
        %910 = vmatmul.mubr.bf16.gmra.mxu0 %v776
        %v911 = vpop.f32.mrf.mxu0
        %v912 = vadd.f32 %v811, %v911
        %v913 = vpop.f32.mrf.mxu0
        %v914 = vpop.f32.mrf.mxu0
        %v915 = vadd.f32 %v811, %v914
        %v916 = vpop.f32.mrf.mxu0
        %917 = vmatprep.mubr.bf16.mxu0 0
        %918 = vmatmul.mubr.bf16.gmra.mxu0 %v777
        %v919 = vpop.f32.mrf.mxu0
        %v920 = vadd.f32 %v811, %v919
        %v921 = vpop.f32.mrf.mxu0
        %v922 = vpop.f32.mrf.mxu0
        %v923 = vadd.f32 %v811, %v922
        %v924 = vpop.f32.mrf.mxu0
        %925 = vmatprep.mubr.bf16.mxu0 0
        %926 = vmatmul.mubr.bf16.gmra.mxu0 %v778
        %v927 = vpop.f32.mrf.mxu0
        %v928 = vadd.f32 %v811, %v927
        %v929 = vpop.f32.mrf.mxu0
        %v930 = vpop.f32.mrf.mxu0
        %v931 = vadd.f32 %v811, %v930
        %v932 = vpop.f32.mrf.mxu0
        %933 = vmatprep.mubr.bf16.mxu0 0
        %934 = vmatmul.mubr.bf16.gmra.mxu0 %v779
        %v935 = vpop.f32.mrf.mxu0
        %v936 = vadd.f32 %v811, %v935
        %v937 = vpop.f32.mrf.mxu0
        %v938 = vpop.f32.mrf.mxu0
        %v939 = vadd.f32 %v811, %v938
        %v940 = vpop.f32.mrf.mxu0
        %941 = vmatprep.mubr.bf16.mxu0 0
        %942 = vmatmul.mubr.bf16.gmra.mxu0 %v780
        %v943 = vpop.f32.mrf.mxu0
        %v944 = vadd.f32 %v811, %v943
        %v945 = vpop.f32.mrf.mxu0
        %v946 = vpop.f32.mrf.mxu0
        %v947 = vadd.f32 %v811, %v946
        %v948 = vpop.f32.mrf.mxu0
        %949 = vmatprep.mubr.bf16.mxu0 0
        %950 = vmatmul.mubr.bf16.gmra.mxu0 %v781
        %v951 = vpop.f32.mrf.mxu0
        %v952 = vadd.f32 %v811, %v951
        %v953 = vpop.f32.mrf.mxu0
        %v954 = vpop.f32.mrf.mxu0
        %v955 = vadd.f32 %v811, %v954
        %v956 = vpop.f32.mrf.mxu0
        %957 = vdwg.mxu0
        %v958 = vld [vmem:[#allocation8] sm:$0xf]
        %v959 = vld [vmem:[#allocation8 + $0x4] sm:$0xf]
        %v960 = vld [vmem:[#allocation8 + $0x8] sm:$0xf]
        %v961 = vld [vmem:[#allocation8 + $0xc] sm:$0xf]
        %v962 = vld [vmem:[#allocation8 + $0x10] sm:$0xf]
        %v963 = vld [vmem:[#allocation8 + $0x14] sm:$0xf]
        %v964 = vld [vmem:[#allocation8 + $0x18] sm:$0xf]
        %v965 = vld [vmem:[#allocation8 + $0x1c] sm:$0xf]
        %v966 = vld [vmem:[#allocation8 + $0x20] sm:$0xf]
        %v967 = vld [vmem:[#allocation8 + $0x24] sm:$0xf]
        %v968 = vld [vmem:[#allocation8 + $0x28] sm:$0xf]
        %v969 = vld [vmem:[#allocation8 + $0x2c] sm:$0xf]
        %v970 = vld [vmem:[#allocation8 + $0x30] sm:$0xf]
        %v971 = vld [vmem:[#allocation8 + $0x34] sm:$0xf]
        %v972 = vld [vmem:[#allocation8 + $0x38] sm:$0xf]
        %v973 = vld [vmem:[#allocation8 + $0x3c] sm:$0xf]
        %v974 = vld [vmem:[%s5] sm:$0x1]
        %v976 = vlaneseq
        %v977 = vshrl.u32 %v976, 7
        %v978 = vsub.s32 0, %v977
        %v979 = vrot.slane %v974, %v978
        %v997 = vunpack.c.l.b16 %v958
        %v998 = vunpack.c.l.b16 %v959
        %v999 = vunpack.c.l.b16 %v960
        %v1000 = vunpack.c.l.b16 %v961
        %v1001 = vunpack.c.l.b16 %v962
        %v1002 = vunpack.c.l.b16 %v963
        %v1003 = vunpack.c.l.b16 %v964
        %v1004 = vunpack.c.l.b16 %v965
        %v1005 = vunpack.c.l.b16 %v966
        %v1006 = vunpack.c.l.b16 %v967
        %v1007 = vunpack.c.l.b16 %v968
        %v1008 = vunpack.c.l.b16 %v969
        %v1009 = vunpack.c.l.b16 %v970
        %v1010 = vunpack.c.l.b16 %v971
        %v1011 = vunpack.c.l.b16 %v972
        %v1012 = vunpack.c.l.b16 %v973
        %v1013 = vpack.c.b16 %v998, %v997
        %v1014 = vpack.c.b16 %v1000, %v999
        %v1015 = vpack.c.b16 %v1002, %v1001
        %v1016 = vpack.c.b16 %v1004, %v1003
        %v1017 = vpack.c.b16 %v1006, %v1005
        %v1018 = vpack.c.b16 %v1008, %v1007
        %v1019 = vpack.c.b16 %v1010, %v1009
        %v1020 = vpack.c.b16 %v1012, %v1011
        %1029 = vmatprep.subr.bf16.mxu0 0
        %1030 = vmatpush1.bf16.msra.mxu0 %v1020
        %1031 = vmatprep.subr.bf16.mxu0 0
        %1032 = vmatpush1.bf16.msra.mxu0 %v1019
        %1033 = vmatprep.subr.bf16.mxu0 0
        %1034 = vmatpush1.bf16.msra.mxu0 %v1018
        %1035 = vmatprep.subr.bf16.mxu0 0
        %1036 = vmatpush1.bf16.msra.mxu0 %v1017
        %1037 = vmatprep.subr.bf16.mxu0 0
        %1038 = vmatpush1.bf16.msra.mxu0 %v1016
        %1039 = vmatprep.subr.bf16.mxu0 0
        %1040 = vmatpush1.bf16.msra.mxu0 %v1015
        %1041 = vmatprep.subr.bf16.mxu0 0
        %1042 = vmatpush1.bf16.msra.mxu0 %v1014
        %1043 = vmatprep.subr.bf16.mxu0 0
        %1044 = vmatpush1.bf16.msra.mxu0 %v1013
        %1045 = vmatprep.subr.bf16.mxu0 0
        %1046 = vmatpush2.bf16.msra.mxu0 0
        %1047 = vmatprep.subr.bf16.mxu0 0
        %1048 = vmatpush2.bf16.msra.mxu0 0
        %1049 = vmatprep.subr.bf16.mxu0 0
        %1050 = vmatpush2.bf16.msra.mxu0 0
        %1051 = vmatprep.subr.bf16.mxu0 0
        %1052 = vmatpush2.bf16.msra.mxu0 0
        %1053 = vmatprep.subr.bf16.mxu0 0
        %1054 = vmatpush2.bf16.msra.mxu0 0
        %1055 = vmatprep.subr.bf16.mxu0 0
        %1056 = vmatpush2.bf16.msra.mxu0 0
        %1057 = vmatprep.subr.bf16.mxu0 0
        %1058 = vmatpush2.bf16.msra.mxu0 0
        %1059 = vmatprep.subr.bf16.mxu0 0
        %1060 = vmatpush2.bf16.msra.mxu0 0
        %1061 = vmatprep.mubr.bf16.mxu0 0
        %1062 = vmatmul.mubr.bf16.gmra.mxu0 %v782
        %v1063 = vpop.f32.mrf.mxu0
        %v1064 = vadd.f32 %v979, %v1063
        %v1065 = vpop.f32.mrf.mxu0
        %v1066 = vpop.f32.mrf.mxu0
        %v1067 = vadd.f32 %v979, %v1066
        %v1068 = vpop.f32.mrf.mxu0
        %1069 = vmatprep.mubr.bf16.mxu0 0
        %1070 = vmatmul.mubr.bf16.gmra.mxu0 %v783
        %v1071 = vpop.f32.mrf.mxu0
        %v1072 = vadd.f32 %v979, %v1071
        %v1073 = vpop.f32.mrf.mxu0
        %v1074 = vpop.f32.mrf.mxu0
        %v1075 = vadd.f32 %v979, %v1074
        %v1076 = vpop.f32.mrf.mxu0
        %1077 = vmatprep.mubr.bf16.mxu0 0
        %1078 = vmatmul.mubr.bf16.gmra.mxu0 %v784
        %v1079 = vpop.f32.mrf.mxu0
        %v1080 = vadd.f32 %v979, %v1079
        %v1081 = vpop.f32.mrf.mxu0
        %v1082 = vpop.f32.mrf.mxu0
        %v1083 = vadd.f32 %v979, %v1082
        %v1084 = vpop.f32.mrf.mxu0
        %1085 = vmatprep.mubr.bf16.mxu0 0
        %1086 = vmatmul.mubr.bf16.gmra.mxu0 %v785
        %v1087 = vpop.f32.mrf.mxu0
        %v1088 = vadd.f32 %v979, %v1087
        %v1089 = vpop.f32.mrf.mxu0
        %v1090 = vpop.f32.mrf.mxu0
        %v1091 = vadd.f32 %v979, %v1090
        %v1092 = vpop.f32.mrf.mxu0
        %1093 = vmatprep.mubr.bf16.mxu0 0
        %1094 = vmatmul.mubr.bf16.gmra.mxu0 %v786
        %v1095 = vpop.f32.mrf.mxu0
        %v1096 = vadd.f32 %v979, %v1095
        %v1097 = vpop.f32.mrf.mxu0
        %v1098 = vpop.f32.mrf.mxu0
        %v1099 = vadd.f32 %v979, %v1098
        %v1100 = vpop.f32.mrf.mxu0
        %1101 = vmatprep.mubr.bf16.mxu0 0
        %1102 = vmatmul.mubr.bf16.gmra.mxu0 %v787
        %v1103 = vpop.f32.mrf.mxu0
        %v1104 = vadd.f32 %v979, %v1103
        %v1105 = vpop.f32.mrf.mxu0
        %v1106 = vpop.f32.mrf.mxu0
        %v1107 = vadd.f32 %v979, %v1106
        %v1108 = vpop.f32.mrf.mxu0
        %1109 = vmatprep.mubr.bf16.mxu0 0
        %1110 = vmatmul.mubr.bf16.gmra.mxu0 %v788
        %v1111 = vpop.f32.mrf.mxu0
        %v1112 = vadd.f32 %v979, %v1111
        %v1113 = vpop.f32.mrf.mxu0
        %v1114 = vpop.f32.mrf.mxu0
        %v1115 = vadd.f32 %v979, %v1114
        %v1116 = vpop.f32.mrf.mxu0
        %1117 = vmatprep.mubr.bf16.mxu0 0
        %1118 = vmatmul.mubr.bf16.gmra.mxu0 %v789
        %v1119 = vpop.f32.mrf.mxu0
        %v1120 = vadd.f32 %v979, %v1119
        %v1121 = vpop.f32.mrf.mxu0
        %v1122 = vpop.f32.mrf.mxu0
        %v1123 = vadd.f32 %v979, %v1122
        %v1124 = vpop.f32.mrf.mxu0
        %1125 = vdwg.mxu0
        %v1126 = vld [vmem:[#allocation10] sm:$0xf]
        %v1127 = vld [vmem:[#allocation10 + $0x4] sm:$0xf]
        %v1128 = vld [vmem:[#allocation10 + $0x8] sm:$0xf]
        %v1129 = vld [vmem:[#allocation10 + $0xc] sm:$0xf]
        %v1130 = vld [vmem:[#allocation10 + $0x10] sm:$0xf]
        %v1131 = vld [vmem:[#allocation10 + $0x14] sm:$0xf]
        %v1132 = vld [vmem:[#allocation10 + $0x18] sm:$0xf]
        %v1133 = vld [vmem:[#allocation10 + $0x1c] sm:$0xf]
        %v1134 = vld [vmem:[#allocation10 + $0x20] sm:$0xf]
        %v1135 = vld [vmem:[#allocation10 + $0x24] sm:$0xf]
        %v1136 = vld [vmem:[#allocation10 + $0x28] sm:$0xf]
        %v1137 = vld [vmem:[#allocation10 + $0x2c] sm:$0xf]
        %v1138 = vld [vmem:[#allocation10 + $0x30] sm:$0xf]
        %v1139 = vld [vmem:[#allocation10 + $0x34] sm:$0xf]
        %v1140 = vld [vmem:[#allocation10 + $0x38] sm:$0xf]
        %v1141 = vld [vmem:[#allocation10 + $0x3c] sm:$0xf]
        %v1142 = vld [vmem:[%s7] sm:$0x1]
        %v1144 = vlaneseq
        %v1145 = vshrl.u32 %v1144, 7
        %v1146 = vsub.s32 0, %v1145
        %v1147 = vrot.slane %v1142, %v1146
        %v1165 = vunpack.c.l.b16 %v1126
        %v1166 = vunpack.c.l.b16 %v1127
        %v1167 = vunpack.c.l.b16 %v1128
        %v1168 = vunpack.c.l.b16 %v1129
        %v1169 = vunpack.c.l.b16 %v1130
        %v1170 = vunpack.c.l.b16 %v1131
        %v1171 = vunpack.c.l.b16 %v1132
        %v1172 = vunpack.c.l.b16 %v1133
        %v1173 = vunpack.c.l.b16 %v1134
        %v1174 = vunpack.c.l.b16 %v1135
        %v1175 = vunpack.c.l.b16 %v1136
        %v1176 = vunpack.c.l.b16 %v1137
        %v1177 = vunpack.c.l.b16 %v1138
        %v1178 = vunpack.c.l.b16 %v1139
        %v1179 = vunpack.c.l.b16 %v1140
        %v1180 = vunpack.c.l.b16 %v1141
        %v1181 = vpack.c.b16 %v1166, %v1165
        %v1182 = vpack.c.b16 %v1168, %v1167
        %v1183 = vpack.c.b16 %v1170, %v1169
        %v1184 = vpack.c.b16 %v1172, %v1171
        %v1185 = vpack.c.b16 %v1174, %v1173
        %v1186 = vpack.c.b16 %v1176, %v1175
        %v1187 = vpack.c.b16 %v1178, %v1177
        %v1188 = vpack.c.b16 %v1180, %v1179
        %1197 = vmatprep.subr.bf16.mxu0 0
        %1198 = vmatpush1.bf16.msra.mxu0 %v1188
        %1199 = vmatprep.subr.bf16.mxu0 0
        %1200 = vmatpush1.bf16.msra.mxu0 %v1187
        %1201 = vmatprep.subr.bf16.mxu0 0
        %1202 = vmatpush1.bf16.msra.mxu0 %v1186
        %1203 = vmatprep.subr.bf16.mxu0 0
        %1204 = vmatpush1.bf16.msra.mxu0 %v1185
        %1205 = vmatprep.subr.bf16.mxu0 0
        %1206 = vmatpush1.bf16.msra.mxu0 %v1184
        %1207 = vmatprep.subr.bf16.mxu0 0
        %1208 = vmatpush1.bf16.msra.mxu0 %v1183
        %1209 = vmatprep.subr.bf16.mxu0 0
        %1210 = vmatpush1.bf16.msra.mxu0 %v1182
        %1211 = vmatprep.subr.bf16.mxu0 0
        %1212 = vmatpush1.bf16.msra.mxu0 %v1181
        %1213 = vmatprep.subr.bf16.mxu0 0
        %1214 = vmatpush2.bf16.msra.mxu0 0
        %1215 = vmatprep.subr.bf16.mxu0 0
        %1216 = vmatpush2.bf16.msra.mxu0 0
        %1217 = vmatprep.subr.bf16.mxu0 0
        %1218 = vmatpush2.bf16.msra.mxu0 0
        %1219 = vmatprep.subr.bf16.mxu0 0
        %1220 = vmatpush2.bf16.msra.mxu0 0
        %1221 = vmatprep.subr.bf16.mxu0 0
        %1222 = vmatpush2.bf16.msra.mxu0 0
        %1223 = vmatprep.subr.bf16.mxu0 0
        %1224 = vmatpush2.bf16.msra.mxu0 0
        %1225 = vmatprep.subr.bf16.mxu0 0
        %1226 = vmatpush2.bf16.msra.mxu0 0
        %1227 = vmatprep.subr.bf16.mxu0 0
        %1228 = vmatpush2.bf16.msra.mxu0 0
        %1229 = vmatprep.mubr.bf16.mxu0 0
        %1230 = vmatmul.mubr.bf16.gmra.mxu0 %v782
        %v1231 = vpop.f32.mrf.mxu0
        %v1232 = vadd.f32 %v1147, %v1231
        %v1233 = vpop.f32.mrf.mxu0
        %v1234 = vpop.f32.mrf.mxu0
        %v1235 = vadd.f32 %v1147, %v1234
        %v1236 = vpop.f32.mrf.mxu0
        %1237 = vmatprep.mubr.bf16.mxu0 0
        %1238 = vmatmul.mubr.bf16.gmra.mxu0 %v783
        %v1239 = vpop.f32.mrf.mxu0
        %v1240 = vadd.f32 %v1147, %v1239
        %v1241 = vpop.f32.mrf.mxu0
        %v1242 = vpop.f32.mrf.mxu0
        %v1243 = vadd.f32 %v1147, %v1242
        %v1244 = vpop.f32.mrf.mxu0
        %1245 = vmatprep.mubr.bf16.mxu0 0
        %1246 = vmatmul.mubr.bf16.gmra.mxu0 %v784
        %v1247 = vpop.f32.mrf.mxu0
        %v1248 = vadd.f32 %v1147, %v1247
        %v1249 = vpop.f32.mrf.mxu0
        %v1250 = vpop.f32.mrf.mxu0
        %v1251 = vadd.f32 %v1147, %v1250
        %v1252 = vpop.f32.mrf.mxu0
        %1253 = vmatprep.mubr.bf16.mxu0 0
        %1254 = vmatmul.mubr.bf16.gmra.mxu0 %v785
        %v1255 = vpop.f32.mrf.mxu0
        %v1256 = vadd.f32 %v1147, %v1255
        %v1257 = vpop.f32.mrf.mxu0
        %v1258 = vpop.f32.mrf.mxu0
        %v1259 = vadd.f32 %v1147, %v1258
        %v1260 = vpop.f32.mrf.mxu0
        %1261 = vmatprep.mubr.bf16.mxu0 0
        %1262 = vmatmul.mubr.bf16.gmra.mxu0 %v786
        %v1263 = vpop.f32.mrf.mxu0
        %v1264 = vadd.f32 %v1147, %v1263
        %v1265 = vpop.f32.mrf.mxu0
        %v1266 = vpop.f32.mrf.mxu0
        %v1267 = vadd.f32 %v1147, %v1266
        %v1268 = vpop.f32.mrf.mxu0
        %1269 = vmatprep.mubr.bf16.mxu0 0
        %1270 = vmatmul.mubr.bf16.gmra.mxu0 %v787
        %v1271 = vpop.f32.mrf.mxu0
        %v1272 = vadd.f32 %v1147, %v1271
        %v1273 = vpop.f32.mrf.mxu0
        %v1274 = vpop.f32.mrf.mxu0
        %v1275 = vadd.f32 %v1147, %v1274
        %v1276 = vpop.f32.mrf.mxu0
        %1277 = vmatprep.mubr.bf16.mxu0 0
        %1278 = vmatmul.mubr.bf16.gmra.mxu0 %v788
        %v1279 = vpop.f32.mrf.mxu0
        %v1280 = vadd.f32 %v1147, %v1279
        %v1281 = vpop.f32.mrf.mxu0
        %v1282 = vpop.f32.mrf.mxu0
        %v1283 = vadd.f32 %v1147, %v1282
        %v1284 = vpop.f32.mrf.mxu0
        %1285 = vmatprep.mubr.bf16.mxu0 0
        %1286 = vmatmul.mubr.bf16.gmra.mxu0 %v789
        %v1287 = vpop.f32.mrf.mxu0
        %v1288 = vadd.f32 %v1147, %v1287
        %v1289 = vpop.f32.mrf.mxu0
        %v1290 = vpop.f32.mrf.mxu0
        %v1291 = vadd.f32 %v1147, %v1290
        %v1292 = vpop.f32.mrf.mxu0
        %1293 = vdwg.mxu0
        %v1294 = vpack.c.bf16 %v899, %v896
        %v1295 = vpack.c.bf16 %v907, %v904
        %v1296 = vpack.c.bf16 %v915, %v912
        %v1297 = vpack.c.bf16 %v923, %v920
        %v1298 = vpack.c.bf16 %v931, %v928
        %v1299 = vpack.c.bf16 %v939, %v936
        %v1300 = vpack.c.bf16 %v947, %v944
        %v1301 = vpack.c.bf16 %v955, %v952
        %v1302 = vpack.c.bf16 %v1067, %v1064
        %v1303 = vpack.c.bf16 %v1075, %v1072
        %v1304 = vpack.c.bf16 %v1083, %v1080
        %v1305 = vpack.c.bf16 %v1091, %v1088
        %v1306 = vpack.c.bf16 %v1099, %v1096
        %v1307 = vpack.c.bf16 %v1107, %v1104
        %v1308 = vpack.c.bf16 %v1115, %v1112
        %v1309 = vpack.c.bf16 %v1123, %v1120
        %v1310 = vpack.c.bf16 %v1235, %v1232
        %v1311 = vpack.c.bf16 %v1243, %v1240
        %v1312 = vpack.c.bf16 %v1251, %v1248
        %v1313 = vpack.c.bf16 %v1259, %v1256
        %v1314 = vpack.c.bf16 %v1267, %v1264
        %v1315 = vpack.c.bf16 %v1275, %v1272
        %v1316 = vpack.c.bf16 %v1283, %v1280
        %v1317 = vpack.c.bf16 %v1291, %v1288
        %v1318 = vld [vmem:[#allocation11] sm:$0xf]
        %v1319 = vld [vmem:[#allocation11 + $0x4] sm:$0xf]
        %v1320 = vld [vmem:[#allocation11 + $0x8] sm:$0xf]
        %v1321 = vld [vmem:[#allocation11 + $0xc] sm:$0xf]
        %v1322 = vld [vmem:[#allocation11 + $0x10] sm:$0xf]
        %v1323 = vld [vmem:[#allocation11 + $0x14] sm:$0xf]
        %v1324 = vld [vmem:[#allocation11 + $0x18] sm:$0xf]
        %v1325 = vld [vmem:[#allocation11 + $0x1c] sm:$0xf]
        %v1326 = vld [vmem:[#allocation11 + $0x20] sm:$0xf]
        %v1327 = vld [vmem:[#allocation11 + $0x24] sm:$0xf]
        %v1328 = vld [vmem:[#allocation11 + $0x28] sm:$0xf]
        %v1329 = vld [vmem:[#allocation11 + $0x2c] sm:$0xf]
        %v1330 = vld [vmem:[#allocation11 + $0x30] sm:$0xf]
        %v1331 = vld [vmem:[#allocation11 + $0x34] sm:$0xf]
        %v1332 = vld [vmem:[#allocation11 + $0x38] sm:$0xf]
        %v1333 = vld [vmem:[#allocation11 + $0x3c] sm:$0xf]
        %vm1334 = vcmask 261120
        %v1336 = vsel %vm1334, %v1294, 0
        %v1339 = vsel %vm1334, %v1295, 0
        %v1342 = vsel %vm1334, %v1296, 0
        %v1345 = vsel %vm1334, %v1297, 0
        %v1348 = vsel %vm1334, %v1298, 0
        %v1351 = vsel %vm1334, %v1299, 0
        %v1354 = vsel %vm1334, %v1300, 0
        %v1357 = vsel %vm1334, %v1301, 0
        %v1360 = vsel %vm1334, %v1302, 0
        %v1363 = vsel %vm1334, %v1303, 0
        %v1366 = vsel %vm1334, %v1304, 0
        %v1369 = vsel %vm1334, %v1305, 0
        %v1372 = vsel %vm1334, %v1306, 0
        %v1375 = vsel %vm1334, %v1307, 0
        %v1378 = vsel %vm1334, %v1308, 0
        %v1381 = vsel %vm1334, %v1309, 0
        %1383 = vmatprep.subr.bf16.mxu0 0
        %1384 = vmatpush1.bf16.xpose.msra.mxu0 %v1381
        %1385 = vmatprep.subr.bf16.mxu0 0
        %1386 = vmatpush1.bf16.xpose.msra.mxu0 %v1378
        %1387 = vmatprep.subr.bf16.mxu0 0
        %1388 = vmatpush1.bf16.xpose.msra.mxu0 %v1375
        %1389 = vmatprep.subr.bf16.mxu0 0
        %1390 = vmatpush1.bf16.xpose.msra.mxu0 %v1372
        %1391 = vmatprep.subr.bf16.mxu0 0
        %1392 = vmatpush1.bf16.xpose.msra.mxu0 %v1369
        %1393 = vmatprep.subr.bf16.mxu0 0
        %1394 = vmatpush1.bf16.xpose.msra.mxu0 %v1366
        %1395 = vmatprep.subr.bf16.mxu0 0
        %1396 = vmatpush1.bf16.xpose.msra.mxu0 %v1363
        %1397 = vmatprep.subr.bf16.mxu0 0
        %1398 = vmatpush1.bf16.xpose.msra.mxu0 %v1360
        %1399 = vmatprep.subr.bf16.mxu0 0
        %1400 = vmatpush2.bf16.xpose.msra.mxu0 0
        %1401 = vmatprep.subr.bf16.mxu0 0
        %1402 = vmatpush2.bf16.xpose.msra.mxu0 0
        %1403 = vmatprep.subr.bf16.mxu0 0
        %1404 = vmatpush2.bf16.xpose.msra.mxu0 0
        %1405 = vmatprep.subr.bf16.mxu0 0
        %1406 = vmatpush2.bf16.xpose.msra.mxu0 0
        %1407 = vmatprep.subr.bf16.mxu0 0
        %1408 = vmatpush2.bf16.xpose.msra.mxu0 0
        %1409 = vmatprep.subr.bf16.mxu0 0
        %1410 = vmatpush2.bf16.xpose.msra.mxu0 0
        %1411 = vmatprep.subr.bf16.mxu0 0
        %1412 = vmatpush2.bf16.xpose.msra.mxu0 0
        %1413 = vmatprep.subr.bf16.mxu0 0
        %1414 = vmatpush2.bf16.xpose.msra.mxu0 0
        %1415 = vmatprep.mubr.bf16.mxu0 0
        %1416 = vmatmul.mubr.bf16.gmra.mxu0 %v1336
        %v1417 = vpop.f32.mrf.mxu0
        %v1418 = vadd.f32 0.0, %v1417
        %v1419 = vpop.f32.mrf.mxu0
        %v1420 = vpop.f32.mrf.mxu0
        %v1421 = vadd.f32 0.0, %v1420
        %v1422 = vpop.f32.mrf.mxu0
        %1423 = vmatprep.mubr.bf16.mxu0 0
        %1424 = vmatmul.mubr.bf16.gmra.mxu0 %v1339
        %v1425 = vpop.f32.mrf.mxu0
        %v1426 = vadd.f32 0.0, %v1425
        %v1427 = vpop.f32.mrf.mxu0
        %v1428 = vpop.f32.mrf.mxu0
        %v1429 = vadd.f32 0.0, %v1428
        %v1430 = vpop.f32.mrf.mxu0
        %1431 = vmatprep.mubr.bf16.mxu0 0
        %1432 = vmatmul.mubr.bf16.gmra.mxu0 %v1342
        %v1433 = vpop.f32.mrf.mxu0
        %v1434 = vadd.f32 0.0, %v1433
        %v1435 = vpop.f32.mrf.mxu0
        %v1436 = vpop.f32.mrf.mxu0
        %v1437 = vadd.f32 0.0, %v1436
        %v1438 = vpop.f32.mrf.mxu0
        %1439 = vmatprep.mubr.bf16.mxu0 0
        %1440 = vmatmul.mubr.bf16.gmra.mxu0 %v1345
        %v1441 = vpop.f32.mrf.mxu0
        %v1442 = vadd.f32 0.0, %v1441
        %v1443 = vpop.f32.mrf.mxu0
        %v1444 = vpop.f32.mrf.mxu0
        %v1445 = vadd.f32 0.0, %v1444
        %v1446 = vpop.f32.mrf.mxu0
        %1447 = vmatprep.mubr.bf16.mxu0 0
        %1448 = vmatmul.mubr.bf16.gmra.mxu0 %v1348
        %v1449 = vpop.f32.mrf.mxu0
        %v1450 = vadd.f32 0.0, %v1449
        %v1451 = vpop.f32.mrf.mxu0
        %v1452 = vpop.f32.mrf.mxu0
        %v1453 = vadd.f32 0.0, %v1452
        %v1454 = vpop.f32.mrf.mxu0
        %1455 = vmatprep.mubr.bf16.mxu0 0
        %1456 = vmatmul.mubr.bf16.gmra.mxu0 %v1351
        %v1457 = vpop.f32.mrf.mxu0
        %v1458 = vadd.f32 0.0, %v1457
        %v1459 = vpop.f32.mrf.mxu0
        %v1460 = vpop.f32.mrf.mxu0
        %v1461 = vadd.f32 0.0, %v1460
        %v1462 = vpop.f32.mrf.mxu0
        %1463 = vmatprep.mubr.bf16.mxu0 0
        %1464 = vmatmul.mubr.bf16.gmra.mxu0 %v1354
        %v1465 = vpop.f32.mrf.mxu0
        %v1466 = vadd.f32 0.0, %v1465
        %v1467 = vpop.f32.mrf.mxu0
        %v1468 = vpop.f32.mrf.mxu0
        %v1469 = vadd.f32 0.0, %v1468
        %v1470 = vpop.f32.mrf.mxu0
        %1471 = vmatprep.mubr.bf16.mxu0 0
        %1472 = vmatmul.mubr.bf16.gmra.mxu0 %v1357
        %v1473 = vpop.f32.mrf.mxu0
        %v1474 = vadd.f32 0.0, %v1473
        %v1475 = vpop.f32.mrf.mxu0
        %v1476 = vpop.f32.mrf.mxu0
        %v1477 = vadd.f32 0.0, %v1476
        %v1478 = vpop.f32.mrf.mxu0
        %1479 = vdwg.mxu0
        %v1480 = vmul.f32 %v1418, 0.17677669
        %v1481 = vmul.f32 %v1421, 0.17677669
        %v1482 = vmul.f32 %v1426, 0.17677669
        %v1483 = vmul.f32 %v1429, 0.17677669
        %v1484 = vmul.f32 %v1434, 0.17677669
        %v1485 = vmul.f32 %v1437, 0.17677669
        %v1486 = vmul.f32 %v1442, 0.17677669
        %v1487 = vmul.f32 %v1445, 0.17677669
        %v1488 = vmul.f32 %v1450, 0.17677669
        %v1489 = vmul.f32 %v1453, 0.17677669
        %v1490 = vmul.f32 %v1458, 0.17677669
        %v1491 = vmul.f32 %v1461, 0.17677669
        %v1492 = vmul.f32 %v1466, 0.17677669
        %v1493 = vmul.f32 %v1469, 0.17677669
        %v1494 = vmul.f32 %v1474, 0.17677669
        %v1495 = vmul.f32 %v1477, 0.17677669
        %1496 = vmax.xlane.f32.xlu0 %v1480
        %v1497 = vpop.xlane.xlu0 %1496
        %1498 = vmax.xlane.f32.xlu0 %v1481
        %v1499 = vpop.xlane.xlu0 %1498
        %1500 = vmax.xlane.f32.xlu0 %v1482
        %v1501 = vpop.xlane.xlu0 %1500
        %1502 = vmax.xlane.f32.xlu0 %v1483
        %v1503 = vpop.xlane.xlu0 %1502
        %1504 = vmax.xlane.f32.xlu0 %v1484
        %v1505 = vpop.xlane.xlu0 %1504
        %1506 = vmax.xlane.f32.xlu0 %v1485
        %v1507 = vpop.xlane.xlu0 %1506
        %1508 = vmax.xlane.f32.xlu0 %v1486
        %v1509 = vpop.xlane.xlu0 %1508
        %1510 = vmax.xlane.f32.xlu0 %v1487
        %v1511 = vpop.xlane.xlu0 %1510
        %1512 = vmax.xlane.f32.xlu0 %v1488
        %v1513 = vpop.xlane.xlu0 %1512
        %1514 = vmax.xlane.f32.xlu0 %v1489
        %v1515 = vpop.xlane.xlu0 %1514
        %1516 = vmax.xlane.f32.xlu0 %v1490
        %v1517 = vpop.xlane.xlu0 %1516
        %1518 = vmax.xlane.f32.xlu0 %v1491
        %v1519 = vpop.xlane.xlu0 %1518
        %1520 = vmax.xlane.f32.xlu0 %v1492
        %v1521 = vpop.xlane.xlu0 %1520
        %1522 = vmax.xlane.f32.xlu0 %v1493
        %v1523 = vpop.xlane.xlu0 %1522
        %1524 = vmax.xlane.f32.xlu0 %v1494
        %v1525 = vpop.xlane.xlu0 %1524
        %1526 = vmax.xlane.f32.xlu0 %v1495
        %v1527 = vpop.xlane.xlu0 %1526
        %v1528 = vsub.f32 %v1480, %v1497
        %v1529 = vsub.f32 %v1481, %v1499
        %v1530 = vsub.f32 %v1482, %v1501
        %v1531 = vsub.f32 %v1483, %v1503
        %v1532 = vsub.f32 %v1484, %v1505
        %v1533 = vsub.f32 %v1485, %v1507
        %v1534 = vsub.f32 %v1486, %v1509
        %v1535 = vsub.f32 %v1487, %v1511
        %v1536 = vsub.f32 %v1488, %v1513
        %v1537 = vsub.f32 %v1489, %v1515
        %v1538 = vsub.f32 %v1490, %v1517
        %v1539 = vsub.f32 %v1491, %v1519
        %v1540 = vsub.f32 %v1492, %v1521
        %v1541 = vsub.f32 %v1493, %v1523
        %v1542 = vsub.f32 %v1494, %v1525
        %v1543 = vsub.f32 %v1495, %v1527
        %v1544 = vmul.f32 %v1528, 1.442695
        %v1545 = vpow.pop %v1544
        %v1546 = vmul.f32 %v1529, 1.442695
        %v1547 = vpow.pop %v1546
        %v1548 = vmul.f32 %v1530, 1.442695
        %v1549 = vpow.pop %v1548
        %v1550 = vmul.f32 %v1531, 1.442695
        %v1551 = vpow.pop %v1550
        %v1552 = vmul.f32 %v1532, 1.442695
        %v1553 = vpow.pop %v1552
        %v1554 = vmul.f32 %v1533, 1.442695
        %v1555 = vpow.pop %v1554
        %v1556 = vmul.f32 %v1534, 1.442695
        %v1557 = vpow.pop %v1556
        %v1558 = vmul.f32 %v1535, 1.442695
        %v1559 = vpow.pop %v1558
        %v1560 = vmul.f32 %v1536, 1.442695
        %v1561 = vpow.pop %v1560
        %v1562 = vmul.f32 %v1537, 1.442695
        %v1563 = vpow.pop %v1562
        %v1564 = vmul.f32 %v1538, 1.442695
        %v1565 = vpow.pop %v1564
        %v1566 = vmul.f32 %v1539, 1.442695
        %v1567 = vpow.pop %v1566
        %v1568 = vmul.f32 %v1540, 1.442695
        %v1569 = vpow.pop %v1568
        %v1570 = vmul.f32 %v1541, 1.442695
        %v1571 = vpow.pop %v1570
        %v1572 = vmul.f32 %v1542, 1.442695
        %v1573 = vpow.pop %v1572
        %v1574 = vmul.f32 %v1543, 1.442695
        %v1575 = vpow.pop %v1574
        %1576 = vadd.xlane.f32.xlu0 %v1545
        %v1577 = vpop.xlane.xlu0 %1576
        %1578 = vadd.xlane.f32.xlu0 %v1547
        %v1579 = vpop.xlane.xlu0 %1578
        %1580 = vadd.xlane.f32.xlu0 %v1549
        %v1581 = vpop.xlane.xlu0 %1580
        %1582 = vadd.xlane.f32.xlu0 %v1551
        %v1583 = vpop.xlane.xlu0 %1582
        %1584 = vadd.xlane.f32.xlu0 %v1553
        %v1585 = vpop.xlane.xlu0 %1584
        %1586 = vadd.xlane.f32.xlu0 %v1555
        %v1587 = vpop.xlane.xlu0 %1586
        %1588 = vadd.xlane.f32.xlu0 %v1557
        %v1589 = vpop.xlane.xlu0 %1588
        %1590 = vadd.xlane.f32.xlu0 %v1559
        %v1591 = vpop.xlane.xlu0 %1590
        %1592 = vadd.xlane.f32.xlu0 %v1561
        %v1593 = vpop.xlane.xlu0 %1592
        %1594 = vadd.xlane.f32.xlu0 %v1563
        %v1595 = vpop.xlane.xlu0 %1594
        %1596 = vadd.xlane.f32.xlu0 %v1565
        %v1597 = vpop.xlane.xlu0 %1596
        %1598 = vadd.xlane.f32.xlu0 %v1567
        %v1599 = vpop.xlane.xlu0 %1598
        %1600 = vadd.xlane.f32.xlu0 %v1569
        %v1601 = vpop.xlane.xlu0 %1600
        %1602 = vadd.xlane.f32.xlu0 %v1571
        %v1603 = vpop.xlane.xlu0 %1602
        %1604 = vadd.xlane.f32.xlu0 %v1573
        %v1605 = vpop.xlane.xlu0 %1604
        %1606 = vadd.xlane.f32.xlu0 %v1575
        %v1607 = vpop.xlane.xlu0 %1606
        %v1608 = vrcp.pop %v1577
        %v1609 = vrcp.pop %v1579
        %v1610 = vrcp.pop %v1581
        %v1611 = vrcp.pop %v1583
        %v1612 = vrcp.pop %v1585
        %v1613 = vrcp.pop %v1587
        %v1614 = vrcp.pop %v1589
        %v1615 = vrcp.pop %v1591
        %v1616 = vrcp.pop %v1593
        %v1617 = vrcp.pop %v1595
        %v1618 = vrcp.pop %v1597
        %v1619 = vrcp.pop %v1599
        %v1620 = vrcp.pop %v1601
        %v1621 = vrcp.pop %v1603
        %v1622 = vrcp.pop %v1605
        %v1623 = vrcp.pop %v1607
        %v1624 = vmul.f32 %v1545, %v1608
        %v1625 = vmul.f32 %v1547, %v1609
        %v1626 = vmul.f32 %v1549, %v1610
        %v1627 = vmul.f32 %v1551, %v1611
        %v1628 = vmul.f32 %v1553, %v1612
        %v1629 = vmul.f32 %v1555, %v1613
        %v1630 = vmul.f32 %v1557, %v1614
        %v1631 = vmul.f32 %v1559, %v1615
        %v1632 = vmul.f32 %v1561, %v1616
        %v1633 = vmul.f32 %v1563, %v1617
        %v1634 = vmul.f32 %v1565, %v1618
        %v1635 = vmul.f32 %v1567, %v1619
        %v1636 = vmul.f32 %v1569, %v1620
        %v1637 = vmul.f32 %v1571, %v1621
        %v1638 = vmul.f32 %v1573, %v1622
        %v1639 = vmul.f32 %v1575, %v1623
        %v1640 = vpack.c.bf16 %v1625, %v1624
        %v1641 = vpack.c.bf16 %v1627, %v1626
        %v1642 = vpack.c.bf16 %v1629, %v1628
        %v1643 = vpack.c.bf16 %v1631, %v1630
        %v1644 = vpack.c.bf16 %v1633, %v1632
        %v1645 = vpack.c.bf16 %v1635, %v1634
        %v1646 = vpack.c.bf16 %v1637, %v1636
        %v1647 = vpack.c.bf16 %v1639, %v1638
        %1648 = vmatprep.subr.bf16.mxu0 0
        %1649 = vmatpush1.bf16.msra.mxu0 %v1317
        %1650 = vmatprep.subr.bf16.mxu0 0
        %1651 = vmatpush1.bf16.msra.mxu0 %v1316
        %1652 = vmatprep.subr.bf16.mxu0 0
        %1653 = vmatpush1.bf16.msra.mxu0 %v1315
        %1654 = vmatprep.subr.bf16.mxu0 0
        %1655 = vmatpush1.bf16.msra.mxu0 %v1314
        %1656 = vmatprep.subr.bf16.mxu0 0
        %1657 = vmatpush1.bf16.msra.mxu0 %v1313
        %1658 = vmatprep.subr.bf16.mxu0 0
        %1659 = vmatpush1.bf16.msra.mxu0 %v1312
        %1660 = vmatprep.subr.bf16.mxu0 0
        %1661 = vmatpush1.bf16.msra.mxu0 %v1311
        %1662 = vmatprep.subr.bf16.mxu0 0
        %1663 = vmatpush1.bf16.msra.mxu0 %v1310
        %1664 = vmatprep.subr.bf16.mxu0 0
        %1665 = vmatpush2.bf16.msra.mxu0 0
        %1666 = vmatprep.subr.bf16.mxu0 0
        %1667 = vmatpush2.bf16.msra.mxu0 0
        %1668 = vmatprep.subr.bf16.mxu0 0
        %1669 = vmatpush2.bf16.msra.mxu0 0
        %1670 = vmatprep.subr.bf16.mxu0 0
        %1671 = vmatpush2.bf16.msra.mxu0 0
        %1672 = vmatprep.subr.bf16.mxu0 0
        %1673 = vmatpush2.bf16.msra.mxu0 0
        %1674 = vmatprep.subr.bf16.mxu0 0
        %1675 = vmatpush2.bf16.msra.mxu0 0
        %1676 = vmatprep.subr.bf16.mxu0 0
        %1677 = vmatpush2.bf16.msra.mxu0 0
        %1678 = vmatprep.subr.bf16.mxu0 0
        %1679 = vmatpush2.bf16.msra.mxu0 0
        %1680 = vmatprep.mubr.bf16.mxu0 0
        %1681 = vmatmul.mubr.bf16.gmra.mxu0 %v1640
        %v1682 = vpop.f32.mrf.mxu0
        %v1683 = vadd.f32 0.0, %v1682
        %v1684 = vpop.f32.mrf.mxu0
        %v1685 = vpop.f32.mrf.mxu0
        %v1686 = vadd.f32 0.0, %v1685
        %v1687 = vpop.f32.mrf.mxu0
        %1688 = vmatprep.mubr.bf16.mxu0 0
        %1689 = vmatmul.mubr.bf16.gmra.mxu0 %v1641
        %v1690 = vpop.f32.mrf.mxu0
        %v1691 = vadd.f32 0.0, %v1690
        %v1692 = vpop.f32.mrf.mxu0
        %v1693 = vpop.f32.mrf.mxu0
        %v1694 = vadd.f32 0.0, %v1693
        %v1695 = vpop.f32.mrf.mxu0
        %1696 = vmatprep.mubr.bf16.mxu0 0
        %1697 = vmatmul.mubr.bf16.gmra.mxu0 %v1642
        %v1698 = vpop.f32.mrf.mxu0
        %v1699 = vadd.f32 0.0, %v1698
        %v1700 = vpop.f32.mrf.mxu0
        %v1701 = vpop.f32.mrf.mxu0
        %v1702 = vadd.f32 0.0, %v1701
        %v1703 = vpop.f32.mrf.mxu0
        %1704 = vmatprep.mubr.bf16.mxu0 0
        %1705 = vmatmul.mubr.bf16.gmra.mxu0 %v1643
        %v1706 = vpop.f32.mrf.mxu0
        %v1707 = vadd.f32 0.0, %v1706
        %v1708 = vpop.f32.mrf.mxu0
        %v1709 = vpop.f32.mrf.mxu0
        %v1710 = vadd.f32 0.0, %v1709
        %v1711 = vpop.f32.mrf.mxu0
        %1712 = vmatprep.mubr.bf16.mxu0 0
        %1713 = vmatmul.mubr.bf16.gmra.mxu0 %v1644
        %v1714 = vpop.f32.mrf.mxu0
        %v1715 = vadd.f32 0.0, %v1714
        %v1716 = vpop.f32.mrf.mxu0
        %v1717 = vpop.f32.mrf.mxu0
        %v1718 = vadd.f32 0.0, %v1717
        %v1719 = vpop.f32.mrf.mxu0
        %1720 = vmatprep.mubr.bf16.mxu0 0
        %1721 = vmatmul.mubr.bf16.gmra.mxu0 %v1645
        %v1722 = vpop.f32.mrf.mxu0
        %v1723 = vadd.f32 0.0, %v1722
        %v1724 = vpop.f32.mrf.mxu0
        %v1725 = vpop.f32.mrf.mxu0
        %v1726 = vadd.f32 0.0, %v1725
        %v1727 = vpop.f32.mrf.mxu0
        %1728 = vmatprep.mubr.bf16.mxu0 0
        %1729 = vmatmul.mubr.bf16.gmra.mxu0 %v1646
        %v1730 = vpop.f32.mrf.mxu0
        %v1731 = vadd.f32 0.0, %v1730
        %v1732 = vpop.f32.mrf.mxu0
        %v1733 = vpop.f32.mrf.mxu0
        %v1734 = vadd.f32 0.0, %v1733
        %v1735 = vpop.f32.mrf.mxu0
        %1736 = vmatprep.mubr.bf16.mxu0 0
        %1737 = vmatmul.mubr.bf16.gmra.mxu0 %v1647
        %v1738 = vpop.f32.mrf.mxu0
        %v1739 = vadd.f32 0.0, %v1738
        %v1740 = vpop.f32.mrf.mxu0
        %v1741 = vpop.f32.mrf.mxu0
        %v1742 = vadd.f32 0.0, %v1741
        %v1743 = vpop.f32.mrf.mxu0
        %1744 = vdwg.mxu0
        %v1745 = vpack.c.bf16 %v1686, %v1683
        %v1746 = vpack.c.bf16 %v1694, %v1691
        %v1747 = vpack.c.bf16 %v1702, %v1699
        %v1748 = vpack.c.bf16 %v1710, %v1707
        %v1749 = vpack.c.bf16 %v1718, %v1715
        %v1750 = vpack.c.bf16 %v1726, %v1723
        %v1751 = vpack.c.bf16 %v1734, %v1731
        %v1752 = vpack.c.bf16 %v1742, %v1739
        %1761 = vrot.lane.b32.xlu0 %v1294, 96
        %v1762 = vpop.permute.xlu0 %1761
        %1763 = vrot.lane.b32.xlu0 %v1295, 96
        %v1764 = vpop.permute.xlu0 %1763
        %1765 = vrot.lane.b32.xlu0 %v1296, 96
        %v1766 = vpop.permute.xlu0 %1765
        %1767 = vrot.lane.b32.xlu0 %v1297, 96
        %v1768 = vpop.permute.xlu0 %1767
        %1769 = vrot.lane.b32.xlu0 %v1298, 96
        %v1770 = vpop.permute.xlu0 %1769
        %1771 = vrot.lane.b32.xlu0 %v1299, 96
        %v1772 = vpop.permute.xlu0 %1771
        %1773 = vrot.lane.b32.xlu0 %v1300, 96
        %v1774 = vpop.permute.xlu0 %1773
        %1775 = vrot.lane.b32.xlu0 %v1301, 96
        %v1776 = vpop.permute.xlu0 %1775
        %1785 = vrot.lane.b32.xlu0 %v1302, 96
        %v1786 = vpop.permute.xlu0 %1785
        %1787 = vrot.lane.b32.xlu0 %v1303, 96
        %v1788 = vpop.permute.xlu0 %1787
        %1789 = vrot.lane.b32.xlu0 %v1304, 96
        %v1790 = vpop.permute.xlu0 %1789
        %1791 = vrot.lane.b32.xlu0 %v1305, 96
        %v1792 = vpop.permute.xlu0 %1791
        %1793 = vrot.lane.b32.xlu0 %v1306, 96
        %v1794 = vpop.permute.xlu0 %1793
        %1795 = vrot.lane.b32.xlu0 %v1307, 96
        %v1796 = vpop.permute.xlu0 %1795
        %1797 = vrot.lane.b32.xlu0 %v1308, 96
        %v1798 = vpop.permute.xlu0 %1797
        %1799 = vrot.lane.b32.xlu0 %v1309, 96
        %v1800 = vpop.permute.xlu0 %1799
        %v1802 = vsel %vm1334, %v1762, 0
        %v1805 = vsel %vm1334, %v1764, 0
        %v1808 = vsel %vm1334, %v1766, 0
        %v1811 = vsel %vm1334, %v1768, 0
        %v1814 = vsel %vm1334, %v1770, 0
        %v1817 = vsel %vm1334, %v1772, 0
        %v1820 = vsel %vm1334, %v1774, 0
        %v1823 = vsel %vm1334, %v1776, 0
        %v1826 = vsel %vm1334, %v1786, 0
        %v1829 = vsel %vm1334, %v1788, 0
        %v1832 = vsel %vm1334, %v1790, 0
        %v1835 = vsel %vm1334, %v1792, 0
        %v1838 = vsel %vm1334, %v1794, 0
        %v1841 = vsel %vm1334, %v1796, 0
        %v1844 = vsel %vm1334, %v1798, 0
        %v1847 = vsel %vm1334, %v1800, 0
        %1849 = vmatprep.subr.bf16.mxu0 0
        %1850 = vmatpush1.bf16.xpose.msra.mxu0 %v1847
        %1851 = vmatprep.subr.bf16.mxu0 0
        %1852 = vmatpush1.bf16.xpose.msra.mxu0 %v1844
        %1853 = vmatprep.subr.bf16.mxu0 0
        %1854 = vmatpush1.bf16.xpose.msra.mxu0 %v1841
        %1855 = vmatprep.subr.bf16.mxu0 0
        %1856 = vmatpush1.bf16.xpose.msra.mxu0 %v1838
        %1857 = vmatprep.subr.bf16.mxu0 0
        %1858 = vmatpush1.bf16.xpose.msra.mxu0 %v1835
        %1859 = vmatprep.subr.bf16.mxu0 0
        %1860 = vmatpush1.bf16.xpose.msra.mxu0 %v1832
        %1861 = vmatprep.subr.bf16.mxu0 0
        %1862 = vmatpush1.bf16.xpose.msra.mxu0 %v1829
        %1863 = vmatprep.subr.bf16.mxu0 0
        %1864 = vmatpush1.bf16.xpose.msra.mxu0 %v1826
        %1865 = vmatprep.subr.bf16.mxu0 0
        %1866 = vmatpush2.bf16.xpose.msra.mxu0 0
        %1867 = vmatprep.subr.bf16.mxu0 0
        %1868 = vmatpush2.bf16.xpose.msra.mxu0 0
        %1869 = vmatprep.subr.bf16.mxu0 0
        %1870 = vmatpush2.bf16.xpose.msra.mxu0 0
        %1871 = vmatprep.subr.bf16.mxu0 0
        %1872 = vmatpush2.bf16.xpose.msra.mxu0 0
        %1873 = vmatprep.subr.bf16.mxu0 0
        %1874 = vmatpush2.bf16.xpose.msra.mxu0 0
        %1875 = vmatprep.subr.bf16.mxu0 0
        %1876 = vmatpush2.bf16.xpose.msra.mxu0 0
        %1877 = vmatprep.subr.bf16.mxu0 0
        %1878 = vmatpush2.bf16.xpose.msra.mxu0 0
        %1879 = vmatprep.subr.bf16.mxu0 0
        %1880 = vmatpush2.bf16.xpose.msra.mxu0 0
        %1881 = vmatprep.mubr.bf16.mxu0 0
        %1882 = vmatmul.mubr.bf16.gmra.mxu0 %v1802
        %v1883 = vpop.f32.mrf.mxu0
        %v1884 = vadd.f32 0.0, %v1883
        %v1885 = vpop.f32.mrf.mxu0
        %v1886 = vpop.f32.mrf.mxu0
        %v1887 = vadd.f32 0.0, %v1886
        %v1888 = vpop.f32.mrf.mxu0
        %1889 = vmatprep.mubr.bf16.mxu0 0
        %1890 = vmatmul.mubr.bf16.gmra.mxu0 %v1805
        %v1891 = vpop.f32.mrf.mxu0
        %v1892 = vadd.f32 0.0, %v1891
        %v1893 = vpop.f32.mrf.mxu0
        %v1894 = vpop.f32.mrf.mxu0
        %v1895 = vadd.f32 0.0, %v1894
        %v1896 = vpop.f32.mrf.mxu0
        %1897 = vmatprep.mubr.bf16.mxu0 0
        %1898 = vmatmul.mubr.bf16.gmra.mxu0 %v1808
        %v1899 = vpop.f32.mrf.mxu0
        %v1900 = vadd.f32 0.0, %v1899
        %v1901 = vpop.f32.mrf.mxu0
        %v1902 = vpop.f32.mrf.mxu0
        %v1903 = vadd.f32 0.0, %v1902
        %v1904 = vpop.f32.mrf.mxu0
        %1905 = vmatprep.mubr.bf16.mxu0 0
        %1906 = vmatmul.mubr.bf16.gmra.mxu0 %v1811
        %v1907 = vpop.f32.mrf.mxu0
        %v1908 = vadd.f32 0.0, %v1907
        %v1909 = vpop.f32.mrf.mxu0
        %v1910 = vpop.f32.mrf.mxu0
        %v1911 = vadd.f32 0.0, %v1910
        %v1912 = vpop.f32.mrf.mxu0
        %1913 = vmatprep.mubr.bf16.mxu0 0
        %1914 = vmatmul.mubr.bf16.gmra.mxu0 %v1814
        %v1915 = vpop.f32.mrf.mxu0
        %v1916 = vadd.f32 0.0, %v1915
        %v1917 = vpop.f32.mrf.mxu0
        %v1918 = vpop.f32.mrf.mxu0
        %v1919 = vadd.f32 0.0, %v1918
        %v1920 = vpop.f32.mrf.mxu0
        %1921 = vmatprep.mubr.bf16.mxu0 0
        %1922 = vmatmul.mubr.bf16.gmra.mxu0 %v1817
        %v1923 = vpop.f32.mrf.mxu0
        %v1924 = vadd.f32 0.0, %v1923
        %v1925 = vpop.f32.mrf.mxu0
        %v1926 = vpop.f32.mrf.mxu0
        %v1927 = vadd.f32 0.0, %v1926
        %v1928 = vpop.f32.mrf.mxu0
        %1929 = vmatprep.mubr.bf16.mxu0 0
        %1930 = vmatmul.mubr.bf16.gmra.mxu0 %v1820
        %v1931 = vpop.f32.mrf.mxu0
        %v1932 = vadd.f32 0.0, %v1931
        %v1933 = vpop.f32.mrf.mxu0
        %v1934 = vpop.f32.mrf.mxu0
        %v1935 = vadd.f32 0.0, %v1934
        %v1936 = vpop.f32.mrf.mxu0
        %1937 = vmatprep.mubr.bf16.mxu0 0
        %1938 = vmatmul.mubr.bf16.gmra.mxu0 %v1823
        %v1939 = vpop.f32.mrf.mxu0
        %v1940 = vadd.f32 0.0, %v1939
        %v1941 = vpop.f32.mrf.mxu0
        %v1942 = vpop.f32.mrf.mxu0
        %v1943 = vadd.f32 0.0, %v1942
        %v1944 = vpop.f32.mrf.mxu0
        %1945 = vdwg.mxu0
        %v1946 = vmul.f32 %v1884, 0.17677669
        %v1947 = vmul.f32 %v1887, 0.17677669
        %v1948 = vmul.f32 %v1892, 0.17677669
        %v1949 = vmul.f32 %v1895, 0.17677669
        %v1950 = vmul.f32 %v1900, 0.17677669
        %v1951 = vmul.f32 %v1903, 0.17677669
        %v1952 = vmul.f32 %v1908, 0.17677669
        %v1953 = vmul.f32 %v1911, 0.17677669
        %v1954 = vmul.f32 %v1916, 0.17677669
        %v1955 = vmul.f32 %v1919, 0.17677669
        %v1956 = vmul.f32 %v1924, 0.17677669
        %v1957 = vmul.f32 %v1927, 0.17677669
        %v1958 = vmul.f32 %v1932, 0.17677669
        %v1959 = vmul.f32 %v1935, 0.17677669
        %v1960 = vmul.f32 %v1940, 0.17677669
        %v1961 = vmul.f32 %v1943, 0.17677669
        %1962 = vmax.xlane.f32.xlu0 %v1946
        %v1963 = vpop.xlane.xlu0 %1962
        %1964 = vmax.xlane.f32.xlu0 %v1947
        %v1965 = vpop.xlane.xlu0 %1964
        %1966 = vmax.xlane.f32.xlu0 %v1948
        %v1967 = vpop.xlane.xlu0 %1966
        %1968 = vmax.xlane.f32.xlu0 %v1949
        %v1969 = vpop.xlane.xlu0 %1968
        %1970 = vmax.xlane.f32.xlu0 %v1950
        %v1971 = vpop.xlane.xlu0 %1970
        %1972 = vmax.xlane.f32.xlu0 %v1951
        %v1973 = vpop.xlane.xlu0 %1972
        %1974 = vmax.xlane.f32.xlu0 %v1952
        %v1975 = vpop.xlane.xlu0 %1974
        %1976 = vmax.xlane.f32.xlu0 %v1953
        %v1977 = vpop.xlane.xlu0 %1976
        %1978 = vmax.xlane.f32.xlu0 %v1954
        %v1979 = vpop.xlane.xlu0 %1978
        %1980 = vmax.xlane.f32.xlu0 %v1955
        %v1981 = vpop.xlane.xlu0 %1980
        %1982 = vmax.xlane.f32.xlu0 %v1956
        %v1983 = vpop.xlane.xlu0 %1982
        %1984 = vmax.xlane.f32.xlu0 %v1957
        %v1985 = vpop.xlane.xlu0 %1984
        %1986 = vmax.xlane.f32.xlu0 %v1958
        %v1987 = vpop.xlane.xlu0 %1986
        %1988 = vmax.xlane.f32.xlu0 %v1959
        %v1989 = vpop.xlane.xlu0 %1988
        %1990 = vmax.xlane.f32.xlu0 %v1960
        %v1991 = vpop.xlane.xlu0 %1990
        %1992 = vmax.xlane.f32.xlu0 %v1961
        %v1993 = vpop.xlane.xlu0 %1992
        %v1994 = vsub.f32 %v1946, %v1963
        %v1995 = vsub.f32 %v1947, %v1965
        %v1996 = vsub.f32 %v1948, %v1967
        %v1997 = vsub.f32 %v1949, %v1969
        %v1998 = vsub.f32 %v1950, %v1971
        %v1999 = vsub.f32 %v1951, %v1973
        %v2000 = vsub.f32 %v1952, %v1975
        %v2001 = vsub.f32 %v1953, %v1977
        %v2002 = vsub.f32 %v1954, %v1979
        %v2003 = vsub.f32 %v1955, %v1981
        %v2004 = vsub.f32 %v1956, %v1983
        %v2005 = vsub.f32 %v1957, %v1985
        %v2006 = vsub.f32 %v1958, %v1987
        %v2007 = vsub.f32 %v1959, %v1989
        %v2008 = vsub.f32 %v1960, %v1991
        %v2009 = vsub.f32 %v1961, %v1993
        %v2010 = vmul.f32 %v1994, 1.442695
        %v2011 = vpow.pop %v2010
        %v2012 = vmul.f32 %v1995, 1.442695
        %v2013 = vpow.pop %v2012
        %v2014 = vmul.f32 %v1996, 1.442695
        %v2015 = vpow.pop %v2014
        %v2016 = vmul.f32 %v1997, 1.442695
        %v2017 = vpow.pop %v2016
        %v2018 = vmul.f32 %v1998, 1.442695
        %v2019 = vpow.pop %v2018
        %v2020 = vmul.f32 %v1999, 1.442695
        %v2021 = vpow.pop %v2020
        %v2022 = vmul.f32 %v2000, 1.442695
        %v2023 = vpow.pop %v2022
        %v2024 = vmul.f32 %v2001, 1.442695
        %v2025 = vpow.pop %v2024
        %v2026 = vmul.f32 %v2002, 1.442695
        %v2027 = vpow.pop %v2026
        %v2028 = vmul.f32 %v2003, 1.442695
        %v2029 = vpow.pop %v2028
        %v2030 = vmul.f32 %v2004, 1.442695
        %v2031 = vpow.pop %v2030
        %v2032 = vmul.f32 %v2005, 1.442695
        %v2033 = vpow.pop %v2032
        %v2034 = vmul.f32 %v2006, 1.442695
        %v2035 = vpow.pop %v2034
        %v2036 = vmul.f32 %v2007, 1.442695
        %v2037 = vpow.pop %v2036
        %v2038 = vmul.f32 %v2008, 1.442695
        %v2039 = vpow.pop %v2038
        %v2040 = vmul.f32 %v2009, 1.442695
        %v2041 = vpow.pop %v2040
        %2042 = vadd.xlane.f32.xlu0 %v2011
        %v2043 = vpop.xlane.xlu0 %2042
        %2044 = vadd.xlane.f32.xlu0 %v2013
        %v2045 = vpop.xlane.xlu0 %2044
        %2046 = vadd.xlane.f32.xlu0 %v2015
        %v2047 = vpop.xlane.xlu0 %2046
        %2048 = vadd.xlane.f32.xlu0 %v2017
        %v2049 = vpop.xlane.xlu0 %2048
        %2050 = vadd.xlane.f32.xlu0 %v2019
        %v2051 = vpop.xlane.xlu0 %2050
        %2052 = vadd.xlane.f32.xlu0 %v2021
        %v2053 = vpop.xlane.xlu0 %2052
        %2054 = vadd.xlane.f32.xlu0 %v2023
        %v2055 = vpop.xlane.xlu0 %2054
        %2056 = vadd.xlane.f32.xlu0 %v2025
        %v2057 = vpop.xlane.xlu0 %2056
        %2058 = vadd.xlane.f32.xlu0 %v2027
        %v2059 = vpop.xlane.xlu0 %2058
        %2060 = vadd.xlane.f32.xlu0 %v2029
        %v2061 = vpop.xlane.xlu0 %2060
        %2062 = vadd.xlane.f32.xlu0 %v2031
        %v2063 = vpop.xlane.xlu0 %2062
        %2064 = vadd.xlane.f32.xlu0 %v2033
        %v2065 = vpop.xlane.xlu0 %2064
        %2066 = vadd.xlane.f32.xlu0 %v2035
        %v2067 = vpop.xlane.xlu0 %2066
        %2068 = vadd.xlane.f32.xlu0 %v2037
        %v2069 = vpop.xlane.xlu0 %2068
        %2070 = vadd.xlane.f32.xlu0 %v2039
        %v2071 = vpop.xlane.xlu0 %2070
        %2072 = vadd.xlane.f32.xlu0 %v2041
        %v2073 = vpop.xlane.xlu0 %2072
        %v2074 = vrcp.pop %v2043
        %v2075 = vrcp.pop %v2045
        %v2076 = vrcp.pop %v2047
        %v2077 = vrcp.pop %v2049
        %v2078 = vrcp.pop %v2051
        %v2079 = vrcp.pop %v2053
        %v2080 = vrcp.pop %v2055
        %v2081 = vrcp.pop %v2057
        %v2082 = vrcp.pop %v2059
        %v2083 = vrcp.pop %v2061
        %v2084 = vrcp.pop %v2063
        %v2085 = vrcp.pop %v2065
        %v2086 = vrcp.pop %v2067
        %v2087 = vrcp.pop %v2069
        %v2088 = vrcp.pop %v2071
        %v2089 = vrcp.pop %v2073
        %v2090 = vmul.f32 %v2011, %v2074
        %v2091 = vmul.f32 %v2013, %v2075
        %v2092 = vmul.f32 %v2015, %v2076
        %v2093 = vmul.f32 %v2017, %v2077
        %v2094 = vmul.f32 %v2019, %v2078
        %v2095 = vmul.f32 %v2021, %v2079
        %v2096 = vmul.f32 %v2023, %v2080
        %v2097 = vmul.f32 %v2025, %v2081
        %v2098 = vmul.f32 %v2027, %v2082
        %v2099 = vmul.f32 %v2029, %v2083
        %v2100 = vmul.f32 %v2031, %v2084
        %v2101 = vmul.f32 %v2033, %v2085
        %v2102 = vmul.f32 %v2035, %v2086
        %v2103 = vmul.f32 %v2037, %v2087
        %v2104 = vmul.f32 %v2039, %v2088
        %v2105 = vmul.f32 %v2041, %v2089
        %v2106 = vpack.c.bf16 %v2091, %v2090
        %v2107 = vpack.c.bf16 %v2093, %v2092
        %v2108 = vpack.c.bf16 %v2095, %v2094
        %v2109 = vpack.c.bf16 %v2097, %v2096
        %v2110 = vpack.c.bf16 %v2099, %v2098
        %v2111 = vpack.c.bf16 %v2101, %v2100
        %v2112 = vpack.c.bf16 %v2103, %v2102
        %v2113 = vpack.c.bf16 %v2105, %v2104
        %2122 = vrot.lane.b32.xlu0 %v1310, 96
        %v2123 = vpop.permute.xlu0 %2122
        %2124 = vrot.lane.b32.xlu0 %v1311, 96
        %v2125 = vpop.permute.xlu0 %2124
        %2126 = vrot.lane.b32.xlu0 %v1312, 96
        %v2127 = vpop.permute.xlu0 %2126
        %2128 = vrot.lane.b32.xlu0 %v1313, 96
        %v2129 = vpop.permute.xlu0 %2128
        %2130 = vrot.lane.b32.xlu0 %v1314, 96
        %v2131 = vpop.permute.xlu0 %2130
        %2132 = vrot.lane.b32.xlu0 %v1315, 96
        %v2133 = vpop.permute.xlu0 %2132
        %2134 = vrot.lane.b32.xlu0 %v1316, 96
        %v2135 = vpop.permute.xlu0 %2134
        %2136 = vrot.lane.b32.xlu0 %v1317, 96
        %v2137 = vpop.permute.xlu0 %2136
        %2146 = vmatprep.subr.bf16.mxu0 0
        %2147 = vmatpush1.bf16.msra.mxu0 %v2137
        %2148 = vmatprep.subr.bf16.mxu0 0
        %2149 = vmatpush1.bf16.msra.mxu0 %v2135
        %2150 = vmatprep.subr.bf16.mxu0 0
        %2151 = vmatpush1.bf16.msra.mxu0 %v2133
        %2152 = vmatprep.subr.bf16.mxu0 0
        %2153 = vmatpush1.bf16.msra.mxu0 %v2131
        %2154 = vmatprep.subr.bf16.mxu0 0
        %2155 = vmatpush1.bf16.msra.mxu0 %v2129
        %2156 = vmatprep.subr.bf16.mxu0 0
        %2157 = vmatpush1.bf16.msra.mxu0 %v2127
        %2158 = vmatprep.subr.bf16.mxu0 0
        %2159 = vmatpush1.bf16.msra.mxu0 %v2125
        %2160 = vmatprep.subr.bf16.mxu0 0
        %2161 = vmatpush1.bf16.msra.mxu0 %v2123
        %2162 = vmatprep.subr.bf16.mxu0 0
        %2163 = vmatpush2.bf16.msra.mxu0 0
        %2164 = vmatprep.subr.bf16.mxu0 0
        %2165 = vmatpush2.bf16.msra.mxu0 0
        %2166 = vmatprep.subr.bf16.mxu0 0
        %2167 = vmatpush2.bf16.msra.mxu0 0
        %2168 = vmatprep.subr.bf16.mxu0 0
        %2169 = vmatpush2.bf16.msra.mxu0 0
        %2170 = vmatprep.subr.bf16.mxu0 0
        %2171 = vmatpush2.bf16.msra.mxu0 0
        %2172 = vmatprep.subr.bf16.mxu0 0
        %2173 = vmatpush2.bf16.msra.mxu0 0
        %2174 = vmatprep.subr.bf16.mxu0 0
        %2175 = vmatpush2.bf16.msra.mxu0 0
        %2176 = vmatprep.subr.bf16.mxu0 0
        %2177 = vmatpush2.bf16.msra.mxu0 0
        %2178 = vmatprep.mubr.bf16.mxu0 0
        %2179 = vmatmul.mubr.bf16.gmra.mxu0 %v2106
        %v2180 = vpop.f32.mrf.mxu0
        %v2181 = vadd.f32 0.0, %v2180
        %v2182 = vpop.f32.mrf.mxu0
        %v2183 = vpop.f32.mrf.mxu0
        %v2184 = vadd.f32 0.0, %v2183
        %v2185 = vpop.f32.mrf.mxu0
        %2186 = vmatprep.mubr.bf16.mxu0 0
        %2187 = vmatmul.mubr.bf16.gmra.mxu0 %v2107
        %v2188 = vpop.f32.mrf.mxu0
        %v2189 = vadd.f32 0.0, %v2188
        %v2190 = vpop.f32.mrf.mxu0
        %v2191 = vpop.f32.mrf.mxu0
        %v2192 = vadd.f32 0.0, %v2191
        %v2193 = vpop.f32.mrf.mxu0
        %2194 = vmatprep.mubr.bf16.mxu0 0
        %2195 = vmatmul.mubr.bf16.gmra.mxu0 %v2108
        %v2196 = vpop.f32.mrf.mxu0
        %v2197 = vadd.f32 0.0, %v2196
        %v2198 = vpop.f32.mrf.mxu0
        %v2199 = vpop.f32.mrf.mxu0
        %v2200 = vadd.f32 0.0, %v2199
        %v2201 = vpop.f32.mrf.mxu0
        %2202 = vmatprep.mubr.bf16.mxu0 0
        %2203 = vmatmul.mubr.bf16.gmra.mxu0 %v2109
        %v2204 = vpop.f32.mrf.mxu0
        %v2205 = vadd.f32 0.0, %v2204
        %v2206 = vpop.f32.mrf.mxu0
        %v2207 = vpop.f32.mrf.mxu0
        %v2208 = vadd.f32 0.0, %v2207
        %v2209 = vpop.f32.mrf.mxu0
        %2210 = vmatprep.mubr.bf16.mxu0 0
        %2211 = vmatmul.mubr.bf16.gmra.mxu0 %v2110
        %v2212 = vpop.f32.mrf.mxu0
        %v2213 = vadd.f32 0.0, %v2212
        %v2214 = vpop.f32.mrf.mxu0
        %v2215 = vpop.f32.mrf.mxu0
        %v2216 = vadd.f32 0.0, %v2215
        %v2217 = vpop.f32.mrf.mxu0
        %2218 = vmatprep.mubr.bf16.mxu0 0
        %2219 = vmatmul.mubr.bf16.gmra.mxu0 %v2111
        %v2220 = vpop.f32.mrf.mxu0
        %v2221 = vadd.f32 0.0, %v2220
        %v2222 = vpop.f32.mrf.mxu0
        %v2223 = vpop.f32.mrf.mxu0
        %v2224 = vadd.f32 0.0, %v2223
        %v2225 = vpop.f32.mrf.mxu0
        %2226 = vmatprep.mubr.bf16.mxu0 0
        %2227 = vmatmul.mubr.bf16.gmra.mxu0 %v2112
        %v2228 = vpop.f32.mrf.mxu0
        %v2229 = vadd.f32 0.0, %v2228
        %v2230 = vpop.f32.mrf.mxu0
        %v2231 = vpop.f32.mrf.mxu0
        %v2232 = vadd.f32 0.0, %v2231
        %v2233 = vpop.f32.mrf.mxu0
        %2234 = vmatprep.mubr.bf16.mxu0 0
        %2235 = vmatmul.mubr.bf16.gmra.mxu0 %v2113
        %v2236 = vpop.f32.mrf.mxu0
        %v2237 = vadd.f32 0.0, %v2236
        %v2238 = vpop.f32.mrf.mxu0
        %v2239 = vpop.f32.mrf.mxu0
        %v2240 = vadd.f32 0.0, %v2239
        %v2241 = vpop.f32.mrf.mxu0
        %2242 = vdwg.mxu0
        %v2243 = vpack.c.bf16 %v2184, %v2181
        %v2244 = vpack.c.bf16 %v2192, %v2189
        %v2245 = vpack.c.bf16 %v2200, %v2197
        %v2246 = vpack.c.bf16 %v2208, %v2205
        %v2247 = vpack.c.bf16 %v2216, %v2213
        %v2248 = vpack.c.bf16 %v2224, %v2221
        %v2249 = vpack.c.bf16 %v2232, %v2229
        %v2250 = vpack.c.bf16 %v2240, %v2237
        %v2255 = vunpack.c.l.b16 %v1322
        %v2256 = vunpack.c.l.b16 %v1323
        %v2257 = vunpack.c.l.b16 %v1324
        %v2258 = vunpack.c.l.b16 %v1325
        %v2259 = vpack.c.b16 %v2256, %v2255
        %v2260 = vpack.c.b16 %v2258, %v2257
        %v2264 = vsel %vm1334, %v2243, 0
        %v2267 = vsel %vm1334, %v2244, 0
        %v2270 = vsel %vm1334, %v2245, 0
        %v2273 = vsel %vm1334, %v2246, 0
        %v2276 = vsel %vm1334, %v2247, 0
        %v2279 = vsel %vm1334, %v2248, 0
        %v2282 = vsel %vm1334, %v2249, 0
        %v2285 = vsel %vm1334, %v2250, 0
        %2287 = vmatprep.subr.bf16.mxu0 0
        %2288 = vmatpush1.bf16.msra.mxu0 0
        %2289 = vmatprep.subr.bf16.mxu0 0
        %2290 = vmatpush1.bf16.msra.mxu0 0
        %2291 = vmatprep.subr.bf16.mxu0 0
        %2292 = vmatpush1.bf16.msra.mxu0 0
        %2293 = vmatprep.subr.bf16.mxu0 0
        %2294 = vmatpush1.bf16.msra.mxu0 0
        %2295 = vmatprep.subr.bf16.mxu0 0
        %2296 = vmatpush1.bf16.msra.mxu0 0
        %2297 = vmatprep.subr.bf16.mxu0 0
        %2298 = vmatpush1.bf16.msra.mxu0 0
        %2299 = vmatprep.subr.bf16.mxu0 0
        %2300 = vmatpush1.bf16.msra.mxu0 %v2260
        %2301 = vmatprep.subr.bf16.mxu0 0
        %2302 = vmatpush1.bf16.msra.mxu0 %v2259
        %2303 = vmatprep.subr.bf16.mxu0 0
        %2304 = vmatpush2.bf16.msra.mxu0 0
        %2305 = vmatprep.subr.bf16.mxu0 0
        %2306 = vmatpush2.bf16.msra.mxu0 0
        %2307 = vmatprep.subr.bf16.mxu0 0
        %2308 = vmatpush2.bf16.msra.mxu0 0
        %2309 = vmatprep.subr.bf16.mxu0 0
        %2310 = vmatpush2.bf16.msra.mxu0 0
        %2311 = vmatprep.subr.bf16.mxu0 0
        %2312 = vmatpush2.bf16.msra.mxu0 0
        %2313 = vmatprep.subr.bf16.mxu0 0
        %2314 = vmatpush2.bf16.msra.mxu0 0
        %2315 = vmatprep.subr.bf16.mxu0 0
        %2316 = vmatpush2.bf16.msra.mxu0 0
        %2317 = vmatprep.subr.bf16.mxu0 0
        %2318 = vmatpush2.bf16.msra.mxu0 0
        %2319 = vmatprep.mubr.bf16.mxu0 0
        %2320 = vmatmul.mubr.bf16.gmra.mxu0 %v2264
        %v2321 = vpop.f32.mrf.mxu0
        %v2322 = vadd.f32 0.0, %v2321
        %v2323 = vpop.f32.mrf.mxu0
        %v2324 = vpop.f32.mrf.mxu0
        %v2325 = vadd.f32 0.0, %v2324
        %v2326 = vpop.f32.mrf.mxu0
        %2327 = vmatprep.mubr.bf16.mxu0 0
        %2328 = vmatmul.mubr.bf16.gmra.mxu0 %v2267
        %v2329 = vpop.f32.mrf.mxu0
        %v2330 = vadd.f32 0.0, %v2329
        %v2331 = vpop.f32.mrf.mxu0
        %v2332 = vpop.f32.mrf.mxu0
        %v2333 = vadd.f32 0.0, %v2332
        %v2334 = vpop.f32.mrf.mxu0
        %2335 = vmatprep.mubr.bf16.mxu0 0
        %2336 = vmatmul.mubr.bf16.gmra.mxu0 %v2270
        %v2337 = vpop.f32.mrf.mxu0
        %v2338 = vadd.f32 0.0, %v2337
        %v2339 = vpop.f32.mrf.mxu0
        %v2340 = vpop.f32.mrf.mxu0
        %v2341 = vadd.f32 0.0, %v2340
        %v2342 = vpop.f32.mrf.mxu0
        %2343 = vmatprep.mubr.bf16.mxu0 0
        %2344 = vmatmul.mubr.bf16.gmra.mxu0 %v2273
        %v2345 = vpop.f32.mrf.mxu0
        %v2346 = vadd.f32 0.0, %v2345
        %v2347 = vpop.f32.mrf.mxu0
        %v2348 = vpop.f32.mrf.mxu0
        %v2349 = vadd.f32 0.0, %v2348
        %v2350 = vpop.f32.mrf.mxu0
        %2351 = vmatprep.mubr.bf16.mxu0 0
        %2352 = vmatmul.mubr.bf16.gmra.mxu0 %v2276
        %v2353 = vpop.f32.mrf.mxu0
        %v2354 = vadd.f32 0.0, %v2353
        %v2355 = vpop.f32.mrf.mxu0
        %v2356 = vpop.f32.mrf.mxu0
        %v2357 = vadd.f32 0.0, %v2356
        %v2358 = vpop.f32.mrf.mxu0
        %2359 = vmatprep.mubr.bf16.mxu0 0
        %2360 = vmatmul.mubr.bf16.gmra.mxu0 %v2279
        %v2361 = vpop.f32.mrf.mxu0
        %v2362 = vadd.f32 0.0, %v2361
        %v2363 = vpop.f32.mrf.mxu0
        %v2364 = vpop.f32.mrf.mxu0
        %v2365 = vadd.f32 0.0, %v2364
        %v2366 = vpop.f32.mrf.mxu0
        %2367 = vmatprep.mubr.bf16.mxu0 0
        %2368 = vmatmul.mubr.bf16.gmra.mxu0 %v2282
        %v2369 = vpop.f32.mrf.mxu0
        %v2370 = vadd.f32 0.0, %v2369
        %v2371 = vpop.f32.mrf.mxu0
        %v2372 = vpop.f32.mrf.mxu0
        %v2373 = vadd.f32 0.0, %v2372
        %v2374 = vpop.f32.mrf.mxu0
        %2375 = vmatprep.mubr.bf16.mxu0 0
        %2376 = vmatmul.mubr.bf16.gmra.mxu0 %v2285
        %v2377 = vpop.f32.mrf.mxu0
        %v2378 = vadd.f32 0.0, %v2377
        %v2379 = vpop.f32.mrf.mxu0
        %v2380 = vpop.f32.mrf.mxu0
        %v2381 = vadd.f32 0.0, %v2380
        %v2382 = vpop.f32.mrf.mxu0
        %2383 = vdwg.mxu0
        %v2388 = vunpack.c.l.b16 %v1318
        %v2389 = vunpack.c.l.b16 %v1319
        %v2390 = vunpack.c.l.b16 %v1320
        %v2391 = vunpack.c.l.b16 %v1321
        %v2392 = vpack.c.b16 %v2389, %v2388
        %v2393 = vpack.c.b16 %v2391, %v2390
        %v2397 = vsel %vm1334, %v1745, 0
        %v2400 = vsel %vm1334, %v1746, 0
        %v2403 = vsel %vm1334, %v1747, 0
        %v2406 = vsel %vm1334, %v1748, 0
        %v2409 = vsel %vm1334, %v1749, 0
        %v2412 = vsel %vm1334, %v1750, 0
        %v2415 = vsel %vm1334, %v1751, 0
        %v2418 = vsel %vm1334, %v1752, 0
        %2420 = vmatprep.subr.bf16.mxu0 0
        %2421 = vmatpush1.bf16.msra.mxu0 0
        %2422 = vmatprep.subr.bf16.mxu0 0
        %2423 = vmatpush1.bf16.msra.mxu0 0
        %2424 = vmatprep.subr.bf16.mxu0 0
        %2425 = vmatpush1.bf16.msra.mxu0 0
        %2426 = vmatprep.subr.bf16.mxu0 0
        %2427 = vmatpush1.bf16.msra.mxu0 0
        %2428 = vmatprep.subr.bf16.mxu0 0
        %2429 = vmatpush1.bf16.msra.mxu0 0
        %2430 = vmatprep.subr.bf16.mxu0 0
        %2431 = vmatpush1.bf16.msra.mxu0 0
        %2432 = vmatprep.subr.bf16.mxu0 0
        %2433 = vmatpush1.bf16.msra.mxu0 %v2393
        %2434 = vmatprep.subr.bf16.mxu0 0
        %2435 = vmatpush1.bf16.msra.mxu0 %v2392
        %2436 = vmatprep.subr.bf16.mxu0 0
        %2437 = vmatpush2.bf16.msra.mxu0 0
        %2438 = vmatprep.subr.bf16.mxu0 0
        %2439 = vmatpush2.bf16.msra.mxu0 0
        %2440 = vmatprep.subr.bf16.mxu0 0
        %2441 = vmatpush2.bf16.msra.mxu0 0
        %2442 = vmatprep.subr.bf16.mxu0 0
        %2443 = vmatpush2.bf16.msra.mxu0 0
        %2444 = vmatprep.subr.bf16.mxu0 0
        %2445 = vmatpush2.bf16.msra.mxu0 0
        %2446 = vmatprep.subr.bf16.mxu0 0
        %2447 = vmatpush2.bf16.msra.mxu0 0
        %2448 = vmatprep.subr.bf16.mxu0 0
        %2449 = vmatpush2.bf16.msra.mxu0 0
        %2450 = vmatprep.subr.bf16.mxu0 0
        %2451 = vmatpush2.bf16.msra.mxu0 0
        %2452 = vmatprep.mubr.bf16.mxu0 0
        %2453 = vmatmul.mubr.bf16.gmra.mxu0 %v2397
        %v2454 = vpop.f32.mrf.mxu0
        %v2455 = vadd.f32 %v2322, %v2454
        %v2456 = vpop.f32.mrf.mxu0
        %v2457 = vpop.f32.mrf.mxu0
        %v2458 = vadd.f32 %v2325, %v2457
        %v2459 = vpop.f32.mrf.mxu0
        %2460 = vmatprep.mubr.bf16.mxu0 0
        %2461 = vmatmul.mubr.bf16.gmra.mxu0 %v2400
        %v2462 = vpop.f32.mrf.mxu0
        %v2463 = vadd.f32 %v2330, %v2462
        %v2464 = vpop.f32.mrf.mxu0
        %v2465 = vpop.f32.mrf.mxu0
        %v2466 = vadd.f32 %v2333, %v2465
        %v2467 = vpop.f32.mrf.mxu0
        %2468 = vmatprep.mubr.bf16.mxu0 0
        %2469 = vmatmul.mubr.bf16.gmra.mxu0 %v2403
        %v2470 = vpop.f32.mrf.mxu0
        %v2471 = vadd.f32 %v2338, %v2470
        %v2472 = vpop.f32.mrf.mxu0
        %v2473 = vpop.f32.mrf.mxu0
        %v2474 = vadd.f32 %v2341, %v2473
        %v2475 = vpop.f32.mrf.mxu0
        %2476 = vmatprep.mubr.bf16.mxu0 0
        %2477 = vmatmul.mubr.bf16.gmra.mxu0 %v2406
        %v2478 = vpop.f32.mrf.mxu0
        %v2479 = vadd.f32 %v2346, %v2478
        %v2480 = vpop.f32.mrf.mxu0
        %v2481 = vpop.f32.mrf.mxu0
        %v2482 = vadd.f32 %v2349, %v2481
        %v2483 = vpop.f32.mrf.mxu0
        %2484 = vmatprep.mubr.bf16.mxu0 0
        %2485 = vmatmul.mubr.bf16.gmra.mxu0 %v2409
        %v2486 = vpop.f32.mrf.mxu0
        %v2487 = vadd.f32 %v2354, %v2486
        %v2488 = vpop.f32.mrf.mxu0
        %v2489 = vpop.f32.mrf.mxu0
        %v2490 = vadd.f32 %v2357, %v2489
        %v2491 = vpop.f32.mrf.mxu0
        %2492 = vmatprep.mubr.bf16.mxu0 0
        %2493 = vmatmul.mubr.bf16.gmra.mxu0 %v2412
        %v2494 = vpop.f32.mrf.mxu0
        %v2495 = vadd.f32 %v2362, %v2494
        %v2496 = vpop.f32.mrf.mxu0
        %v2497 = vpop.f32.mrf.mxu0
        %v2498 = vadd.f32 %v2365, %v2497
        %v2499 = vpop.f32.mrf.mxu0
        %2500 = vmatprep.mubr.bf16.mxu0 0
        %2501 = vmatmul.mubr.bf16.gmra.mxu0 %v2415
        %v2502 = vpop.f32.mrf.mxu0
        %v2503 = vadd.f32 %v2370, %v2502
        %v2504 = vpop.f32.mrf.mxu0
        %v2505 = vpop.f32.mrf.mxu0
        %v2506 = vadd.f32 %v2373, %v2505
        %v2507 = vpop.f32.mrf.mxu0
        %2508 = vmatprep.mubr.bf16.mxu0 0
        %2509 = vmatmul.mubr.bf16.gmra.mxu0 %v2418
        %v2510 = vpop.f32.mrf.mxu0
        %v2511 = vadd.f32 %v2378, %v2510
        %v2512 = vpop.f32.mrf.mxu0
        %v2513 = vpop.f32.mrf.mxu0
        %v2514 = vadd.f32 %v2381, %v2513
        %v2515 = vpop.f32.mrf.mxu0
        %2516 = vdwg.mxu0
        %2517 = vrot.lane.b32.xlu0 %v1294, 64
        %v2518 = vpop.permute.xlu0 %2517
        %2519 = vrot.lane.b32.xlu0 %v1295, 64
        %v2520 = vpop.permute.xlu0 %2519
        %2521 = vrot.lane.b32.xlu0 %v1296, 64
        %v2522 = vpop.permute.xlu0 %2521
        %2523 = vrot.lane.b32.xlu0 %v1297, 64
        %v2524 = vpop.permute.xlu0 %2523
        %2525 = vrot.lane.b32.xlu0 %v1298, 64
        %v2526 = vpop.permute.xlu0 %2525
        %2527 = vrot.lane.b32.xlu0 %v1299, 64
        %v2528 = vpop.permute.xlu0 %2527
        %2529 = vrot.lane.b32.xlu0 %v1300, 64
        %v2530 = vpop.permute.xlu0 %2529
        %2531 = vrot.lane.b32.xlu0 %v1301, 64
        %v2532 = vpop.permute.xlu0 %2531
        %2533 = vrot.lane.b32.xlu0 %v1302, 64
        %v2534 = vpop.permute.xlu0 %2533
        %2535 = vrot.lane.b32.xlu0 %v1303, 64
        %v2536 = vpop.permute.xlu0 %2535
        %2537 = vrot.lane.b32.xlu0 %v1304, 64
        %v2538 = vpop.permute.xlu0 %2537
        %2539 = vrot.lane.b32.xlu0 %v1305, 64
        %v2540 = vpop.permute.xlu0 %2539
        %2541 = vrot.lane.b32.xlu0 %v1306, 64
        %v2542 = vpop.permute.xlu0 %2541
        %2543 = vrot.lane.b32.xlu0 %v1307, 64
        %v2544 = vpop.permute.xlu0 %2543
        %2545 = vrot.lane.b32.xlu0 %v1308, 64
        %v2546 = vpop.permute.xlu0 %2545
        %2547 = vrot.lane.b32.xlu0 %v1309, 64
        %v2548 = vpop.permute.xlu0 %2547
        %v2550 = vsel %vm1334, %v2518, 0
        %v2553 = vsel %vm1334, %v2520, 0
        %v2556 = vsel %vm1334, %v2522, 0
        %v2559 = vsel %vm1334, %v2524, 0
        %v2562 = vsel %vm1334, %v2526, 0
        %v2565 = vsel %vm1334, %v2528, 0
        %v2568 = vsel %vm1334, %v2530, 0
        %v2571 = vsel %vm1334, %v2532, 0
        %v2574 = vsel %vm1334, %v2534, 0
        %v2577 = vsel %vm1334, %v2536, 0
        %v2580 = vsel %vm1334, %v2538, 0
        %v2583 = vsel %vm1334, %v2540, 0
        %v2586 = vsel %vm1334, %v2542, 0
        %v2589 = vsel %vm1334, %v2544, 0
        %v2592 = vsel %vm1334, %v2546, 0
        %v2595 = vsel %vm1334, %v2548, 0
        %2597 = vmatprep.subr.bf16.mxu0 0
        %2598 = vmatpush1.bf16.xpose.msra.mxu0 %v2595
        %2599 = vmatprep.subr.bf16.mxu0 0
        %2600 = vmatpush1.bf16.xpose.msra.mxu0 %v2592
        %2601 = vmatprep.subr.bf16.mxu0 0
        %2602 = vmatpush1.bf16.xpose.msra.mxu0 %v2589
        %2603 = vmatprep.subr.bf16.mxu0 0
        %2604 = vmatpush1.bf16.xpose.msra.mxu0 %v2586
        %2605 = vmatprep.subr.bf16.mxu0 0
        %2606 = vmatpush1.bf16.xpose.msra.mxu0 %v2583
        %2607 = vmatprep.subr.bf16.mxu0 0
        %2608 = vmatpush1.bf16.xpose.msra.mxu0 %v2580
        %2609 = vmatprep.subr.bf16.mxu0 0
        %2610 = vmatpush1.bf16.xpose.msra.mxu0 %v2577
        %2611 = vmatprep.subr.bf16.mxu0 0
        %2612 = vmatpush1.bf16.xpose.msra.mxu0 %v2574
        %2613 = vmatprep.subr.bf16.mxu0 0
        %2614 = vmatpush2.bf16.xpose.msra.mxu0 0
        %2615 = vmatprep.subr.bf16.mxu0 0
        %2616 = vmatpush2.bf16.xpose.msra.mxu0 0
        %2617 = vmatprep.subr.bf16.mxu0 0
        %2618 = vmatpush2.bf16.xpose.msra.mxu0 0
        %2619 = vmatprep.subr.bf16.mxu0 0
        %2620 = vmatpush2.bf16.xpose.msra.mxu0 0
        %2621 = vmatprep.subr.bf16.mxu0 0
        %2622 = vmatpush2.bf16.xpose.msra.mxu0 0
        %2623 = vmatprep.subr.bf16.mxu0 0
        %2624 = vmatpush2.bf16.xpose.msra.mxu0 0
        %2625 = vmatprep.subr.bf16.mxu0 0
        %2626 = vmatpush2.bf16.xpose.msra.mxu0 0
        %2627 = vmatprep.subr.bf16.mxu0 0
        %2628 = vmatpush2.bf16.xpose.msra.mxu0 0
        %2629 = vmatprep.mubr.bf16.mxu0 0
        %2630 = vmatmul.mubr.bf16.gmra.mxu0 %v2550
        %v2631 = vpop.f32.mrf.mxu0
        %v2632 = vadd.f32 0.0, %v2631
        %v2633 = vpop.f32.mrf.mxu0
        %v2634 = vpop.f32.mrf.mxu0
        %v2635 = vadd.f32 0.0, %v2634
        %v2636 = vpop.f32.mrf.mxu0
        %2637 = vmatprep.mubr.bf16.mxu0 0
        %2638 = vmatmul.mubr.bf16.gmra.mxu0 %v2553
        %v2639 = vpop.f32.mrf.mxu0
        %v2640 = vadd.f32 0.0, %v2639
        %v2641 = vpop.f32.mrf.mxu0
        %v2642 = vpop.f32.mrf.mxu0
        %v2643 = vadd.f32 0.0, %v2642
        %v2644 = vpop.f32.mrf.mxu0
        %2645 = vmatprep.mubr.bf16.mxu0 0
        %2646 = vmatmul.mubr.bf16.gmra.mxu0 %v2556
        %v2647 = vpop.f32.mrf.mxu0
        %v2648 = vadd.f32 0.0, %v2647
        %v2649 = vpop.f32.mrf.mxu0
        %v2650 = vpop.f32.mrf.mxu0
        %v2651 = vadd.f32 0.0, %v2650
        %v2652 = vpop.f32.mrf.mxu0
        %2653 = vmatprep.mubr.bf16.mxu0 0
        %2654 = vmatmul.mubr.bf16.gmra.mxu0 %v2559
        %v2655 = vpop.f32.mrf.mxu0
        %v2656 = vadd.f32 0.0, %v2655
        %v2657 = vpop.f32.mrf.mxu0
        %v2658 = vpop.f32.mrf.mxu0
        %v2659 = vadd.f32 0.0, %v2658
        %v2660 = vpop.f32.mrf.mxu0
        %2661 = vmatprep.mubr.bf16.mxu0 0
        %2662 = vmatmul.mubr.bf16.gmra.mxu0 %v2562
        %v2663 = vpop.f32.mrf.mxu0
        %v2664 = vadd.f32 0.0, %v2663
        %v2665 = vpop.f32.mrf.mxu0
        %v2666 = vpop.f32.mrf.mxu0
        %v2667 = vadd.f32 0.0, %v2666
        %v2668 = vpop.f32.mrf.mxu0
        %2669 = vmatprep.mubr.bf16.mxu0 0
        %2670 = vmatmul.mubr.bf16.gmra.mxu0 %v2565
        %v2671 = vpop.f32.mrf.mxu0
        %v2672 = vadd.f32 0.0, %v2671
        %v2673 = vpop.f32.mrf.mxu0
        %v2674 = vpop.f32.mrf.mxu0
        %v2675 = vadd.f32 0.0, %v2674
        %v2676 = vpop.f32.mrf.mxu0
        %2677 = vmatprep.mubr.bf16.mxu0 0
        %2678 = vmatmul.mubr.bf16.gmra.mxu0 %v2568
        %v2679 = vpop.f32.mrf.mxu0
        %v2680 = vadd.f32 0.0, %v2679
        %v2681 = vpop.f32.mrf.mxu0
        %v2682 = vpop.f32.mrf.mxu0
        %v2683 = vadd.f32 0.0, %v2682
        %v2684 = vpop.f32.mrf.mxu0
        %2685 = vmatprep.mubr.bf16.mxu0 0
        %2686 = vmatmul.mubr.bf16.gmra.mxu0 %v2571
        %v2687 = vpop.f32.mrf.mxu0
        %v2688 = vadd.f32 0.0, %v2687
        %v2689 = vpop.f32.mrf.mxu0
        %v2690 = vpop.f32.mrf.mxu0
        %v2691 = vadd.f32 0.0, %v2690
        %v2692 = vpop.f32.mrf.mxu0
        %2693 = vdwg.mxu0
        %v2694 = vmul.f32 %v2632, 0.17677669
        %v2695 = vmul.f32 %v2635, 0.17677669
        %v2696 = vmul.f32 %v2640, 0.17677669
        %v2697 = vmul.f32 %v2643, 0.17677669
        %v2698 = vmul.f32 %v2648, 0.17677669
        %v2699 = vmul.f32 %v2651, 0.17677669
        %v2700 = vmul.f32 %v2656, 0.17677669
        %v2701 = vmul.f32 %v2659, 0.17677669
        %v2702 = vmul.f32 %v2664, 0.17677669
        %v2703 = vmul.f32 %v2667, 0.17677669
        %v2704 = vmul.f32 %v2672, 0.17677669
        %v2705 = vmul.f32 %v2675, 0.17677669
        %v2706 = vmul.f32 %v2680, 0.17677669
        %v2707 = vmul.f32 %v2683, 0.17677669
        %v2708 = vmul.f32 %v2688, 0.17677669
        %v2709 = vmul.f32 %v2691, 0.17677669
        %2710 = vmax.xlane.f32.xlu0 %v2694
        %v2711 = vpop.xlane.xlu0 %2710
        %2712 = vmax.xlane.f32.xlu0 %v2695
        %v2713 = vpop.xlane.xlu0 %2712
        %2714 = vmax.xlane.f32.xlu0 %v2696
        %v2715 = vpop.xlane.xlu0 %2714
        %2716 = vmax.xlane.f32.xlu0 %v2697
        %v2717 = vpop.xlane.xlu0 %2716
        %2718 = vmax.xlane.f32.xlu0 %v2698
        %v2719 = vpop.xlane.xlu0 %2718
        %2720 = vmax.xlane.f32.xlu0 %v2699
        %v2721 = vpop.xlane.xlu0 %2720
        %2722 = vmax.xlane.f32.xlu0 %v2700
        %v2723 = vpop.xlane.xlu0 %2722
        %2724 = vmax.xlane.f32.xlu0 %v2701
        %v2725 = vpop.xlane.xlu0 %2724
        %2726 = vmax.xlane.f32.xlu0 %v2702
        %v2727 = vpop.xlane.xlu0 %2726
        %2728 = vmax.xlane.f32.xlu0 %v2703
        %v2729 = vpop.xlane.xlu0 %2728
        %2730 = vmax.xlane.f32.xlu0 %v2704
        %v2731 = vpop.xlane.xlu0 %2730
        %2732 = vmax.xlane.f32.xlu0 %v2705
        %v2733 = vpop.xlane.xlu0 %2732
        %2734 = vmax.xlane.f32.xlu0 %v2706
        %v2735 = vpop.xlane.xlu0 %2734
        %2736 = vmax.xlane.f32.xlu0 %v2707
        %v2737 = vpop.xlane.xlu0 %2736
        %2738 = vmax.xlane.f32.xlu0 %v2708
        %v2739 = vpop.xlane.xlu0 %2738
        %2740 = vmax.xlane.f32.xlu0 %v2709
        %v2741 = vpop.xlane.xlu0 %2740
        %v2742 = vsub.f32 %v2694, %v2711
        %v2743 = vsub.f32 %v2695, %v2713
        %v2744 = vsub.f32 %v2696, %v2715
        %v2745 = vsub.f32 %v2697, %v2717
        %v2746 = vsub.f32 %v2698, %v2719
        %v2747 = vsub.f32 %v2699, %v2721
        %v2748 = vsub.f32 %v2700, %v2723
        %v2749 = vsub.f32 %v2701, %v2725
        %v2750 = vsub.f32 %v2702, %v2727
        %v2751 = vsub.f32 %v2703, %v2729
        %v2752 = vsub.f32 %v2704, %v2731
        %v2753 = vsub.f32 %v2705, %v2733
        %v2754 = vsub.f32 %v2706, %v2735
        %v2755 = vsub.f32 %v2707, %v2737
        %v2756 = vsub.f32 %v2708, %v2739
        %v2757 = vsub.f32 %v2709, %v2741
        %v2758 = vmul.f32 %v2742, 1.442695
        %v2759 = vpow.pop %v2758
        %v2760 = vmul.f32 %v2743, 1.442695
        %v2761 = vpow.pop %v2760
        %v2762 = vmul.f32 %v2744, 1.442695
        %v2763 = vpow.pop %v2762
        %v2764 = vmul.f32 %v2745, 1.442695
        %v2765 = vpow.pop %v2764
        %v2766 = vmul.f32 %v2746, 1.442695
        %v2767 = vpow.pop %v2766
        %v2768 = vmul.f32 %v2747, 1.442695
        %v2769 = vpow.pop %v2768
        %v2770 = vmul.f32 %v2748, 1.442695
        %v2771 = vpow.pop %v2770
        %v2772 = vmul.f32 %v2749, 1.442695
        %v2773 = vpow.pop %v2772
        %v2774 = vmul.f32 %v2750, 1.442695
        %v2775 = vpow.pop %v2774
        %v2776 = vmul.f32 %v2751, 1.442695
        %v2777 = vpow.pop %v2776
        %v2778 = vmul.f32 %v2752, 1.442695
        %v2779 = vpow.pop %v2778
        %v2780 = vmul.f32 %v2753, 1.442695
        %v2781 = vpow.pop %v2780
        %v2782 = vmul.f32 %v2754, 1.442695
        %v2783 = vpow.pop %v2782
        %v2784 = vmul.f32 %v2755, 1.442695
        %v2785 = vpow.pop %v2784
        %v2786 = vmul.f32 %v2756, 1.442695
        %v2787 = vpow.pop %v2786
        %v2788 = vmul.f32 %v2757, 1.442695
        %v2789 = vpow.pop %v2788
        %2790 = vadd.xlane.f32.xlu0 %v2759
        %v2791 = vpop.xlane.xlu0 %2790
        %2792 = vadd.xlane.f32.xlu0 %v2761
        %v2793 = vpop.xlane.xlu0 %2792
        %2794 = vadd.xlane.f32.xlu0 %v2763
        %v2795 = vpop.xlane.xlu0 %2794
        %2796 = vadd.xlane.f32.xlu0 %v2765
        %v2797 = vpop.xlane.xlu0 %2796
        %2798 = vadd.xlane.f32.xlu0 %v2767
        %v2799 = vpop.xlane.xlu0 %2798
        %2800 = vadd.xlane.f32.xlu0 %v2769
        %v2801 = vpop.xlane.xlu0 %2800
        %2802 = vadd.xlane.f32.xlu0 %v2771
        %v2803 = vpop.xlane.xlu0 %2802
        %2804 = vadd.xlane.f32.xlu0 %v2773
        %v2805 = vpop.xlane.xlu0 %2804
        %2806 = vadd.xlane.f32.xlu0 %v2775
        %v2807 = vpop.xlane.xlu0 %2806
        %2808 = vadd.xlane.f32.xlu0 %v2777
        %v2809 = vpop.xlane.xlu0 %2808
        %2810 = vadd.xlane.f32.xlu0 %v2779
        %v2811 = vpop.xlane.xlu0 %2810
        %2812 = vadd.xlane.f32.xlu0 %v2781
        %v2813 = vpop.xlane.xlu0 %2812
        %2814 = vadd.xlane.f32.xlu0 %v2783
        %v2815 = vpop.xlane.xlu0 %2814
        %2816 = vadd.xlane.f32.xlu0 %v2785
        %v2817 = vpop.xlane.xlu0 %2816
        %2818 = vadd.xlane.f32.xlu0 %v2787
        %v2819 = vpop.xlane.xlu0 %2818
        %2820 = vadd.xlane.f32.xlu0 %v2789
        %v2821 = vpop.xlane.xlu0 %2820
        %v2822 = vrcp.pop %v2791
        %v2823 = vrcp.pop %v2793
        %v2824 = vrcp.pop %v2795
        %v2825 = vrcp.pop %v2797
        %v2826 = vrcp.pop %v2799
        %v2827 = vrcp.pop %v2801
        %v2828 = vrcp.pop %v2803
        %v2829 = vrcp.pop %v2805
        %v2830 = vrcp.pop %v2807
        %v2831 = vrcp.pop %v2809
        %v2832 = vrcp.pop %v2811
        %v2833 = vrcp.pop %v2813
        %v2834 = vrcp.pop %v2815
        %v2835 = vrcp.pop %v2817
        %v2836 = vrcp.pop %v2819
        %v2837 = vrcp.pop %v2821
        %v2838 = vmul.f32 %v2759, %v2822
        %v2839 = vmul.f32 %v2761, %v2823
        %v2840 = vmul.f32 %v2763, %v2824
        %v2841 = vmul.f32 %v2765, %v2825
        %v2842 = vmul.f32 %v2767, %v2826
        %v2843 = vmul.f32 %v2769, %v2827
        %v2844 = vmul.f32 %v2771, %v2828
        %v2845 = vmul.f32 %v2773, %v2829
        %v2846 = vmul.f32 %v2775, %v2830
        %v2847 = vmul.f32 %v2777, %v2831
        %v2848 = vmul.f32 %v2779, %v2832
        %v2849 = vmul.f32 %v2781, %v2833
        %v2850 = vmul.f32 %v2783, %v2834
        %v2851 = vmul.f32 %v2785, %v2835
        %v2852 = vmul.f32 %v2787, %v2836
        %v2853 = vmul.f32 %v2789, %v2837
        %v2854 = vpack.c.bf16 %v2839, %v2838
        %v2855 = vpack.c.bf16 %v2841, %v2840
        %v2856 = vpack.c.bf16 %v2843, %v2842
        %v2857 = vpack.c.bf16 %v2845, %v2844
        %v2858 = vpack.c.bf16 %v2847, %v2846
        %v2859 = vpack.c.bf16 %v2849, %v2848
        %v2860 = vpack.c.bf16 %v2851, %v2850
        %v2861 = vpack.c.bf16 %v2853, %v2852
        %2862 = vrot.lane.b32.xlu0 %v1310, 64
        %v2863 = vpop.permute.xlu0 %2862
        %2864 = vrot.lane.b32.xlu0 %v1311, 64
        %v2865 = vpop.permute.xlu0 %2864
        %2866 = vrot.lane.b32.xlu0 %v1312, 64
        %v2867 = vpop.permute.xlu0 %2866
        %2868 = vrot.lane.b32.xlu0 %v1313, 64
        %v2869 = vpop.permute.xlu0 %2868
        %2870 = vrot.lane.b32.xlu0 %v1314, 64
        %v2871 = vpop.permute.xlu0 %2870
        %2872 = vrot.lane.b32.xlu0 %v1315, 64
        %v2873 = vpop.permute.xlu0 %2872
        %2874 = vrot.lane.b32.xlu0 %v1316, 64
        %v2875 = vpop.permute.xlu0 %2874
        %2876 = vrot.lane.b32.xlu0 %v1317, 64
        %v2877 = vpop.permute.xlu0 %2876
        %2886 = vmatprep.subr.bf16.mxu0 0
        %2887 = vmatpush1.bf16.msra.mxu0 %v2877
        %2888 = vmatprep.subr.bf16.mxu0 0
        %2889 = vmatpush1.bf16.msra.mxu0 %v2875
        %2890 = vmatprep.subr.bf16.mxu0 0
        %2891 = vmatpush1.bf16.msra.mxu0 %v2873
        %2892 = vmatprep.subr.bf16.mxu0 0
        %2893 = vmatpush1.bf16.msra.mxu0 %v2871
        %2894 = vmatprep.subr.bf16.mxu0 0
        %2895 = vmatpush1.bf16.msra.mxu0 %v2869
        %2896 = vmatprep.subr.bf16.mxu0 0
        %2897 = vmatpush1.bf16.msra.mxu0 %v2867
        %2898 = vmatprep.subr.bf16.mxu0 0
        %2899 = vmatpush1.bf16.msra.mxu0 %v2865
        %2900 = vmatprep.subr.bf16.mxu0 0
        %2901 = vmatpush1.bf16.msra.mxu0 %v2863
        %2902 = vmatprep.subr.bf16.mxu0 0
        %2903 = vmatpush2.bf16.msra.mxu0 0
        %2904 = vmatprep.subr.bf16.mxu0 0
        %2905 = vmatpush2.bf16.msra.mxu0 0
        %2906 = vmatprep.subr.bf16.mxu0 0
        %2907 = vmatpush2.bf16.msra.mxu0 0
        %2908 = vmatprep.subr.bf16.mxu0 0
        %2909 = vmatpush2.bf16.msra.mxu0 0
        %2910 = vmatprep.subr.bf16.mxu0 0
        %2911 = vmatpush2.bf16.msra.mxu0 0
        %2912 = vmatprep.subr.bf16.mxu0 0
        %2913 = vmatpush2.bf16.msra.mxu0 0
        %2914 = vmatprep.subr.bf16.mxu0 0
        %2915 = vmatpush2.bf16.msra.mxu0 0
        %2916 = vmatprep.subr.bf16.mxu0 0
        %2917 = vmatpush2.bf16.msra.mxu0 0
        %2918 = vmatprep.mubr.bf16.mxu0 0
        %2919 = vmatmul.mubr.bf16.gmra.mxu0 %v2854
        %v2920 = vpop.f32.mrf.mxu0
        %v2921 = vadd.f32 0.0, %v2920
        %v2922 = vpop.f32.mrf.mxu0
        %v2923 = vpop.f32.mrf.mxu0
        %v2924 = vadd.f32 0.0, %v2923
        %v2925 = vpop.f32.mrf.mxu0
        %2926 = vmatprep.mubr.bf16.mxu0 0
        %2927 = vmatmul.mubr.bf16.gmra.mxu0 %v2855
        %v2928 = vpop.f32.mrf.mxu0
        %v2929 = vadd.f32 0.0, %v2928
        %v2930 = vpop.f32.mrf.mxu0
        %v2931 = vpop.f32.mrf.mxu0
        %v2932 = vadd.f32 0.0, %v2931
        %v2933 = vpop.f32.mrf.mxu0
        %2934 = vmatprep.mubr.bf16.mxu0 0
        %2935 = vmatmul.mubr.bf16.gmra.mxu0 %v2856
        %v2936 = vpop.f32.mrf.mxu0
        %v2937 = vadd.f32 0.0, %v2936
        %v2938 = vpop.f32.mrf.mxu0
        %v2939 = vpop.f32.mrf.mxu0
        %v2940 = vadd.f32 0.0, %v2939
        %v2941 = vpop.f32.mrf.mxu0
        %2942 = vmatprep.mubr.bf16.mxu0 0
        %2943 = vmatmul.mubr.bf16.gmra.mxu0 %v2857
        %v2944 = vpop.f32.mrf.mxu0
        %v2945 = vadd.f32 0.0, %v2944
        %v2946 = vpop.f32.mrf.mxu0
        %v2947 = vpop.f32.mrf.mxu0
        %v2948 = vadd.f32 0.0, %v2947
        %v2949 = vpop.f32.mrf.mxu0
        %2950 = vmatprep.mubr.bf16.mxu0 0
        %2951 = vmatmul.mubr.bf16.gmra.mxu0 %v2858
        %v2952 = vpop.f32.mrf.mxu0
        %v2953 = vadd.f32 0.0, %v2952
        %v2954 = vpop.f32.mrf.mxu0
        %v2955 = vpop.f32.mrf.mxu0
        %v2956 = vadd.f32 0.0, %v2955
        %v2957 = vpop.f32.mrf.mxu0
        %2958 = vmatprep.mubr.bf16.mxu0 0
        %2959 = vmatmul.mubr.bf16.gmra.mxu0 %v2859
        %v2960 = vpop.f32.mrf.mxu0
        %v2961 = vadd.f32 0.0, %v2960
        %v2962 = vpop.f32.mrf.mxu0
        %v2963 = vpop.f32.mrf.mxu0
        %v2964 = vadd.f32 0.0, %v2963
        %v2965 = vpop.f32.mrf.mxu0
        %2966 = vmatprep.mubr.bf16.mxu0 0
        %2967 = vmatmul.mubr.bf16.gmra.mxu0 %v2860
        %v2968 = vpop.f32.mrf.mxu0
        %v2969 = vadd.f32 0.0, %v2968
        %v2970 = vpop.f32.mrf.mxu0
        %v2971 = vpop.f32.mrf.mxu0
        %v2972 = vadd.f32 0.0, %v2971
        %v2973 = vpop.f32.mrf.mxu0
        %2974 = vmatprep.mubr.bf16.mxu0 0
        %2975 = vmatmul.mubr.bf16.gmra.mxu0 %v2861
        %v2976 = vpop.f32.mrf.mxu0
        %v2977 = vadd.f32 0.0, %v2976
        %v2978 = vpop.f32.mrf.mxu0
        %v2979 = vpop.f32.mrf.mxu0
        %v2980 = vadd.f32 0.0, %v2979
        %v2981 = vpop.f32.mrf.mxu0
        %2982 = vdwg.mxu0
        %v2983 = vpack.c.bf16 %v2924, %v2921
        %v2984 = vpack.c.bf16 %v2932, %v2929
        %v2985 = vpack.c.bf16 %v2940, %v2937
        %v2986 = vpack.c.bf16 %v2948, %v2945
        %v2987 = vpack.c.bf16 %v2956, %v2953
        %v2988 = vpack.c.bf16 %v2964, %v2961
        %v2989 = vpack.c.bf16 %v2972, %v2969
        %v2990 = vpack.c.bf16 %v2980, %v2977
        %v2995 = vunpack.c.l.b16 %v1326
        %v2996 = vunpack.c.l.b16 %v1327
        %v2997 = vunpack.c.l.b16 %v1328
        %v2998 = vunpack.c.l.b16 %v1329
        %v2999 = vpack.c.b16 %v2996, %v2995
        %v3000 = vpack.c.b16 %v2998, %v2997
        %v3004 = vsel %vm1334, %v2983, 0
        %v3007 = vsel %vm1334, %v2984, 0
        %v3010 = vsel %vm1334, %v2985, 0
        %v3013 = vsel %vm1334, %v2986, 0
        %v3016 = vsel %vm1334, %v2987, 0
        %v3019 = vsel %vm1334, %v2988, 0
        %v3022 = vsel %vm1334, %v2989, 0
        %v3025 = vsel %vm1334, %v2990, 0
        %3027 = vmatprep.subr.bf16.mxu0 0
        %3028 = vmatpush1.bf16.msra.mxu0 0
        %3029 = vmatprep.subr.bf16.mxu0 0
        %3030 = vmatpush1.bf16.msra.mxu0 0
        %3031 = vmatprep.subr.bf16.mxu0 0
        %3032 = vmatpush1.bf16.msra.mxu0 0
        %3033 = vmatprep.subr.bf16.mxu0 0
        %3034 = vmatpush1.bf16.msra.mxu0 0
        %3035 = vmatprep.subr.bf16.mxu0 0
        %3036 = vmatpush1.bf16.msra.mxu0 0
        %3037 = vmatprep.subr.bf16.mxu0 0
        %3038 = vmatpush1.bf16.msra.mxu0 0
        %3039 = vmatprep.subr.bf16.mxu0 0
        %3040 = vmatpush1.bf16.msra.mxu0 %v3000
        %3041 = vmatprep.subr.bf16.mxu0 0
        %3042 = vmatpush1.bf16.msra.mxu0 %v2999
        %3043 = vmatprep.subr.bf16.mxu0 0
        %3044 = vmatpush2.bf16.msra.mxu0 0
        %3045 = vmatprep.subr.bf16.mxu0 0
        %3046 = vmatpush2.bf16.msra.mxu0 0
        %3047 = vmatprep.subr.bf16.mxu0 0
        %3048 = vmatpush2.bf16.msra.mxu0 0
        %3049 = vmatprep.subr.bf16.mxu0 0
        %3050 = vmatpush2.bf16.msra.mxu0 0
        %3051 = vmatprep.subr.bf16.mxu0 0
        %3052 = vmatpush2.bf16.msra.mxu0 0
        %3053 = vmatprep.subr.bf16.mxu0 0
        %3054 = vmatpush2.bf16.msra.mxu0 0
        %3055 = vmatprep.subr.bf16.mxu0 0
        %3056 = vmatpush2.bf16.msra.mxu0 0
        %3057 = vmatprep.subr.bf16.mxu0 0
        %3058 = vmatpush2.bf16.msra.mxu0 0
        %3059 = vmatprep.mubr.bf16.mxu0 0
        %3060 = vmatmul.mubr.bf16.gmra.mxu0 %v3004
        %v3061 = vpop.f32.mrf.mxu0
        %v3062 = vadd.f32 0.0, %v3061
        %v3063 = vpop.f32.mrf.mxu0
        %v3064 = vpop.f32.mrf.mxu0
        %v3065 = vadd.f32 0.0, %v3064
        %v3066 = vpop.f32.mrf.mxu0
        %3067 = vmatprep.mubr.bf16.mxu0 0
        %3068 = vmatmul.mubr.bf16.gmra.mxu0 %v3007
        %v3069 = vpop.f32.mrf.mxu0
        %v3070 = vadd.f32 0.0, %v3069
        %v3071 = vpop.f32.mrf.mxu0
        %v3072 = vpop.f32.mrf.mxu0
        %v3073 = vadd.f32 0.0, %v3072
        %v3074 = vpop.f32.mrf.mxu0
        %3075 = vmatprep.mubr.bf16.mxu0 0
        %3076 = vmatmul.mubr.bf16.gmra.mxu0 %v3010
        %v3077 = vpop.f32.mrf.mxu0
        %v3078 = vadd.f32 0.0, %v3077
        %v3079 = vpop.f32.mrf.mxu0
        %v3080 = vpop.f32.mrf.mxu0
        %v3081 = vadd.f32 0.0, %v3080
        %v3082 = vpop.f32.mrf.mxu0
        %3083 = vmatprep.mubr.bf16.mxu0 0
        %3084 = vmatmul.mubr.bf16.gmra.mxu0 %v3013
        %v3085 = vpop.f32.mrf.mxu0
        %v3086 = vadd.f32 0.0, %v3085
        %v3087 = vpop.f32.mrf.mxu0
        %v3088 = vpop.f32.mrf.mxu0
        %v3089 = vadd.f32 0.0, %v3088
        %v3090 = vpop.f32.mrf.mxu0
        %3091 = vmatprep.mubr.bf16.mxu0 0
        %3092 = vmatmul.mubr.bf16.gmra.mxu0 %v3016
        %v3093 = vpop.f32.mrf.mxu0
        %v3094 = vadd.f32 0.0, %v3093
        %v3095 = vpop.f32.mrf.mxu0
        %v3096 = vpop.f32.mrf.mxu0
        %v3097 = vadd.f32 0.0, %v3096
        %v3098 = vpop.f32.mrf.mxu0
        %3099 = vmatprep.mubr.bf16.mxu0 0
        %3100 = vmatmul.mubr.bf16.gmra.mxu0 %v3019
        %v3101 = vpop.f32.mrf.mxu0
        %v3102 = vadd.f32 0.0, %v3101
        %v3103 = vpop.f32.mrf.mxu0
        %v3104 = vpop.f32.mrf.mxu0
        %v3105 = vadd.f32 0.0, %v3104
        %v3106 = vpop.f32.mrf.mxu0
        %3107 = vmatprep.mubr.bf16.mxu0 0
        %3108 = vmatmul.mubr.bf16.gmra.mxu0 %v3022
        %v3109 = vpop.f32.mrf.mxu0
        %v3110 = vadd.f32 0.0, %v3109
        %v3111 = vpop.f32.mrf.mxu0
        %v3112 = vpop.f32.mrf.mxu0
        %v3113 = vadd.f32 0.0, %v3112
        %v3114 = vpop.f32.mrf.mxu0
        %3115 = vmatprep.mubr.bf16.mxu0 0
        %3116 = vmatmul.mubr.bf16.gmra.mxu0 %v3025
        %v3117 = vpop.f32.mrf.mxu0
        %v3118 = vadd.f32 0.0, %v3117
        %v3119 = vpop.f32.mrf.mxu0
        %v3120 = vpop.f32.mrf.mxu0
        %v3121 = vadd.f32 0.0, %v3120
        %v3122 = vpop.f32.mrf.mxu0
        %3123 = vdwg.mxu0
        %v3124 = vadd.f32 %v2455, %v3062
        %v3125 = vadd.f32 %v2458, %v3065
        %v3126 = vadd.f32 %v2463, %v3070
        %v3127 = vadd.f32 %v2466, %v3073
        %v3128 = vadd.f32 %v2471, %v3078
        %v3129 = vadd.f32 %v2474, %v3081
        %v3130 = vadd.f32 %v2479, %v3086
        %v3131 = vadd.f32 %v2482, %v3089
        %v3132 = vadd.f32 %v2487, %v3094
        %v3133 = vadd.f32 %v2490, %v3097
        %v3134 = vadd.f32 %v2495, %v3102
        %v3135 = vadd.f32 %v2498, %v3105
        %v3136 = vadd.f32 %v2503, %v3110
        %v3137 = vadd.f32 %v2506, %v3113
        %v3138 = vadd.f32 %v2511, %v3118
        %v3139 = vadd.f32 %v2514, %v3121
        %3140 = vrot.lane.b32.xlu0 %v1294, 32
        %v3141 = vpop.permute.xlu0 %3140
        %3142 = vrot.lane.b32.xlu0 %v1295, 32
        %v3143 = vpop.permute.xlu0 %3142
        %3144 = vrot.lane.b32.xlu0 %v1296, 32
        %v3145 = vpop.permute.xlu0 %3144
        %3146 = vrot.lane.b32.xlu0 %v1297, 32
        %v3147 = vpop.permute.xlu0 %3146
        %3148 = vrot.lane.b32.xlu0 %v1298, 32
        %v3149 = vpop.permute.xlu0 %3148
        %3150 = vrot.lane.b32.xlu0 %v1299, 32
        %v3151 = vpop.permute.xlu0 %3150
        %3152 = vrot.lane.b32.xlu0 %v1300, 32
        %v3153 = vpop.permute.xlu0 %3152
        %3154 = vrot.lane.b32.xlu0 %v1301, 32
        %v3155 = vpop.permute.xlu0 %3154
        %3156 = vrot.lane.b32.xlu0 %v1302, 32
        %v3157 = vpop.permute.xlu0 %3156
        %3158 = vrot.lane.b32.xlu0 %v1303, 32
        %v3159 = vpop.permute.xlu0 %3158
        %3160 = vrot.lane.b32.xlu0 %v1304, 32
        %v3161 = vpop.permute.xlu0 %3160
        %3162 = vrot.lane.b32.xlu0 %v1305, 32
        %v3163 = vpop.permute.xlu0 %3162
        %3164 = vrot.lane.b32.xlu0 %v1306, 32
        %v3165 = vpop.permute.xlu0 %3164
        %3166 = vrot.lane.b32.xlu0 %v1307, 32
        %v3167 = vpop.permute.xlu0 %3166
        %3168 = vrot.lane.b32.xlu0 %v1308, 32
        %v3169 = vpop.permute.xlu0 %3168
        %3170 = vrot.lane.b32.xlu0 %v1309, 32
        %v3171 = vpop.permute.xlu0 %3170
        %v3173 = vsel %vm1334, %v3141, 0
        %v3176 = vsel %vm1334, %v3143, 0
        %v3179 = vsel %vm1334, %v3145, 0
        %v3182 = vsel %vm1334, %v3147, 0
        %v3185 = vsel %vm1334, %v3149, 0
        %v3188 = vsel %vm1334, %v3151, 0
        %v3191 = vsel %vm1334, %v3153, 0
        %v3194 = vsel %vm1334, %v3155, 0
        %v3197 = vsel %vm1334, %v3157, 0
        %v3200 = vsel %vm1334, %v3159, 0
        %v3203 = vsel %vm1334, %v3161, 0
        %v3206 = vsel %vm1334, %v3163, 0
        %v3209 = vsel %vm1334, %v3165, 0
        %v3212 = vsel %vm1334, %v3167, 0
        %v3215 = vsel %vm1334, %v3169, 0
        %v3218 = vsel %vm1334, %v3171, 0
        %3220 = vmatprep.subr.bf16.mxu0 0
        %3221 = vmatpush1.bf16.xpose.msra.mxu0 %v3218
        %3222 = vmatprep.subr.bf16.mxu0 0
        %3223 = vmatpush1.bf16.xpose.msra.mxu0 %v3215
        %3224 = vmatprep.subr.bf16.mxu0 0
        %3225 = vmatpush1.bf16.xpose.msra.mxu0 %v3212
        %3226 = vmatprep.subr.bf16.mxu0 0
        %3227 = vmatpush1.bf16.xpose.msra.mxu0 %v3209
        %3228 = vmatprep.subr.bf16.mxu0 0
        %3229 = vmatpush1.bf16.xpose.msra.mxu0 %v3206
        %3230 = vmatprep.subr.bf16.mxu0 0
        %3231 = vmatpush1.bf16.xpose.msra.mxu0 %v3203
        %3232 = vmatprep.subr.bf16.mxu0 0
        %3233 = vmatpush1.bf16.xpose.msra.mxu0 %v3200
        %3234 = vmatprep.subr.bf16.mxu0 0
        %3235 = vmatpush1.bf16.xpose.msra.mxu0 %v3197
        %3236 = vmatprep.subr.bf16.mxu0 0
        %3237 = vmatpush2.bf16.xpose.msra.mxu0 0
        %3238 = vmatprep.subr.bf16.mxu0 0
        %3239 = vmatpush2.bf16.xpose.msra.mxu0 0
        %3240 = vmatprep.subr.bf16.mxu0 0
        %3241 = vmatpush2.bf16.xpose.msra.mxu0 0
        %3242 = vmatprep.subr.bf16.mxu0 0
        %3243 = vmatpush2.bf16.xpose.msra.mxu0 0
        %3244 = vmatprep.subr.bf16.mxu0 0
        %3245 = vmatpush2.bf16.xpose.msra.mxu0 0
        %3246 = vmatprep.subr.bf16.mxu0 0
        %3247 = vmatpush2.bf16.xpose.msra.mxu0 0
        %3248 = vmatprep.subr.bf16.mxu0 0
        %3249 = vmatpush2.bf16.xpose.msra.mxu0 0
        %3250 = vmatprep.subr.bf16.mxu0 0
        %3251 = vmatpush2.bf16.xpose.msra.mxu0 0
        %3252 = vmatprep.mubr.bf16.mxu0 0
        %3253 = vmatmul.mubr.bf16.gmra.mxu0 %v3173
        %v3254 = vpop.f32.mrf.mxu0
        %v3255 = vadd.f32 0.0, %v3254
        %v3256 = vpop.f32.mrf.mxu0
        %v3257 = vpop.f32.mrf.mxu0
        %v3258 = vadd.f32 0.0, %v3257
        %v3259 = vpop.f32.mrf.mxu0
        %3260 = vmatprep.mubr.bf16.mxu0 0
        %3261 = vmatmul.mubr.bf16.gmra.mxu0 %v3176
        %v3262 = vpop.f32.mrf.mxu0
        %v3263 = vadd.f32 0.0, %v3262
        %v3264 = vpop.f32.mrf.mxu0
        %v3265 = vpop.f32.mrf.mxu0
        %v3266 = vadd.f32 0.0, %v3265
        %v3267 = vpop.f32.mrf.mxu0
        %3268 = vmatprep.mubr.bf16.mxu0 0
        %3269 = vmatmul.mubr.bf16.gmra.mxu0 %v3179
        %v3270 = vpop.f32.mrf.mxu0
        %v3271 = vadd.f32 0.0, %v3270
        %v3272 = vpop.f32.mrf.mxu0
        %v3273 = vpop.f32.mrf.mxu0
        %v3274 = vadd.f32 0.0, %v3273
        %v3275 = vpop.f32.mrf.mxu0
        %3276 = vmatprep.mubr.bf16.mxu0 0
        %3277 = vmatmul.mubr.bf16.gmra.mxu0 %v3182
        %v3278 = vpop.f32.mrf.mxu0
        %v3279 = vadd.f32 0.0, %v3278
        %v3280 = vpop.f32.mrf.mxu0
        %v3281 = vpop.f32.mrf.mxu0
        %v3282 = vadd.f32 0.0, %v3281
        %v3283 = vpop.f32.mrf.mxu0
        %3284 = vmatprep.mubr.bf16.mxu0 0
        %3285 = vmatmul.mubr.bf16.gmra.mxu0 %v3185
        %v3286 = vpop.f32.mrf.mxu0
        %v3287 = vadd.f32 0.0, %v3286
        %v3288 = vpop.f32.mrf.mxu0
        %v3289 = vpop.f32.mrf.mxu0
        %v3290 = vadd.f32 0.0, %v3289
        %v3291 = vpop.f32.mrf.mxu0
        %3292 = vmatprep.mubr.bf16.mxu0 0
        %3293 = vmatmul.mubr.bf16.gmra.mxu0 %v3188
        %v3294 = vpop.f32.mrf.mxu0
        %v3295 = vadd.f32 0.0, %v3294
        %v3296 = vpop.f32.mrf.mxu0
        %v3297 = vpop.f32.mrf.mxu0
        %v3298 = vadd.f32 0.0, %v3297
        %v3299 = vpop.f32.mrf.mxu0
        %3300 = vmatprep.mubr.bf16.mxu0 0
        %3301 = vmatmul.mubr.bf16.gmra.mxu0 %v3191
        %v3302 = vpop.f32.mrf.mxu0
        %v3303 = vadd.f32 0.0, %v3302
        %v3304 = vpop.f32.mrf.mxu0
        %v3305 = vpop.f32.mrf.mxu0
        %v3306 = vadd.f32 0.0, %v3305
        %v3307 = vpop.f32.mrf.mxu0
        %3308 = vmatprep.mubr.bf16.mxu0 0
        %3309 = vmatmul.mubr.bf16.gmra.mxu0 %v3194
        %v3310 = vpop.f32.mrf.mxu0
        %v3311 = vadd.f32 0.0, %v3310
        %v3312 = vpop.f32.mrf.mxu0
        %v3313 = vpop.f32.mrf.mxu0
        %v3314 = vadd.f32 0.0, %v3313
        %v3315 = vpop.f32.mrf.mxu0
        %3316 = vdwg.mxu0
        %v3317 = vmul.f32 %v3255, 0.17677669
        %v3318 = vmul.f32 %v3258, 0.17677669
        %v3319 = vmul.f32 %v3263, 0.17677669
        %v3320 = vmul.f32 %v3266, 0.17677669
        %v3321 = vmul.f32 %v3271, 0.17677669
        %v3322 = vmul.f32 %v3274, 0.17677669
        %v3323 = vmul.f32 %v3279, 0.17677669
        %v3324 = vmul.f32 %v3282, 0.17677669
        %v3325 = vmul.f32 %v3287, 0.17677669
        %v3326 = vmul.f32 %v3290, 0.17677669
        %v3327 = vmul.f32 %v3295, 0.17677669
        %v3328 = vmul.f32 %v3298, 0.17677669
        %v3329 = vmul.f32 %v3303, 0.17677669
        %v3330 = vmul.f32 %v3306, 0.17677669
        %v3331 = vmul.f32 %v3311, 0.17677669
        %v3332 = vmul.f32 %v3314, 0.17677669
        %3333 = vmax.xlane.f32.xlu0 %v3317
        %v3334 = vpop.xlane.xlu0 %3333
        %3335 = vmax.xlane.f32.xlu0 %v3318
        %v3336 = vpop.xlane.xlu0 %3335
        %3337 = vmax.xlane.f32.xlu0 %v3319
        %v3338 = vpop.xlane.xlu0 %3337
        %3339 = vmax.xlane.f32.xlu0 %v3320
        %v3340 = vpop.xlane.xlu0 %3339
        %3341 = vmax.xlane.f32.xlu0 %v3321
        %v3342 = vpop.xlane.xlu0 %3341
        %3343 = vmax.xlane.f32.xlu0 %v3322
        %v3344 = vpop.xlane.xlu0 %3343
        %3345 = vmax.xlane.f32.xlu0 %v3323
        %v3346 = vpop.xlane.xlu0 %3345
        %3347 = vmax.xlane.f32.xlu0 %v3324
        %v3348 = vpop.xlane.xlu0 %3347
        %3349 = vmax.xlane.f32.xlu0 %v3325
        %v3350 = vpop.xlane.xlu0 %3349
        %3351 = vmax.xlane.f32.xlu0 %v3326
        %v3352 = vpop.xlane.xlu0 %3351
        %3353 = vmax.xlane.f32.xlu0 %v3327
        %v3354 = vpop.xlane.xlu0 %3353
        %3355 = vmax.xlane.f32.xlu0 %v3328
        %v3356 = vpop.xlane.xlu0 %3355
        %3357 = vmax.xlane.f32.xlu0 %v3329
        %v3358 = vpop.xlane.xlu0 %3357
        %3359 = vmax.xlane.f32.xlu0 %v3330
        %v3360 = vpop.xlane.xlu0 %3359
        %3361 = vmax.xlane.f32.xlu0 %v3331
        %v3362 = vpop.xlane.xlu0 %3361
        %3363 = vmax.xlane.f32.xlu0 %v3332
        %v3364 = vpop.xlane.xlu0 %3363
        %v3365 = vsub.f32 %v3317, %v3334
        %v3366 = vsub.f32 %v3318, %v3336
        %v3367 = vsub.f32 %v3319, %v3338
        %v3368 = vsub.f32 %v3320, %v3340
        %v3369 = vsub.f32 %v3321, %v3342
        %v3370 = vsub.f32 %v3322, %v3344
        %v3371 = vsub.f32 %v3323, %v3346
        %v3372 = vsub.f32 %v3324, %v3348
        %v3373 = vsub.f32 %v3325, %v3350
        %v3374 = vsub.f32 %v3326, %v3352
        %v3375 = vsub.f32 %v3327, %v3354
        %v3376 = vsub.f32 %v3328, %v3356
        %v3377 = vsub.f32 %v3329, %v3358
        %v3378 = vsub.f32 %v3330, %v3360
        %v3379 = vsub.f32 %v3331, %v3362
        %v3380 = vsub.f32 %v3332, %v3364
        %v3381 = vmul.f32 %v3365, 1.442695
        %v3382 = vpow.pop %v3381
        %v3383 = vmul.f32 %v3366, 1.442695
        %v3384 = vpow.pop %v3383
        %v3385 = vmul.f32 %v3367, 1.442695
        %v3386 = vpow.pop %v3385
        %v3387 = vmul.f32 %v3368, 1.442695
        %v3388 = vpow.pop %v3387
        %v3389 = vmul.f32 %v3369, 1.442695
        %v3390 = vpow.pop %v3389
        %v3391 = vmul.f32 %v3370, 1.442695
        %v3392 = vpow.pop %v3391
        %v3393 = vmul.f32 %v3371, 1.442695
        %v3394 = vpow.pop %v3393
        %v3395 = vmul.f32 %v3372, 1.442695
        %v3396 = vpow.pop %v3395
        %v3397 = vmul.f32 %v3373, 1.442695
        %v3398 = vpow.pop %v3397
        %v3399 = vmul.f32 %v3374, 1.442695
        %v3400 = vpow.pop %v3399
        %v3401 = vmul.f32 %v3375, 1.442695
        %v3402 = vpow.pop %v3401
        %v3403 = vmul.f32 %v3376, 1.442695
        %v3404 = vpow.pop %v3403
        %v3405 = vmul.f32 %v3377, 1.442695
        %v3406 = vpow.pop %v3405
        %v3407 = vmul.f32 %v3378, 1.442695
        %v3408 = vpow.pop %v3407
        %v3409 = vmul.f32 %v3379, 1.442695
        %v3410 = vpow.pop %v3409
        %v3411 = vmul.f32 %v3380, 1.442695
        %v3412 = vpow.pop %v3411
        %3413 = vadd.xlane.f32.xlu0 %v3382
        %v3414 = vpop.xlane.xlu0 %3413
        %3415 = vadd.xlane.f32.xlu0 %v3384
        %v3416 = vpop.xlane.xlu0 %3415
        %3417 = vadd.xlane.f32.xlu0 %v3386
        %v3418 = vpop.xlane.xlu0 %3417
        %3419 = vadd.xlane.f32.xlu0 %v3388
        %v3420 = vpop.xlane.xlu0 %3419
        %3421 = vadd.xlane.f32.xlu0 %v3390
        %v3422 = vpop.xlane.xlu0 %3421
        %3423 = vadd.xlane.f32.xlu0 %v3392
        %v3424 = vpop.xlane.xlu0 %3423
        %3425 = vadd.xlane.f32.xlu0 %v3394
        %v3426 = vpop.xlane.xlu0 %3425
        %3427 = vadd.xlane.f32.xlu0 %v3396
        %v3428 = vpop.xlane.xlu0 %3427
        %3429 = vadd.xlane.f32.xlu0 %v3398
        %v3430 = vpop.xlane.xlu0 %3429
        %3431 = vadd.xlane.f32.xlu0 %v3400
        %v3432 = vpop.xlane.xlu0 %3431
        %3433 = vadd.xlane.f32.xlu0 %v3402
        %v3434 = vpop.xlane.xlu0 %3433
        %3435 = vadd.xlane.f32.xlu0 %v3404
        %v3436 = vpop.xlane.xlu0 %3435
        %3437 = vadd.xlane.f32.xlu0 %v3406
        %v3438 = vpop.xlane.xlu0 %3437
        %3439 = vadd.xlane.f32.xlu0 %v3408
        %v3440 = vpop.xlane.xlu0 %3439
        %3441 = vadd.xlane.f32.xlu0 %v3410
        %v3442 = vpop.xlane.xlu0 %3441
        %3443 = vadd.xlane.f32.xlu0 %v3412
        %v3444 = vpop.xlane.xlu0 %3443
        %v3445 = vrcp.pop %v3414
        %v3446 = vrcp.pop %v3416
        %v3447 = vrcp.pop %v3418
        %v3448 = vrcp.pop %v3420
        %v3449 = vrcp.pop %v3422
        %v3450 = vrcp.pop %v3424
        %v3451 = vrcp.pop %v3426
        %v3452 = vrcp.pop %v3428
        %v3453 = vrcp.pop %v3430
        %v3454 = vrcp.pop %v3432
        %v3455 = vrcp.pop %v3434
        %v3456 = vrcp.pop %v3436
        %v3457 = vrcp.pop %v3438
        %v3458 = vrcp.pop %v3440
        %v3459 = vrcp.pop %v3442
        %v3460 = vrcp.pop %v3444
        %v3461 = vmul.f32 %v3382, %v3445
        %v3462 = vmul.f32 %v3384, %v3446
        %v3463 = vmul.f32 %v3386, %v3447
        %v3464 = vmul.f32 %v3388, %v3448
        %v3465 = vmul.f32 %v3390, %v3449
        %v3466 = vmul.f32 %v3392, %v3450
        %v3467 = vmul.f32 %v3394, %v3451
        %v3468 = vmul.f32 %v3396, %v3452
        %v3469 = vmul.f32 %v3398, %v3453
        %v3470 = vmul.f32 %v3400, %v3454
        %v3471 = vmul.f32 %v3402, %v3455
        %v3472 = vmul.f32 %v3404, %v3456
        %v3473 = vmul.f32 %v3406, %v3457
        %v3474 = vmul.f32 %v3408, %v3458
        %v3475 = vmul.f32 %v3410, %v3459
        %v3476 = vmul.f32 %v3412, %v3460
        %v3477 = vpack.c.bf16 %v3462, %v3461
        %v3478 = vpack.c.bf16 %v3464, %v3463
        %v3479 = vpack.c.bf16 %v3466, %v3465
        %v3480 = vpack.c.bf16 %v3468, %v3467
        %v3481 = vpack.c.bf16 %v3470, %v3469
        %v3482 = vpack.c.bf16 %v3472, %v3471
        %v3483 = vpack.c.bf16 %v3474, %v3473
        %v3484 = vpack.c.bf16 %v3476, %v3475
        %3485 = vrot.lane.b32.xlu0 %v1310, 32
        %v3486 = vpop.permute.xlu0 %3485
        %3487 = vrot.lane.b32.xlu0 %v1311, 32
        %v3488 = vpop.permute.xlu0 %3487
        %3489 = vrot.lane.b32.xlu0 %v1312, 32
        %v3490 = vpop.permute.xlu0 %3489
        %3491 = vrot.lane.b32.xlu0 %v1313, 32
        %v3492 = vpop.permute.xlu0 %3491
        %3493 = vrot.lane.b32.xlu0 %v1314, 32
        %v3494 = vpop.permute.xlu0 %3493
        %3495 = vrot.lane.b32.xlu0 %v1315, 32
        %v3496 = vpop.permute.xlu0 %3495
        %3497 = vrot.lane.b32.xlu0 %v1316, 32
        %v3498 = vpop.permute.xlu0 %3497
        %3499 = vrot.lane.b32.xlu0 %v1317, 32
        %v3500 = vpop.permute.xlu0 %3499
        %3509 = vmatprep.subr.bf16.mxu0 0
        %3510 = vmatpush1.bf16.msra.mxu0 %v3500
        %3511 = vmatprep.subr.bf16.mxu0 0
        %3512 = vmatpush1.bf16.msra.mxu0 %v3498
        %3513 = vmatprep.subr.bf16.mxu0 0
        %3514 = vmatpush1.bf16.msra.mxu0 %v3496
        %3515 = vmatprep.subr.bf16.mxu0 0
        %3516 = vmatpush1.bf16.msra.mxu0 %v3494
        %3517 = vmatprep.subr.bf16.mxu0 0
        %3518 = vmatpush1.bf16.msra.mxu0 %v3492
        %3519 = vmatprep.subr.bf16.mxu0 0
        %3520 = vmatpush1.bf16.msra.mxu0 %v3490
        %3521 = vmatprep.subr.bf16.mxu0 0
        %3522 = vmatpush1.bf16.msra.mxu0 %v3488
        %3523 = vmatprep.subr.bf16.mxu0 0
        %3524 = vmatpush1.bf16.msra.mxu0 %v3486
        %3525 = vmatprep.subr.bf16.mxu0 0
        %3526 = vmatpush2.bf16.msra.mxu0 0
        %3527 = vmatprep.subr.bf16.mxu0 0
        %3528 = vmatpush2.bf16.msra.mxu0 0
        %3529 = vmatprep.subr.bf16.mxu0 0
        %3530 = vmatpush2.bf16.msra.mxu0 0
        %3531 = vmatprep.subr.bf16.mxu0 0
        %3532 = vmatpush2.bf16.msra.mxu0 0
        %3533 = vmatprep.subr.bf16.mxu0 0
        %3534 = vmatpush2.bf16.msra.mxu0 0
        %3535 = vmatprep.subr.bf16.mxu0 0
        %3536 = vmatpush2.bf16.msra.mxu0 0
        %3537 = vmatprep.subr.bf16.mxu0 0
        %3538 = vmatpush2.bf16.msra.mxu0 0
        %3539 = vmatprep.subr.bf16.mxu0 0
        %3540 = vmatpush2.bf16.msra.mxu0 0
        %3541 = vmatprep.mubr.bf16.mxu0 0
        %3542 = vmatmul.mubr.bf16.gmra.mxu0 %v3477
        %v3543 = vpop.f32.mrf.mxu0
        %v3544 = vadd.f32 0.0, %v3543
        %v3545 = vpop.f32.mrf.mxu0
        %v3546 = vpop.f32.mrf.mxu0
        %v3547 = vadd.f32 0.0, %v3546
        %v3548 = vpop.f32.mrf.mxu0
        %3549 = vmatprep.mubr.bf16.mxu0 0
        %3550 = vmatmul.mubr.bf16.gmra.mxu0 %v3478
        %v3551 = vpop.f32.mrf.mxu0
        %v3552 = vadd.f32 0.0, %v3551
        %v3553 = vpop.f32.mrf.mxu0
        %v3554 = vpop.f32.mrf.mxu0
        %v3555 = vadd.f32 0.0, %v3554
        %v3556 = vpop.f32.mrf.mxu0
        %3557 = vmatprep.mubr.bf16.mxu0 0
        %3558 = vmatmul.mubr.bf16.gmra.mxu0 %v3479
        %v3559 = vpop.f32.mrf.mxu0
        %v3560 = vadd.f32 0.0, %v3559
        %v3561 = vpop.f32.mrf.mxu0
        %v3562 = vpop.f32.mrf.mxu0
        %v3563 = vadd.f32 0.0, %v3562
        %v3564 = vpop.f32.mrf.mxu0
        %3565 = vmatprep.mubr.bf16.mxu0 0
        %3566 = vmatmul.mubr.bf16.gmra.mxu0 %v3480
        %v3567 = vpop.f32.mrf.mxu0
        %v3568 = vadd.f32 0.0, %v3567
        %v3569 = vpop.f32.mrf.mxu0
        %v3570 = vpop.f32.mrf.mxu0
        %v3571 = vadd.f32 0.0, %v3570
        %v3572 = vpop.f32.mrf.mxu0
        %3573 = vmatprep.mubr.bf16.mxu0 0
        %3574 = vmatmul.mubr.bf16.gmra.mxu0 %v3481
        %v3575 = vpop.f32.mrf.mxu0
        %v3576 = vadd.f32 0.0, %v3575
        %v3577 = vpop.f32.mrf.mxu0
        %v3578 = vpop.f32.mrf.mxu0
        %v3579 = vadd.f32 0.0, %v3578
        %v3580 = vpop.f32.mrf.mxu0
        %3581 = vmatprep.mubr.bf16.mxu0 0
        %3582 = vmatmul.mubr.bf16.gmra.mxu0 %v3482
        %v3583 = vpop.f32.mrf.mxu0
        %v3584 = vadd.f32 0.0, %v3583
        %v3585 = vpop.f32.mrf.mxu0
        %v3586 = vpop.f32.mrf.mxu0
        %v3587 = vadd.f32 0.0, %v3586
        %v3588 = vpop.f32.mrf.mxu0
        %3589 = vmatprep.mubr.bf16.mxu0 0
        %3590 = vmatmul.mubr.bf16.gmra.mxu0 %v3483
        %v3591 = vpop.f32.mrf.mxu0
        %v3592 = vadd.f32 0.0, %v3591
        %v3593 = vpop.f32.mrf.mxu0
        %v3594 = vpop.f32.mrf.mxu0
        %v3595 = vadd.f32 0.0, %v3594
        %v3596 = vpop.f32.mrf.mxu0
        %3597 = vmatprep.mubr.bf16.mxu0 0
        %3598 = vmatmul.mubr.bf16.gmra.mxu0 %v3484
        %v3599 = vpop.f32.mrf.mxu0
        %v3600 = vadd.f32 0.0, %v3599
        %v3601 = vpop.f32.mrf.mxu0
        %v3602 = vpop.f32.mrf.mxu0
        %v3603 = vadd.f32 0.0, %v3602
        %v3604 = vpop.f32.mrf.mxu0
        %3605 = vdwg.mxu0
        %v3606 = vpack.c.bf16 %v3547, %v3544
        %v3607 = vpack.c.bf16 %v3555, %v3552
        %v3608 = vpack.c.bf16 %v3563, %v3560
        %v3609 = vpack.c.bf16 %v3571, %v3568
        %v3610 = vpack.c.bf16 %v3579, %v3576
        %v3611 = vpack.c.bf16 %v3587, %v3584
        %v3612 = vpack.c.bf16 %v3595, %v3592
        %v3613 = vpack.c.bf16 %v3603, %v3600
        %v3618 = vunpack.c.l.b16 %v1330
        %v3619 = vunpack.c.l.b16 %v1331
        %v3620 = vunpack.c.l.b16 %v1332
        %v3621 = vunpack.c.l.b16 %v1333
        %v3622 = vpack.c.b16 %v3619, %v3618
        %v3623 = vpack.c.b16 %v3621, %v3620
        %v3627 = vsel %vm1334, %v3606, 0
        %v3630 = vsel %vm1334, %v3607, 0
        %v3633 = vsel %vm1334, %v3608, 0
        %v3636 = vsel %vm1334, %v3609, 0
        %v3639 = vsel %vm1334, %v3610, 0
        %v3642 = vsel %vm1334, %v3611, 0
        %v3645 = vsel %vm1334, %v3612, 0
        %v3648 = vsel %vm1334, %v3613, 0
        %3650 = vmatprep.subr.bf16.mxu0 0
        %3651 = vmatpush1.bf16.msra.mxu0 0
        %3652 = vmatprep.subr.bf16.mxu0 0
        %3653 = vmatpush1.bf16.msra.mxu0 0
        %3654 = vmatprep.subr.bf16.mxu0 0
        %3655 = vmatpush1.bf16.msra.mxu0 0
        %3656 = vmatprep.subr.bf16.mxu0 0
        %3657 = vmatpush1.bf16.msra.mxu0 0
        %3658 = vmatprep.subr.bf16.mxu0 0
        %3659 = vmatpush1.bf16.msra.mxu0 0
        %3660 = vmatprep.subr.bf16.mxu0 0
        %3661 = vmatpush1.bf16.msra.mxu0 0
        %3662 = vmatprep.subr.bf16.mxu0 0
        %3663 = vmatpush1.bf16.msra.mxu0 %v3623
        %3664 = vmatprep.subr.bf16.mxu0 0
        %3665 = vmatpush1.bf16.msra.mxu0 %v3622
        %3666 = vmatprep.subr.bf16.mxu0 0
        %3667 = vmatpush2.bf16.msra.mxu0 0
        %3668 = vmatprep.subr.bf16.mxu0 0
        %3669 = vmatpush2.bf16.msra.mxu0 0
        %3670 = vmatprep.subr.bf16.mxu0 0
        %3671 = vmatpush2.bf16.msra.mxu0 0
        %3672 = vmatprep.subr.bf16.mxu0 0
        %3673 = vmatpush2.bf16.msra.mxu0 0
        %3674 = vmatprep.subr.bf16.mxu0 0
        %3675 = vmatpush2.bf16.msra.mxu0 0
        %3676 = vmatprep.subr.bf16.mxu0 0
        %3677 = vmatpush2.bf16.msra.mxu0 0
        %3678 = vmatprep.subr.bf16.mxu0 0
        %3679 = vmatpush2.bf16.msra.mxu0 0
        %3680 = vmatprep.subr.bf16.mxu0 0
        %3681 = vmatpush2.bf16.msra.mxu0 0
        %3682 = vmatprep.mubr.bf16.mxu0 0
        %3683 = vmatmul.mubr.bf16.gmra.mxu0 %v3627
        %v3684 = vpop.f32.mrf.mxu0
        %v3685 = vadd.f32 0.0, %v3684
        %v3686 = vpop.f32.mrf.mxu0
        %v3687 = vpop.f32.mrf.mxu0
        %v3688 = vadd.f32 0.0, %v3687
        %v3689 = vpop.f32.mrf.mxu0
        %3690 = vmatprep.mubr.bf16.mxu0 0
        %3691 = vmatmul.mubr.bf16.gmra.mxu0 %v3630
        %v3692 = vpop.f32.mrf.mxu0
        %v3693 = vadd.f32 0.0, %v3692
        %v3694 = vpop.f32.mrf.mxu0
        %v3695 = vpop.f32.mrf.mxu0
        %v3696 = vadd.f32 0.0, %v3695
        %v3697 = vpop.f32.mrf.mxu0
        %3698 = vmatprep.mubr.bf16.mxu0 0
        %3699 = vmatmul.mubr.bf16.gmra.mxu0 %v3633
        %v3700 = vpop.f32.mrf.mxu0
        %v3701 = vadd.f32 0.0, %v3700
        %v3702 = vpop.f32.mrf.mxu0
        %v3703 = vpop.f32.mrf.mxu0
        %v3704 = vadd.f32 0.0, %v3703
        %v3705 = vpop.f32.mrf.mxu0
        %3706 = vmatprep.mubr.bf16.mxu0 0
        %3707 = vmatmul.mubr.bf16.gmra.mxu0 %v3636
        %v3708 = vpop.f32.mrf.mxu0
        %v3709 = vadd.f32 0.0, %v3708
        %v3710 = vpop.f32.mrf.mxu0
        %v3711 = vpop.f32.mrf.mxu0
        %v3712 = vadd.f32 0.0, %v3711
        %v3713 = vpop.f32.mrf.mxu0
        %3714 = vmatprep.mubr.bf16.mxu0 0
        %3715 = vmatmul.mubr.bf16.gmra.mxu0 %v3639
        %v3716 = vpop.f32.mrf.mxu0
        %v3717 = vadd.f32 0.0, %v3716
        %v3718 = vpop.f32.mrf.mxu0
        %v3719 = vpop.f32.mrf.mxu0
        %v3720 = vadd.f32 0.0, %v3719
        %v3721 = vpop.f32.mrf.mxu0
        %3722 = vmatprep.mubr.bf16.mxu0 0
        %3723 = vmatmul.mubr.bf16.gmra.mxu0 %v3642
        %v3724 = vpop.f32.mrf.mxu0
        %v3725 = vadd.f32 0.0, %v3724
        %v3726 = vpop.f32.mrf.mxu0
        %v3727 = vpop.f32.mrf.mxu0
        %v3728 = vadd.f32 0.0, %v3727
        %v3729 = vpop.f32.mrf.mxu0
        %3730 = vmatprep.mubr.bf16.mxu0 0
        %3731 = vmatmul.mubr.bf16.gmra.mxu0 %v3645
        %v3732 = vpop.f32.mrf.mxu0
        %v3733 = vadd.f32 0.0, %v3732
        %v3734 = vpop.f32.mrf.mxu0
        %v3735 = vpop.f32.mrf.mxu0
        %v3736 = vadd.f32 0.0, %v3735
        %v3737 = vpop.f32.mrf.mxu0
        %3738 = vmatprep.mubr.bf16.mxu0 0
        %3739 = vmatmul.mubr.bf16.gmra.mxu0 %v3648
        %v3740 = vpop.f32.mrf.mxu0
        %v3741 = vadd.f32 0.0, %v3740
        %v3742 = vpop.f32.mrf.mxu0
        %v3743 = vpop.f32.mrf.mxu0
        %v3744 = vadd.f32 0.0, %v3743
        %v3745 = vpop.f32.mrf.mxu0
        %3746 = vdwg.mxu0
        %v3747 = vadd.f32 %v3124, %v3685
        %v3748 = vadd.f32 %v3125, %v3688
        %v3749 = vadd.f32 %v3126, %v3693
        %v3750 = vadd.f32 %v3127, %v3696
        %v3751 = vadd.f32 %v3128, %v3701
        %v3752 = vadd.f32 %v3129, %v3704
        %v3753 = vadd.f32 %v3130, %v3709
        %v3754 = vadd.f32 %v3131, %v3712
        %v3755 = vadd.f32 %v3132, %v3717
        %v3756 = vadd.f32 %v3133, %v3720
        %v3757 = vadd.f32 %v3134, %v3725
        %v3758 = vadd.f32 %v3135, %v3728
        %v3759 = vadd.f32 %v3136, %v3733
        %v3760 = vadd.f32 %v3137, %v3736
        %v3761 = vadd.f32 %v3138, %v3741
        %v3762 = vadd.f32 %v3139, %v3744
        %v3763 = vld [vmem:[%s9] sm:$0x1]
        %v3765 = vlaneseq
        %v3766 = vshrl.u32 %v3765, 7
        %v3767 = vsub.s32 0, %v3766
        %v3768 = vrot.slane %v3763, %v3767
        %v3770 = vadd.f32 %v3747, %v3768
        %v3771 = vadd.f32 %v3748, %v3768
        %v3772 = vadd.f32 %v3749, %v3768
        %v3773 = vadd.f32 %v3750, %v3768
        %v3774 = vadd.f32 %v3751, %v3768
        %v3775 = vadd.f32 %v3752, %v3768
        %v3776 = vadd.f32 %v3753, %v3768
        %v3777 = vadd.f32 %v3754, %v3768
        %v3778 = vadd.f32 %v3755, %v3768
        %v3779 = vadd.f32 %v3756, %v3768
        %v3780 = vadd.f32 %v3757, %v3768
        %v3781 = vadd.f32 %v3758, %v3768
        %v3782 = vadd.f32 %v3759, %v3768
        %v3783 = vadd.f32 %v3760, %v3768
        %v3784 = vadd.f32 %v3761, %v3768
        %v3785 = vadd.f32 %v3762, %v3768
        %v3786 = vadd.f32 %v742, %v3770
        %v3787 = vadd.f32 %v743, %v3771
        %v3788 = vadd.f32 %v744, %v3772
        %v3789 = vadd.f32 %v745, %v3773
        %v3790 = vadd.f32 %v746, %v3774
        %v3791 = vadd.f32 %v747, %v3775
        %v3792 = vadd.f32 %v748, %v3776
        %v3793 = vadd.f32 %v749, %v3777
        %v3794 = vadd.f32 %v750, %v3778
        %v3795 = vadd.f32 %v751, %v3779
        %v3796 = vadd.f32 %v752, %v3780
        %v3797 = vadd.f32 %v753, %v3781
        %v3798 = vadd.f32 %v754, %v3782
        %v3799 = vadd.f32 %v755, %v3783
        %v3800 = vadd.f32 %v756, %v3784
        %v3801 = vadd.f32 %v757, %v3785
        %v3802 = vld [vmem:[%s14] sm:$0x1]
        %v3803 = vld [vmem:[%s15] sm:$0x1]
        %3804 = vadd.xlane.f32.xlu0 %v3786
        %v3805 = vpop.xlane.xlu0 %3804
        %3806 = vadd.xlane.f32.xlu0 %v3787
        %v3807 = vpop.xlane.xlu0 %3806
        %3808 = vadd.xlane.f32.xlu0 %v3788
        %v3809 = vpop.xlane.xlu0 %3808
        %3810 = vadd.xlane.f32.xlu0 %v3789
        %v3811 = vpop.xlane.xlu0 %3810
        %3812 = vadd.xlane.f32.xlu0 %v3790
        %v3813 = vpop.xlane.xlu0 %3812
        %3814 = vadd.xlane.f32.xlu0 %v3791
        %v3815 = vpop.xlane.xlu0 %3814
        %3816 = vadd.xlane.f32.xlu0 %v3792
        %v3817 = vpop.xlane.xlu0 %3816
        %3818 = vadd.xlane.f32.xlu0 %v3793
        %v3819 = vpop.xlane.xlu0 %3818
        %3820 = vadd.xlane.f32.xlu0 %v3794
        %v3821 = vpop.xlane.xlu0 %3820
        %3822 = vadd.xlane.f32.xlu0 %v3795
        %v3823 = vpop.xlane.xlu0 %3822
        %3824 = vadd.xlane.f32.xlu0 %v3796
        %v3825 = vpop.xlane.xlu0 %3824
        %3826 = vadd.xlane.f32.xlu0 %v3797
        %v3827 = vpop.xlane.xlu0 %3826
        %3828 = vadd.xlane.f32.xlu0 %v3798
        %v3829 = vpop.xlane.xlu0 %3828
        %3830 = vadd.xlane.f32.xlu0 %v3799
        %v3831 = vpop.xlane.xlu0 %3830
        %3832 = vadd.xlane.f32.xlu0 %v3800
        %v3833 = vpop.xlane.xlu0 %3832
        %3834 = vadd.xlane.f32.xlu0 %v3801
        %v3835 = vpop.xlane.xlu0 %3834
        %v3836 = vrcp.pop 128.0
        %v3837 = vmul.f32 %v3805, %v3836
        %v3838 = vmul.f32 %v3807, %v3836
        %v3839 = vmul.f32 %v3809, %v3836
        %v3840 = vmul.f32 %v3811, %v3836
        %v3841 = vmul.f32 %v3813, %v3836
        %v3842 = vmul.f32 %v3815, %v3836
        %v3843 = vmul.f32 %v3817, %v3836
        %v3844 = vmul.f32 %v3819, %v3836
        %v3845 = vmul.f32 %v3821, %v3836
        %v3846 = vmul.f32 %v3823, %v3836
        %v3847 = vmul.f32 %v3825, %v3836
        %v3848 = vmul.f32 %v3827, %v3836
        %v3849 = vmul.f32 %v3829, %v3836
        %v3850 = vmul.f32 %v3831, %v3836
        %v3851 = vmul.f32 %v3833, %v3836
        %v3852 = vmul.f32 %v3835, %v3836
        %v3853 = vsub.f32 %v3786, %v3837
        %v3854 = vsub.f32 %v3787, %v3838
        %v3855 = vsub.f32 %v3788, %v3839
        %v3856 = vsub.f32 %v3789, %v3840
        %v3857 = vsub.f32 %v3790, %v3841
        %v3858 = vsub.f32 %v3791, %v3842
        %v3859 = vsub.f32 %v3792, %v3843
        %v3860 = vsub.f32 %v3793, %v3844
        %v3861 = vsub.f32 %v3794, %v3845
        %v3862 = vsub.f32 %v3795, %v3846
        %v3863 = vsub.f32 %v3796, %v3847
        %v3864 = vsub.f32 %v3797, %v3848
        %v3865 = vsub.f32 %v3798, %v3849
        %v3866 = vsub.f32 %v3799, %v3850
        %v3867 = vsub.f32 %v3800, %v3851
        %v3868 = vsub.f32 %v3801, %v3852
        %v3869 = vmul.f32 %v3853, %v3853
        %v3870 = vmul.f32 %v3854, %v3854
        %v3871 = vmul.f32 %v3855, %v3855
        %v3872 = vmul.f32 %v3856, %v3856
        %v3873 = vmul.f32 %v3857, %v3857
        %v3874 = vmul.f32 %v3858, %v3858
        %v3875 = vmul.f32 %v3859, %v3859
        %v3876 = vmul.f32 %v3860, %v3860
        %v3877 = vmul.f32 %v3861, %v3861
        %v3878 = vmul.f32 %v3862, %v3862
        %v3879 = vmul.f32 %v3863, %v3863
        %v3880 = vmul.f32 %v3864, %v3864
        %v3881 = vmul.f32 %v3865, %v3865
        %v3882 = vmul.f32 %v3866, %v3866
        %v3883 = vmul.f32 %v3867, %v3867
        %v3884 = vmul.f32 %v3868, %v3868
        %3885 = vadd.xlane.f32.xlu0 %v3869
        %v3886 = vpop.xlane.xlu0 %3885
        %3887 = vadd.xlane.f32.xlu0 %v3870
        %v3888 = vpop.xlane.xlu0 %3887
        %3889 = vadd.xlane.f32.xlu0 %v3871
        %v3890 = vpop.xlane.xlu0 %3889
        %3891 = vadd.xlane.f32.xlu0 %v3872
        %v3892 = vpop.xlane.xlu0 %3891
        %3893 = vadd.xlane.f32.xlu0 %v3873
        %v3894 = vpop.xlane.xlu0 %3893
        %3895 = vadd.xlane.f32.xlu0 %v3874
        %v3896 = vpop.xlane.xlu0 %3895
        %3897 = vadd.xlane.f32.xlu0 %v3875
        %v3898 = vpop.xlane.xlu0 %3897
        %3899 = vadd.xlane.f32.xlu0 %v3876
        %v3900 = vpop.xlane.xlu0 %3899
        %3901 = vadd.xlane.f32.xlu0 %v3877
        %v3902 = vpop.xlane.xlu0 %3901
        %3903 = vadd.xlane.f32.xlu0 %v3878
        %v3904 = vpop.xlane.xlu0 %3903
        %3905 = vadd.xlane.f32.xlu0 %v3879
        %v3906 = vpop.xlane.xlu0 %3905
        %3907 = vadd.xlane.f32.xlu0 %v3880
        %v3908 = vpop.xlane.xlu0 %3907
        %3909 = vadd.xlane.f32.xlu0 %v3881
        %v3910 = vpop.xlane.xlu0 %3909
        %3911 = vadd.xlane.f32.xlu0 %v3882
        %v3912 = vpop.xlane.xlu0 %3911
        %3913 = vadd.xlane.f32.xlu0 %v3883
        %v3914 = vpop.xlane.xlu0 %3913
        %3915 = vadd.xlane.f32.xlu0 %v3884
        %v3916 = vpop.xlane.xlu0 %3915
        %v3917 = vmul.f32 %v3886, %v3836
        %v3918 = vmul.f32 %v3888, %v3836
        %v3919 = vmul.f32 %v3890, %v3836
        %v3920 = vmul.f32 %v3892, %v3836
        %v3921 = vmul.f32 %v3894, %v3836
        %v3922 = vmul.f32 %v3896, %v3836
        %v3923 = vmul.f32 %v3898, %v3836
        %v3924 = vmul.f32 %v3900, %v3836
        %v3925 = vmul.f32 %v3902, %v3836
        %v3926 = vmul.f32 %v3904, %v3836
        %v3927 = vmul.f32 %v3906, %v3836
        %v3928 = vmul.f32 %v3908, %v3836
        %v3929 = vmul.f32 %v3910, %v3836
        %v3930 = vmul.f32 %v3912, %v3836
        %v3931 = vmul.f32 %v3914, %v3836
        %v3932 = vmul.f32 %v3916, %v3836
        %v3933 = vadd.f32 %v3917, 1e-05
        %v3934 = vadd.f32 %v3918, 1e-05
        %v3935 = vadd.f32 %v3919, 1e-05
        %v3936 = vadd.f32 %v3920, 1e-05
        %v3937 = vadd.f32 %v3921, 1e-05
        %v3938 = vadd.f32 %v3922, 1e-05
        %v3939 = vadd.f32 %v3923, 1e-05
        %v3940 = vadd.f32 %v3924, 1e-05
        %v3941 = vadd.f32 %v3925, 1e-05
        %v3942 = vadd.f32 %v3926, 1e-05
        %v3943 = vadd.f32 %v3927, 1e-05
        %v3944 = vadd.f32 %v3928, 1e-05
        %v3945 = vadd.f32 %v3929, 1e-05
        %v3946 = vadd.f32 %v3930, 1e-05
        %v3947 = vadd.f32 %v3931, 1e-05
        %v3948 = vadd.f32 %v3932, 1e-05
        %v3949 = vrsqrt.pop %v3933
        %v3950 = vrsqrt.pop %v3934
        %v3951 = vrsqrt.pop %v3935
        %v3952 = vrsqrt.pop %v3936
        %v3953 = vrsqrt.pop %v3937
        %v3954 = vrsqrt.pop %v3938
        %v3955 = vrsqrt.pop %v3939
        %v3956 = vrsqrt.pop %v3940
        %v3957 = vrsqrt.pop %v3941
        %v3958 = vrsqrt.pop %v3942
        %v3959 = vrsqrt.pop %v3943
        %v3960 = vrsqrt.pop %v3944
        %v3961 = vrsqrt.pop %v3945
        %v3962 = vrsqrt.pop %v3946
        %v3963 = vrsqrt.pop %v3947
        %v3964 = vrsqrt.pop %v3948
        %v3965 = vmul.f32 %v3853, %v3949
        %v3966 = vmul.f32 %v3854, %v3950
        %v3967 = vmul.f32 %v3855, %v3951
        %v3968 = vmul.f32 %v3856, %v3952
        %v3969 = vmul.f32 %v3857, %v3953
        %v3970 = vmul.f32 %v3858, %v3954
        %v3971 = vmul.f32 %v3859, %v3955
        %v3972 = vmul.f32 %v3860, %v3956
        %v3973 = vmul.f32 %v3861, %v3957
        %v3974 = vmul.f32 %v3862, %v3958
        %v3975 = vmul.f32 %v3863, %v3959
        %v3976 = vmul.f32 %v3864, %v3960
        %v3977 = vmul.f32 %v3865, %v3961
        %v3978 = vmul.f32 %v3866, %v3962
        %v3979 = vmul.f32 %v3867, %v3963
        %v3980 = vmul.f32 %v3868, %v3964
        %v3982 = vlaneseq
        %v3983 = vshrl.u32 %v3982, 7
        %v3984 = vsub.s32 0, %v3983
        %v3985 = vrot.slane %v3802, %v3984
        %v3987 = vmul.f32 %v3965, %v3985
        %v3988 = vmul.f32 %v3966, %v3985
        %v3989 = vmul.f32 %v3967, %v3985
        %v3990 = vmul.f32 %v3968, %v3985
        %v3991 = vmul.f32 %v3969, %v3985
        %v3992 = vmul.f32 %v3970, %v3985
        %v3993 = vmul.f32 %v3971, %v3985
        %v3994 = vmul.f32 %v3972, %v3985
        %v3995 = vmul.f32 %v3973, %v3985
        %v3996 = vmul.f32 %v3974, %v3985
        %v3997 = vmul.f32 %v3975, %v3985
        %v3998 = vmul.f32 %v3976, %v3985
        %v3999 = vmul.f32 %v3977, %v3985
        %v4000 = vmul.f32 %v3978, %v3985
        %v4001 = vmul.f32 %v3979, %v3985
        %v4002 = vmul.f32 %v3980, %v3985
        %v4004 = vlaneseq
        %v4005 = vshrl.u32 %v4004, 7
        %v4006 = vsub.s32 0, %v4005
        %v4007 = vrot.slane %v3803, %v4006
        %v4009 = vadd.f32 %v3987, %v4007
        %v4010 = vadd.f32 %v3988, %v4007
        %v4011 = vadd.f32 %v3989, %v4007
        %v4012 = vadd.f32 %v3990, %v4007
        %v4013 = vadd.f32 %v3991, %v4007
        %v4014 = vadd.f32 %v3992, %v4007
        %v4015 = vadd.f32 %v3993, %v4007
        %v4016 = vadd.f32 %v3994, %v4007
        %v4017 = vadd.f32 %v3995, %v4007
        %v4018 = vadd.f32 %v3996, %v4007
        %v4019 = vadd.f32 %v3997, %v4007
        %v4020 = vadd.f32 %v3998, %v4007
        %v4021 = vadd.f32 %v3999, %v4007
        %v4022 = vadd.f32 %v4000, %v4007
        %v4023 = vadd.f32 %v4001, %v4007
        %v4024 = vadd.f32 %v4002, %v4007
        %v4025 = vpack.c.bf16 %v4010, %v4009
        %v4026 = vpack.c.bf16 %v4012, %v4011
        %v4027 = vpack.c.bf16 %v4014, %v4013
        %v4028 = vpack.c.bf16 %v4016, %v4015
        %v4029 = vpack.c.bf16 %v4018, %v4017
        %v4030 = vpack.c.bf16 %v4020, %v4019
        %v4031 = vpack.c.bf16 %v4022, %v4021
        %v4032 = vpack.c.bf16 %v4024, %v4023
        %v4033 = vld [vmem:[#allocation13] sm:$0xff]
        %v4034 = vld [vmem:[#allocation13 + $0x8] sm:$0xff]
        %v4035 = vld [vmem:[#allocation13 + $0x10] sm:$0xff]
        %v4036 = vld [vmem:[#allocation13 + $0x18] sm:$0xff]
        %v4037 = vld [vmem:[#allocation13 + $0x20] sm:$0xff]
        %v4038 = vld [vmem:[#allocation13 + $0x28] sm:$0xff]
        %v4039 = vld [vmem:[#allocation13 + $0x30] sm:$0xff]
        %v4040 = vld [vmem:[#allocation13 + $0x38] sm:$0xff]
        %v4041 = vld [vmem:[#allocation13 + $0x40] sm:$0xff]
        %v4042 = vld [vmem:[#allocation13 + $0x48] sm:$0xff]
        %v4043 = vld [vmem:[#allocation13 + $0x50] sm:$0xff]
        %v4044 = vld [vmem:[#allocation13 + $0x58] sm:$0xff]
        %v4045 = vld [vmem:[#allocation13 + $0x60] sm:$0xff]
        %v4046 = vld [vmem:[#allocation13 + $0x68] sm:$0xff]
        %v4047 = vld [vmem:[#allocation13 + $0x70] sm:$0xff]
        %v4048 = vld [vmem:[#allocation13 + $0x78] sm:$0xff]
        %v4049 = vld [vmem:[%s11] sm:$0x3]
        %v4051 = vlaneseq
        %v4052 = vshrl.u32 %v4051, 7
        %v4053 = vsub.s32 0, %v4052
        %v4054 = vrot.slane %v4049, %v4053
        %v4055 = vlaneseq
        %v4056 = vshrl.u32 %v4055, 7
        %v4057 = vsub.s32 1, %v4056
        %v4058 = vrot.slane %v4049, %v4057
        %v4077 = vunpack.c.l.b16 %v4033
        %v4078 = vunpack.c.h.b16 %v4033
        %v4079 = vunpack.c.l.b16 %v4034
        %v4080 = vunpack.c.h.b16 %v4034
        %v4081 = vunpack.c.l.b16 %v4035
        %v4082 = vunpack.c.h.b16 %v4035
        %v4083 = vunpack.c.l.b16 %v4036
        %v4084 = vunpack.c.h.b16 %v4036
        %v4085 = vunpack.c.l.b16 %v4037
        %v4086 = vunpack.c.h.b16 %v4037
        %v4087 = vunpack.c.l.b16 %v4038
        %v4088 = vunpack.c.h.b16 %v4038
        %v4089 = vunpack.c.l.b16 %v4039
        %v4090 = vunpack.c.h.b16 %v4039
        %v4091 = vunpack.c.l.b16 %v4040
        %v4092 = vunpack.c.h.b16 %v4040
        %v4093 = vunpack.c.l.b16 %v4041
        %v4094 = vunpack.c.h.b16 %v4041
        %v4095 = vunpack.c.l.b16 %v4042
        %v4096 = vunpack.c.h.b16 %v4042
        %v4097 = vunpack.c.l.b16 %v4043
        %v4098 = vunpack.c.h.b16 %v4043
        %v4099 = vunpack.c.l.b16 %v4044
        %v4100 = vunpack.c.h.b16 %v4044
        %v4101 = vunpack.c.l.b16 %v4045
        %v4102 = vunpack.c.h.b16 %v4045
        %v4103 = vunpack.c.l.b16 %v4046
        %v4104 = vunpack.c.h.b16 %v4046
        %v4105 = vunpack.c.l.b16 %v4047
        %v4106 = vunpack.c.h.b16 %v4047
        %v4107 = vunpack.c.l.b16 %v4048
        %v4108 = vunpack.c.h.b16 %v4048
        %v4109 = vpack.c.b16 %v4079, %v4077
        %v4110 = vpack.c.b16 %v4080, %v4078
        %v4111 = vpack.c.b16 %v4083, %v4081
        %v4112 = vpack.c.b16 %v4084, %v4082
        %v4113 = vpack.c.b16 %v4087, %v4085
        %v4114 = vpack.c.b16 %v4088, %v4086
        %v4115 = vpack.c.b16 %v4091, %v4089
        %v4116 = vpack.c.b16 %v4092, %v4090
        %v4117 = vpack.c.b16 %v4095, %v4093
        %v4118 = vpack.c.b16 %v4096, %v4094
        %v4119 = vpack.c.b16 %v4099, %v4097
        %v4120 = vpack.c.b16 %v4100, %v4098
        %v4121 = vpack.c.b16 %v4103, %v4101
        %v4122 = vpack.c.b16 %v4104, %v4102
        %v4123 = vpack.c.b16 %v4107, %v4105
        %v4124 = vpack.c.b16 %v4108, %v4106
        %4141 = vmatprep.subr.bf16.mxu0 %v4124
        %4142 = vmatpush1.bf16.msra.mxu0 %v4123
        %4143 = vmatprep.subr.bf16.mxu0 %v4122
        %4144 = vmatpush1.bf16.msra.mxu0 %v4121
        %4145 = vmatprep.subr.bf16.mxu0 %v4120
        %4146 = vmatpush1.bf16.msra.mxu0 %v4119
        %4147 = vmatprep.subr.bf16.mxu0 %v4118
        %4148 = vmatpush1.bf16.msra.mxu0 %v4117
        %4149 = vmatprep.subr.bf16.mxu0 %v4116
        %4150 = vmatpush1.bf16.msra.mxu0 %v4115
        %4151 = vmatprep.subr.bf16.mxu0 %v4114
        %4152 = vmatpush1.bf16.msra.mxu0 %v4113
        %4153 = vmatprep.subr.bf16.mxu0 %v4112
        %4154 = vmatpush1.bf16.msra.mxu0 %v4111
        %4155 = vmatprep.subr.bf16.mxu0 %v4110
        %4156 = vmatpush1.bf16.msra.mxu0 %v4109
        %4157 = vmatprep.subr.bf16.mxu0 0
        %4158 = vmatpush2.bf16.msra.mxu0 0
        %4159 = vmatprep.subr.bf16.mxu0 0
        %4160 = vmatpush2.bf16.msra.mxu0 0
        %4161 = vmatprep.subr.bf16.mxu0 0
        %4162 = vmatpush2.bf16.msra.mxu0 0
        %4163 = vmatprep.subr.bf16.mxu0 0
        %4164 = vmatpush2.bf16.msra.mxu0 0
        %4165 = vmatprep.subr.bf16.mxu0 0
        %4166 = vmatpush2.bf16.msra.mxu0 0
        %4167 = vmatprep.subr.bf16.mxu0 0
        %4168 = vmatpush2.bf16.msra.mxu0 0
        %4169 = vmatprep.subr.bf16.mxu0 0
        %4170 = vmatpush2.bf16.msra.mxu0 0
        %4171 = vmatprep.subr.bf16.mxu0 0
        %4172 = vmatpush2.bf16.msra.mxu0 0
        %4173 = vmatprep.mubr.bf16.mxu0 0
        %4174 = vmatmul.mubr.bf16.gmra.mxu0 %v4025
        %v4175 = vpop.f32.mrf.mxu0
        %v4176 = vadd.f32 %v4054, %v4175
        %v4177 = vpop.f32.mrf.mxu0
        %v4178 = vadd.f32 %v4058, %v4177
        %v4179 = vpop.f32.mrf.mxu0
        %v4180 = vadd.f32 %v4054, %v4179
        %v4181 = vpop.f32.mrf.mxu0
        %v4182 = vadd.f32 %v4058, %v4181
        %4183 = vmatprep.mubr.bf16.mxu0 0
        %4184 = vmatmul.mubr.bf16.gmra.mxu0 %v4026
        %v4185 = vpop.f32.mrf.mxu0
        %v4186 = vadd.f32 %v4054, %v4185
        %v4187 = vpop.f32.mrf.mxu0
        %v4188 = vadd.f32 %v4058, %v4187
        %v4189 = vpop.f32.mrf.mxu0
        %v4190 = vadd.f32 %v4054, %v4189
        %v4191 = vpop.f32.mrf.mxu0
        %v4192 = vadd.f32 %v4058, %v4191
        %4193 = vmatprep.mubr.bf16.mxu0 0
        %4194 = vmatmul.mubr.bf16.gmra.mxu0 %v4027
        %v4195 = vpop.f32.mrf.mxu0
        %v4196 = vadd.f32 %v4054, %v4195
        %v4197 = vpop.f32.mrf.mxu0
        %v4198 = vadd.f32 %v4058, %v4197
        %v4199 = vpop.f32.mrf.mxu0
        %v4200 = vadd.f32 %v4054, %v4199
        %v4201 = vpop.f32.mrf.mxu0
        %v4202 = vadd.f32 %v4058, %v4201
        %4203 = vmatprep.mubr.bf16.mxu0 0
        %4204 = vmatmul.mubr.bf16.gmra.mxu0 %v4028
        %v4205 = vpop.f32.mrf.mxu0
        %v4206 = vadd.f32 %v4054, %v4205
        %v4207 = vpop.f32.mrf.mxu0
        %v4208 = vadd.f32 %v4058, %v4207
        %v4209 = vpop.f32.mrf.mxu0
        %v4210 = vadd.f32 %v4054, %v4209
        %v4211 = vpop.f32.mrf.mxu0
        %v4212 = vadd.f32 %v4058, %v4211
        %4213 = vmatprep.mubr.bf16.mxu0 0
        %4214 = vmatmul.mubr.bf16.gmra.mxu0 %v4029
        %v4215 = vpop.f32.mrf.mxu0
        %v4216 = vadd.f32 %v4054, %v4215
        %v4217 = vpop.f32.mrf.mxu0
        %v4218 = vadd.f32 %v4058, %v4217
        %v4219 = vpop.f32.mrf.mxu0
        %v4220 = vadd.f32 %v4054, %v4219
        %v4221 = vpop.f32.mrf.mxu0
        %v4222 = vadd.f32 %v4058, %v4221
        %4223 = vmatprep.mubr.bf16.mxu0 0
        %4224 = vmatmul.mubr.bf16.gmra.mxu0 %v4030
        %v4225 = vpop.f32.mrf.mxu0
        %v4226 = vadd.f32 %v4054, %v4225
        %v4227 = vpop.f32.mrf.mxu0
        %v4228 = vadd.f32 %v4058, %v4227
        %v4229 = vpop.f32.mrf.mxu0
        %v4230 = vadd.f32 %v4054, %v4229
        %v4231 = vpop.f32.mrf.mxu0
        %v4232 = vadd.f32 %v4058, %v4231
        %4233 = vmatprep.mubr.bf16.mxu0 0
        %4234 = vmatmul.mubr.bf16.gmra.mxu0 %v4031
        %v4235 = vpop.f32.mrf.mxu0
        %v4236 = vadd.f32 %v4054, %v4235
        %v4237 = vpop.f32.mrf.mxu0
        %v4238 = vadd.f32 %v4058, %v4237
        %v4239 = vpop.f32.mrf.mxu0
        %v4240 = vadd.f32 %v4054, %v4239
        %v4241 = vpop.f32.mrf.mxu0
        %v4242 = vadd.f32 %v4058, %v4241
        %4243 = vmatprep.mubr.bf16.mxu0 0
        %4244 = vmatmul.mubr.bf16.gmra.mxu0 %v4032
        %v4245 = vpop.f32.mrf.mxu0
        %v4246 = vadd.f32 %v4054, %v4245
        %v4247 = vpop.f32.mrf.mxu0
        %v4248 = vadd.f32 %v4058, %v4247
        %v4249 = vpop.f32.mrf.mxu0
        %v4250 = vadd.f32 %v4054, %v4249
        %v4251 = vpop.f32.mrf.mxu0
        %v4252 = vadd.f32 %v4058, %v4251
        %4253 = vdwg.mxu0
        %v4254 = vmax.f32 %v4176, 0.0
        %v4255 = vmax.f32 %v4178, 0.0
        %v4256 = vmax.f32 %v4180, 0.0
        %v4257 = vmax.f32 %v4182, 0.0
        %v4258 = vmax.f32 %v4186, 0.0
        %v4259 = vmax.f32 %v4188, 0.0
        %v4260 = vmax.f32 %v4190, 0.0
        %v4261 = vmax.f32 %v4192, 0.0
        %v4262 = vmax.f32 %v4196, 0.0
        %v4263 = vmax.f32 %v4198, 0.0
        %v4264 = vmax.f32 %v4200, 0.0
        %v4265 = vmax.f32 %v4202, 0.0
        %v4266 = vmax.f32 %v4206, 0.0
        %v4267 = vmax.f32 %v4208, 0.0
        %v4268 = vmax.f32 %v4210, 0.0
        %v4269 = vmax.f32 %v4212, 0.0
        %v4270 = vmax.f32 %v4216, 0.0
        %v4271 = vmax.f32 %v4218, 0.0
        %v4272 = vmax.f32 %v4220, 0.0
        %v4273 = vmax.f32 %v4222, 0.0
        %v4274 = vmax.f32 %v4226, 0.0
        %v4275 = vmax.f32 %v4228, 0.0
        %v4276 = vmax.f32 %v4230, 0.0
        %v4277 = vmax.f32 %v4232, 0.0
        %v4278 = vmax.f32 %v4236, 0.0
        %v4279 = vmax.f32 %v4238, 0.0
        %v4280 = vmax.f32 %v4240, 0.0
        %v4281 = vmax.f32 %v4242, 0.0
        %v4282 = vmax.f32 %v4246, 0.0
        %v4283 = vmax.f32 %v4248, 0.0
        %v4284 = vmax.f32 %v4250, 0.0
        %v4285 = vmax.f32 %v4252, 0.0
        %v4286 = vpack.c.bf16 %v4256, %v4254
        %v4287 = vpack.c.bf16 %v4257, %v4255
        %v4288 = vpack.c.bf16 %v4260, %v4258
        %v4289 = vpack.c.bf16 %v4261, %v4259
        %v4290 = vpack.c.bf16 %v4264, %v4262
        %v4291 = vpack.c.bf16 %v4265, %v4263
        %v4292 = vpack.c.bf16 %v4268, %v4266
        %v4293 = vpack.c.bf16 %v4269, %v4267
        %v4294 = vpack.c.bf16 %v4272, %v4270
        %v4295 = vpack.c.bf16 %v4273, %v4271
        %v4296 = vpack.c.bf16 %v4276, %v4274
        %v4297 = vpack.c.bf16 %v4277, %v4275
        %v4298 = vpack.c.bf16 %v4280, %v4278
        %v4299 = vpack.c.bf16 %v4281, %v4279
        %v4300 = vpack.c.bf16 %v4284, %v4282
        %v4301 = vpack.c.bf16 %v4285, %v4283
        %v4302 = vld [vmem:[#allocation14] sm:$0xf]
        %v4303 = vld [vmem:[#allocation14 + $0x4] sm:$0xf]
        %v4304 = vld [vmem:[#allocation14 + $0x8] sm:$0xf]
        %v4305 = vld [vmem:[#allocation14 + $0xc] sm:$0xf]
        %v4306 = vld [vmem:[#allocation14 + $0x10] sm:$0xf]
        %v4307 = vld [vmem:[#allocation14 + $0x14] sm:$0xf]
        %v4308 = vld [vmem:[#allocation14 + $0x18] sm:$0xf]
        %v4309 = vld [vmem:[#allocation14 + $0x1c] sm:$0xf]
        %v4310 = vld [vmem:[#allocation14 + $0x20] sm:$0xf]
        %v4311 = vld [vmem:[#allocation14 + $0x24] sm:$0xf]
        %v4312 = vld [vmem:[#allocation14 + $0x28] sm:$0xf]
        %v4313 = vld [vmem:[#allocation14 + $0x2c] sm:$0xf]
        %v4314 = vld [vmem:[#allocation14 + $0x30] sm:$0xf]
        %v4315 = vld [vmem:[#allocation14 + $0x34] sm:$0xf]
        %v4316 = vld [vmem:[#allocation14 + $0x38] sm:$0xf]
        %v4317 = vld [vmem:[#allocation14 + $0x3c] sm:$0xf]
        %v4318 = vld [vmem:[#allocation14 + $0x40] sm:$0xf]
        %v4319 = vld [vmem:[#allocation14 + $0x44] sm:$0xf]
        %v4320 = vld [vmem:[#allocation14 + $0x48] sm:$0xf]
        %v4321 = vld [vmem:[#allocation14 + $0x4c] sm:$0xf]
        %v4322 = vld [vmem:[#allocation14 + $0x50] sm:$0xf]
        %v4323 = vld [vmem:[#allocation14 + $0x54] sm:$0xf]
        %v4324 = vld [vmem:[#allocation14 + $0x58] sm:$0xf]
        %v4325 = vld [vmem:[#allocation14 + $0x5c] sm:$0xf]
        %v4326 = vld [vmem:[#allocation14 + $0x60] sm:$0xf]
        %v4327 = vld [vmem:[#allocation14 + $0x64] sm:$0xf]
        %v4328 = vld [vmem:[#allocation14 + $0x68] sm:$0xf]
        %v4329 = vld [vmem:[#allocation14 + $0x6c] sm:$0xf]
        %v4330 = vld [vmem:[#allocation14 + $0x70] sm:$0xf]
        %v4331 = vld [vmem:[#allocation14 + $0x74] sm:$0xf]
        %v4332 = vld [vmem:[#allocation14 + $0x78] sm:$0xf]
        %v4333 = vld [vmem:[#allocation14 + $0x7c] sm:$0xf]
        %v4334 = vld [vmem:[%s13] sm:$0x1]
        %v4336 = vlaneseq
        %v4337 = vshrl.u32 %v4336, 7
        %v4338 = vsub.s32 0, %v4337
        %v4339 = vrot.slane %v4334, %v4338
        %v4373 = vunpack.c.l.b16 %v4302
        %v4374 = vunpack.c.l.b16 %v4303
        %v4375 = vunpack.c.l.b16 %v4304
        %v4376 = vunpack.c.l.b16 %v4305
        %v4377 = vunpack.c.l.b16 %v4306
        %v4378 = vunpack.c.l.b16 %v4307
        %v4379 = vunpack.c.l.b16 %v4308
        %v4380 = vunpack.c.l.b16 %v4309
        %v4381 = vunpack.c.l.b16 %v4310
        %v4382 = vunpack.c.l.b16 %v4311
        %v4383 = vunpack.c.l.b16 %v4312
        %v4384 = vunpack.c.l.b16 %v4313
        %v4385 = vunpack.c.l.b16 %v4314
        %v4386 = vunpack.c.l.b16 %v4315
        %v4387 = vunpack.c.l.b16 %v4316
        %v4388 = vunpack.c.l.b16 %v4317
        %v4389 = vunpack.c.l.b16 %v4318
        %v4390 = vunpack.c.l.b16 %v4319
        %v4391 = vunpack.c.l.b16 %v4320
        %v4392 = vunpack.c.l.b16 %v4321
        %v4393 = vunpack.c.l.b16 %v4322
        %v4394 = vunpack.c.l.b16 %v4323
        %v4395 = vunpack.c.l.b16 %v4324
        %v4396 = vunpack.c.l.b16 %v4325
        %v4397 = vunpack.c.l.b16 %v4326
        %v4398 = vunpack.c.l.b16 %v4327
        %v4399 = vunpack.c.l.b16 %v4328
        %v4400 = vunpack.c.l.b16 %v4329
        %v4401 = vunpack.c.l.b16 %v4330
        %v4402 = vunpack.c.l.b16 %v4331
        %v4403 = vunpack.c.l.b16 %v4332
        %v4404 = vunpack.c.l.b16 %v4333
        %v4405 = vpack.c.b16 %v4374, %v4373
        %v4406 = vpack.c.b16 %v4376, %v4375
        %v4407 = vpack.c.b16 %v4378, %v4377
        %v4408 = vpack.c.b16 %v4380, %v4379
        %v4409 = vpack.c.b16 %v4382, %v4381
        %v4410 = vpack.c.b16 %v4384, %v4383
        %v4411 = vpack.c.b16 %v4386, %v4385
        %v4412 = vpack.c.b16 %v4388, %v4387
        %v4413 = vpack.c.b16 %v4390, %v4389
        %v4414 = vpack.c.b16 %v4392, %v4391
        %v4415 = vpack.c.b16 %v4394, %v4393
        %v4416 = vpack.c.b16 %v4396, %v4395
        %v4417 = vpack.c.b16 %v4398, %v4397
        %v4418 = vpack.c.b16 %v4400, %v4399
        %v4419 = vpack.c.b16 %v4402, %v4401
        %v4420 = vpack.c.b16 %v4404, %v4403
        %4437 = vmatprep.subr.bf16.mxu0 0
        %4438 = vmatpush1.bf16.msra.mxu0 %v4412
        %4439 = vmatprep.subr.bf16.mxu0 0
        %4440 = vmatpush1.bf16.msra.mxu0 %v4411
        %4441 = vmatprep.subr.bf16.mxu0 0
        %4442 = vmatpush1.bf16.msra.mxu0 %v4410
        %4443 = vmatprep.subr.bf16.mxu0 0
        %4444 = vmatpush1.bf16.msra.mxu0 %v4409
        %4445 = vmatprep.subr.bf16.mxu0 0
        %4446 = vmatpush1.bf16.msra.mxu0 %v4408
        %4447 = vmatprep.subr.bf16.mxu0 0
        %4448 = vmatpush1.bf16.msra.mxu0 %v4407
        %4449 = vmatprep.subr.bf16.mxu0 0
        %4450 = vmatpush1.bf16.msra.mxu0 %v4406
        %4451 = vmatprep.subr.bf16.mxu0 0
        %4452 = vmatpush1.bf16.msra.mxu0 %v4405
        %4453 = vmatprep.subr.bf16.mxu0 0
        %4454 = vmatpush2.bf16.msra.mxu0 %v4420
        %4455 = vmatprep.subr.bf16.mxu0 0
        %4456 = vmatpush2.bf16.msra.mxu0 %v4419
        %4457 = vmatprep.subr.bf16.mxu0 0
        %4458 = vmatpush2.bf16.msra.mxu0 %v4418
        %4459 = vmatprep.subr.bf16.mxu0 0
        %4460 = vmatpush2.bf16.msra.mxu0 %v4417
        %4461 = vmatprep.subr.bf16.mxu0 0
        %4462 = vmatpush2.bf16.msra.mxu0 %v4416
        %4463 = vmatprep.subr.bf16.mxu0 0
        %4464 = vmatpush2.bf16.msra.mxu0 %v4415
        %4465 = vmatprep.subr.bf16.mxu0 0
        %4466 = vmatpush2.bf16.msra.mxu0 %v4414
        %4467 = vmatprep.subr.bf16.mxu0 0
        %4468 = vmatpush2.bf16.msra.mxu0 %v4413
        %4469 = vmatprep.mubr.bf16.mxu0 %v4287
        %4470 = vmatmul.mubr.bf16.gmra.mxu0 %v4286
        %v4471 = vpop.f32.mrf.mxu0
        %v4472 = vadd.f32 %v4339, %v4471
        %v4473 = vpop.f32.mrf.mxu0
        %v4474 = vpop.f32.mrf.mxu0
        %v4475 = vadd.f32 %v4339, %v4474
        %v4476 = vpop.f32.mrf.mxu0
        %4477 = vmatprep.mubr.bf16.mxu0 %v4289
        %4478 = vmatmul.mubr.bf16.gmra.mxu0 %v4288
        %v4479 = vpop.f32.mrf.mxu0
        %v4480 = vadd.f32 %v4339, %v4479
        %v4481 = vpop.f32.mrf.mxu0
        %v4482 = vpop.f32.mrf.mxu0
        %v4483 = vadd.f32 %v4339, %v4482
        %v4484 = vpop.f32.mrf.mxu0
        %4485 = vmatprep.mubr.bf16.mxu0 %v4291
        %4486 = vmatmul.mubr.bf16.gmra.mxu0 %v4290
        %v4487 = vpop.f32.mrf.mxu0
        %v4488 = vadd.f32 %v4339, %v4487
        %v4489 = vpop.f32.mrf.mxu0
        %v4490 = vpop.f32.mrf.mxu0
        %v4491 = vadd.f32 %v4339, %v4490
        %v4492 = vpop.f32.mrf.mxu0
        %4493 = vmatprep.mubr.bf16.mxu0 %v4293
        %4494 = vmatmul.mubr.bf16.gmra.mxu0 %v4292
        %v4495 = vpop.f32.mrf.mxu0
        %v4496 = vadd.f32 %v4339, %v4495
        %v4497 = vpop.f32.mrf.mxu0
        %v4498 = vpop.f32.mrf.mxu0
        %v4499 = vadd.f32 %v4339, %v4498
        %v4500 = vpop.f32.mrf.mxu0
        %4501 = vmatprep.mubr.bf16.mxu0 %v4295
        %4502 = vmatmul.mubr.bf16.gmra.mxu0 %v4294
        %v4503 = vpop.f32.mrf.mxu0
        %v4504 = vadd.f32 %v4339, %v4503
        %v4505 = vpop.f32.mrf.mxu0
        %v4506 = vpop.f32.mrf.mxu0
        %v4507 = vadd.f32 %v4339, %v4506
        %v4508 = vpop.f32.mrf.mxu0
        %4509 = vmatprep.mubr.bf16.mxu0 %v4297
        %4510 = vmatmul.mubr.bf16.gmra.mxu0 %v4296
        %v4511 = vpop.f32.mrf.mxu0
        %v4512 = vadd.f32 %v4339, %v4511
        %v4513 = vpop.f32.mrf.mxu0
        %v4514 = vpop.f32.mrf.mxu0
        %v4515 = vadd.f32 %v4339, %v4514
        %v4516 = vpop.f32.mrf.mxu0
        %4517 = vmatprep.mubr.bf16.mxu0 %v4299
        %4518 = vmatmul.mubr.bf16.gmra.mxu0 %v4298
        %v4519 = vpop.f32.mrf.mxu0
        %v4520 = vadd.f32 %v4339, %v4519
        %v4521 = vpop.f32.mrf.mxu0
        %v4522 = vpop.f32.mrf.mxu0
        %v4523 = vadd.f32 %v4339, %v4522
        %v4524 = vpop.f32.mrf.mxu0
        %4525 = vmatprep.mubr.bf16.mxu0 %v4301
        %4526 = vmatmul.mubr.bf16.gmra.mxu0 %v4300
        %v4527 = vpop.f32.mrf.mxu0
        %v4528 = vadd.f32 %v4339, %v4527
        %v4529 = vpop.f32.mrf.mxu0
        %v4530 = vpop.f32.mrf.mxu0
        %v4531 = vadd.f32 %v4339, %v4530
        %v4532 = vpop.f32.mrf.mxu0
        %4533 = vdwg.mxu0
        %v4534 = vadd.f32 %v4009, %v4472
        %v4535 = vadd.f32 %v4010, %v4475
        %v4536 = vadd.f32 %v4011, %v4480
        %v4537 = vadd.f32 %v4012, %v4483
        %v4538 = vadd.f32 %v4013, %v4488
        %v4539 = vadd.f32 %v4014, %v4491
        %v4540 = vadd.f32 %v4015, %v4496
        %v4541 = vadd.f32 %v4016, %v4499
        %v4542 = vadd.f32 %v4017, %v4504
        %v4543 = vadd.f32 %v4018, %v4507
        %v4544 = vadd.f32 %v4019, %v4512
        %v4545 = vadd.f32 %v4020, %v4515
        %v4546 = vadd.f32 %v4021, %v4520
        %v4547 = vadd.f32 %v4022, %v4523
        %v4548 = vadd.f32 %v4023, %v4528
        %v4549 = vadd.f32 %v4024, %v4531
        %v4550 = vld [vmem:[%s16] sm:$0x1]
        %v4551 = vld [vmem:[%s17] sm:$0x1]
        %4552 = vadd.xlane.f32.xlu0 %v4534
        %v4553 = vpop.xlane.xlu0 %4552
        %4554 = vadd.xlane.f32.xlu0 %v4535
        %v4555 = vpop.xlane.xlu0 %4554
        %4556 = vadd.xlane.f32.xlu0 %v4536
        %v4557 = vpop.xlane.xlu0 %4556
        %4558 = vadd.xlane.f32.xlu0 %v4537
        %v4559 = vpop.xlane.xlu0 %4558
        %4560 = vadd.xlane.f32.xlu0 %v4538
        %v4561 = vpop.xlane.xlu0 %4560
        %4562 = vadd.xlane.f32.xlu0 %v4539
        %v4563 = vpop.xlane.xlu0 %4562
        %4564 = vadd.xlane.f32.xlu0 %v4540
        %v4565 = vpop.xlane.xlu0 %4564
        %4566 = vadd.xlane.f32.xlu0 %v4541
        %v4567 = vpop.xlane.xlu0 %4566
        %4568 = vadd.xlane.f32.xlu0 %v4542
        %v4569 = vpop.xlane.xlu0 %4568
        %4570 = vadd.xlane.f32.xlu0 %v4543
        %v4571 = vpop.xlane.xlu0 %4570
        %4572 = vadd.xlane.f32.xlu0 %v4544
        %v4573 = vpop.xlane.xlu0 %4572
        %4574 = vadd.xlane.f32.xlu0 %v4545
        %v4575 = vpop.xlane.xlu0 %4574
        %4576 = vadd.xlane.f32.xlu0 %v4546
        %v4577 = vpop.xlane.xlu0 %4576
        %4578 = vadd.xlane.f32.xlu0 %v4547
        %v4579 = vpop.xlane.xlu0 %4578
        %4580 = vadd.xlane.f32.xlu0 %v4548
        %v4581 = vpop.xlane.xlu0 %4580
        %4582 = vadd.xlane.f32.xlu0 %v4549
        %v4583 = vpop.xlane.xlu0 %4582
        %v4584 = vmul.f32 %v4553, %v3836
        %v4585 = vmul.f32 %v4555, %v3836
        %v4586 = vmul.f32 %v4557, %v3836
        %v4587 = vmul.f32 %v4559, %v3836
        %v4588 = vmul.f32 %v4561, %v3836
        %v4589 = vmul.f32 %v4563, %v3836
        %v4590 = vmul.f32 %v4565, %v3836
        %v4591 = vmul.f32 %v4567, %v3836
        %v4592 = vmul.f32 %v4569, %v3836
        %v4593 = vmul.f32 %v4571, %v3836
        %v4594 = vmul.f32 %v4573, %v3836
        %v4595 = vmul.f32 %v4575, %v3836
        %v4596 = vmul.f32 %v4577, %v3836
        %v4597 = vmul.f32 %v4579, %v3836
        %v4598 = vmul.f32 %v4581, %v3836
        %v4599 = vmul.f32 %v4583, %v3836
        %v4600 = vsub.f32 %v4534, %v4584
        %v4601 = vsub.f32 %v4535, %v4585
        %v4602 = vsub.f32 %v4536, %v4586
        %v4603 = vsub.f32 %v4537, %v4587
        %v4604 = vsub.f32 %v4538, %v4588
        %v4605 = vsub.f32 %v4539, %v4589
        %v4606 = vsub.f32 %v4540, %v4590
        %v4607 = vsub.f32 %v4541, %v4591
        %v4608 = vsub.f32 %v4542, %v4592
        %v4609 = vsub.f32 %v4543, %v4593
        %v4610 = vsub.f32 %v4544, %v4594
        %v4611 = vsub.f32 %v4545, %v4595
        %v4612 = vsub.f32 %v4546, %v4596
        %v4613 = vsub.f32 %v4547, %v4597
        %v4614 = vsub.f32 %v4548, %v4598
        %v4615 = vsub.f32 %v4549, %v4599
        %v4616 = vmul.f32 %v4600, %v4600
        %v4617 = vmul.f32 %v4601, %v4601
        %v4618 = vmul.f32 %v4602, %v4602
        %v4619 = vmul.f32 %v4603, %v4603
        %v4620 = vmul.f32 %v4604, %v4604
        %v4621 = vmul.f32 %v4605, %v4605
        %v4622 = vmul.f32 %v4606, %v4606
        %v4623 = vmul.f32 %v4607, %v4607
        %v4624 = vmul.f32 %v4608, %v4608
        %v4625 = vmul.f32 %v4609, %v4609
        %v4626 = vmul.f32 %v4610, %v4610
        %v4627 = vmul.f32 %v4611, %v4611
        %v4628 = vmul.f32 %v4612, %v4612
        %v4629 = vmul.f32 %v4613, %v4613
        %v4630 = vmul.f32 %v4614, %v4614
        %v4631 = vmul.f32 %v4615, %v4615
        %4632 = vadd.xlane.f32.xlu0 %v4616
        %v4633 = vpop.xlane.xlu0 %4632
        %4634 = vadd.xlane.f32.xlu0 %v4617
        %v4635 = vpop.xlane.xlu0 %4634
        %4636 = vadd.xlane.f32.xlu0 %v4618
        %v4637 = vpop.xlane.xlu0 %4636
        %4638 = vadd.xlane.f32.xlu0 %v4619
        %v4639 = vpop.xlane.xlu0 %4638
        %4640 = vadd.xlane.f32.xlu0 %v4620
        %v4641 = vpop.xlane.xlu0 %4640
        %4642 = vadd.xlane.f32.xlu0 %v4621
        %v4643 = vpop.xlane.xlu0 %4642
        %4644 = vadd.xlane.f32.xlu0 %v4622
        %v4645 = vpop.xlane.xlu0 %4644
        %4646 = vadd.xlane.f32.xlu0 %v4623
        %v4647 = vpop.xlane.xlu0 %4646
        %4648 = vadd.xlane.f32.xlu0 %v4624
        %v4649 = vpop.xlane.xlu0 %4648
        %4650 = vadd.xlane.f32.xlu0 %v4625
        %v4651 = vpop.xlane.xlu0 %4650
        %4652 = vadd.xlane.f32.xlu0 %v4626
        %v4653 = vpop.xlane.xlu0 %4652
        %4654 = vadd.xlane.f32.xlu0 %v4627
        %v4655 = vpop.xlane.xlu0 %4654
        %4656 = vadd.xlane.f32.xlu0 %v4628
        %v4657 = vpop.xlane.xlu0 %4656
        %4658 = vadd.xlane.f32.xlu0 %v4629
        %v4659 = vpop.xlane.xlu0 %4658
        %4660 = vadd.xlane.f32.xlu0 %v4630
        %v4661 = vpop.xlane.xlu0 %4660
        %4662 = vadd.xlane.f32.xlu0 %v4631
        %v4663 = vpop.xlane.xlu0 %4662
        %v4664 = vmul.f32 %v4633, %v3836
        %v4665 = vmul.f32 %v4635, %v3836
        %v4666 = vmul.f32 %v4637, %v3836
        %v4667 = vmul.f32 %v4639, %v3836
        %v4668 = vmul.f32 %v4641, %v3836
        %v4669 = vmul.f32 %v4643, %v3836
        %v4670 = vmul.f32 %v4645, %v3836
        %v4671 = vmul.f32 %v4647, %v3836
        %v4672 = vmul.f32 %v4649, %v3836
        %v4673 = vmul.f32 %v4651, %v3836
        %v4674 = vmul.f32 %v4653, %v3836
        %v4675 = vmul.f32 %v4655, %v3836
        %v4676 = vmul.f32 %v4657, %v3836
        %v4677 = vmul.f32 %v4659, %v3836
        %v4678 = vmul.f32 %v4661, %v3836
        %v4679 = vmul.f32 %v4663, %v3836
        %v4680 = vadd.f32 %v4664, 1e-05
        %v4681 = vadd.f32 %v4665, 1e-05
        %v4682 = vadd.f32 %v4666, 1e-05
        %v4683 = vadd.f32 %v4667, 1e-05
        %v4684 = vadd.f32 %v4668, 1e-05
        %v4685 = vadd.f32 %v4669, 1e-05
        %v4686 = vadd.f32 %v4670, 1e-05
        %v4687 = vadd.f32 %v4671, 1e-05
        %v4688 = vadd.f32 %v4672, 1e-05
        %v4689 = vadd.f32 %v4673, 1e-05
        %v4690 = vadd.f32 %v4674, 1e-05
        %v4691 = vadd.f32 %v4675, 1e-05
        %v4692 = vadd.f32 %v4676, 1e-05
        %v4693 = vadd.f32 %v4677, 1e-05
        %v4694 = vadd.f32 %v4678, 1e-05
        %v4695 = vadd.f32 %v4679, 1e-05
        %v4696 = vrsqrt.pop %v4680
        %v4697 = vrsqrt.pop %v4681
        %v4698 = vrsqrt.pop %v4682
        %v4699 = vrsqrt.pop %v4683
        %v4700 = vrsqrt.pop %v4684
        %v4701 = vrsqrt.pop %v4685
        %v4702 = vrsqrt.pop %v4686
        %v4703 = vrsqrt.pop %v4687
        %v4704 = vrsqrt.pop %v4688
        %v4705 = vrsqrt.pop %v4689
        %v4706 = vrsqrt.pop %v4690
        %v4707 = vrsqrt.pop %v4691
        %v4708 = vrsqrt.pop %v4692
        %v4709 = vrsqrt.pop %v4693
        %v4710 = vrsqrt.pop %v4694
        %v4711 = vrsqrt.pop %v4695
        %v4712 = vmul.f32 %v4600, %v4696
        %v4713 = vmul.f32 %v4601, %v4697
        %v4714 = vmul.f32 %v4602, %v4698
        %v4715 = vmul.f32 %v4603, %v4699
        %v4716 = vmul.f32 %v4604, %v4700
        %v4717 = vmul.f32 %v4605, %v4701
        %v4718 = vmul.f32 %v4606, %v4702
        %v4719 = vmul.f32 %v4607, %v4703
        %v4720 = vmul.f32 %v4608, %v4704
        %v4721 = vmul.f32 %v4609, %v4705
        %v4722 = vmul.f32 %v4610, %v4706
        %v4723 = vmul.f32 %v4611, %v4707
        %v4724 = vmul.f32 %v4612, %v4708
        %v4725 = vmul.f32 %v4613, %v4709
        %v4726 = vmul.f32 %v4614, %v4710
        %v4727 = vmul.f32 %v4615, %v4711
        %v4729 = vlaneseq
        %v4730 = vshrl.u32 %v4729, 7
        %v4731 = vsub.s32 0, %v4730
        %v4732 = vrot.slane %v4550, %v4731
        %v4734 = vmul.f32 %v4712, %v4732
        %v4735 = vmul.f32 %v4713, %v4732
        %v4736 = vmul.f32 %v4714, %v4732
        %v4737 = vmul.f32 %v4715, %v4732
        %v4738 = vmul.f32 %v4716, %v4732
        %v4739 = vmul.f32 %v4717, %v4732
        %v4740 = vmul.f32 %v4718, %v4732
        %v4741 = vmul.f32 %v4719, %v4732
        %v4742 = vmul.f32 %v4720, %v4732
        %v4743 = vmul.f32 %v4721, %v4732
        %v4744 = vmul.f32 %v4722, %v4732
        %v4745 = vmul.f32 %v4723, %v4732
        %v4746 = vmul.f32 %v4724, %v4732
        %v4747 = vmul.f32 %v4725, %v4732
        %v4748 = vmul.f32 %v4726, %v4732
        %v4749 = vmul.f32 %v4727, %v4732
        %v4751 = vlaneseq
        %v4752 = vshrl.u32 %v4751, 7
        %v4753 = vsub.s32 0, %v4752
        %v4754 = vrot.slane %v4551, %v4753
        %v4756 = vadd.f32 %v4734, %v4754
        %v4757 = vadd.f32 %v4735, %v4754
        %v4758 = vadd.f32 %v4736, %v4754
        %v4759 = vadd.f32 %v4737, %v4754
        %v4760 = vadd.f32 %v4738, %v4754
        %v4761 = vadd.f32 %v4739, %v4754
        %v4762 = vadd.f32 %v4740, %v4754
        %v4763 = vadd.f32 %v4741, %v4754
        %v4764 = vadd.f32 %v4742, %v4754
        %v4765 = vadd.f32 %v4743, %v4754
        %v4766 = vadd.f32 %v4744, %v4754
        %v4767 = vadd.f32 %v4745, %v4754
        %v4768 = vadd.f32 %v4746, %v4754
        %v4769 = vadd.f32 %v4747, %v4754
        %v4770 = vadd.f32 %v4748, %v4754
        %v4771 = vadd.f32 %v4749, %v4754
        %4772 = vst [vmem:[%s738] sm:$0xff] %v4756
        %4773 = vst [vmem:[%s738 + $0x8] sm:$0xff] %v4757
        %4774 = vst [vmem:[%s738 + $0x10] sm:$0xff] %v4758
        %4775 = vst [vmem:[%s738 + $0x18] sm:$0xff] %v4759
        %4776 = vst [vmem:[%s738 + $0x20] sm:$0xff] %v4760
        %4777 = vst [vmem:[%s738 + $0x28] sm:$0xff] %v4761
        %4778 = vst [vmem:[%s738 + $0x30] sm:$0xff] %v4762
        %4779 = vst [vmem:[%s738 + $0x38] sm:$0xff] %v4763
        %4780 = vst [vmem:[%s738 + $0x40] sm:$0xff] %v4764
        %4781 = vst [vmem:[%s738 + $0x48] sm:$0xff] %v4765
        %4782 = vst [vmem:[%s738 + $0x50] sm:$0xff] %v4766
        %4783 = vst [vmem:[%s738 + $0x58] sm:$0xff] %v4767
        %4784 = vst [vmem:[%s738 + $0x60] sm:$0xff] %v4768
        %4785 = vst [vmem:[%s738 + $0x68] sm:$0xff] %v4769
        %4786 = vst [vmem:[%s738 + $0x70] sm:$0xff] %v4770
        %4787 = vst [vmem:[%s738 + $0x78] sm:$0xff] %v4771
        %s4788 = sand.u32 %s453, 1
        %s4789 = scalar_lea.sflag [#allocation4], %s4788
        %s4790 = sand.u32 %s453, 1
        %s4791 = smul.addr %s4790, 128
        %s4792 = scalar_lea.vmem [#allocation16], %s4791
        // Predicated region
        $region125: #{tpu_custom_call.1} parent=91 // pred_check
          %p4793 = pneg %p463
        $region126: #{tpu_custom_call.1} parent=91 // pred_check_branch
          %4795 = sbr.rel (%p4793) target = $region128
        $region127: #{tpu_custom_call.1} parent=91 // pred_region
          %s4796 = smul.u32 16, %s45
          %s4798 = ssub.s32 2048, 2048
          %4799 = vsyncadd %s4789, %s4798
          %s4800 = smul.addr %s46, 16
          %s4801 = sadd.s32 %s4796, %s4800
          %s4802 = smul.addr %s4801, 128
          %s4803 = scalar_lea.hbm %s18, %s4802
          %s4804 = sshll.u32 %s4792, 4
          %s4805 = int_to_ptr.vmem [resolvable:$true] %s4804
          %4810 = dma.vmem_to_hbm [thread:$0]  %s4805, 2048, %s4803, %s4789, 128, 128, 8
        $region128: #{tpu_custom_call.1} parent=91 // pred_fallthru
          _
      $region92: #{tpu_custom_call.1} parent=5 // pred_fallthru
        _
      %p4811 = scmp.le.s32.totalorder 2, %s36
      // Predicated region
      $region129: #{tpu_custom_call.1} parent=5 // pred_check
        %p4812 = pneg %p4811
      $region130: #{tpu_custom_call.1} parent=5 // pred_check_branch
        %4814 = sbr.rel (%p4812) target = $region132
      $region131: #{tpu_custom_call.1} parent=5 // pred_region
        %s4815 = ssub.s32 %s36, 2
        // Predicated region
        $region133: #{tpu_custom_call.1} parent=131 // pred_check
          %p4816 = pneg %p469
        $region134: #{tpu_custom_call.1} parent=131 // pred_check_branch
          %4818 = sbr.rel (%p4816) target = $region136
        $region135: #{tpu_custom_call.1} parent=131 // pred_region
          %s4819 = sand.u32 %s454, 1
          %s4820 = scalar_lea.sflag [#allocation4], %s4819
          %s4821 = sand.u32 %s454, 1
          %s4822 = smul.addr %s4821, 128
          %s4823 = scalar_lea.vmem [#allocation16], %s4822
          %4824 = dma.done %s4820, 2048
        $region136: #{tpu_custom_call.1} parent=131 // pred_fallthru
          _
      $region132: #{tpu_custom_call.1} parent=5 // pred_fallthru
        _
    $region6: #{tpu_custom_call.1} parent=1 // loop_footer
      %s40 = sadd.s32 1, %s36
    $region7: #{tpu_custom_call.1} parent=1 // loop_footer_branch
      %35 = sbr.rel target = $region3
    $region8: #{tpu_custom_call.1} parent=1 // loop_exit
      _
    %4825 = vsyncpa [#allocation3], 1
    %s4826 = scalar_lea.sflag [#allocation3], 1
    %4827 = vsyncpa %s4826, 1
    %4828 = vsyncpa [#allocation6], 1
    %s4829 = scalar_lea.sflag [#allocation6], 1
    %4830 = vsyncpa %s4829, 1
    %4831 = vsyncpa [#allocation9], 1
    %4832 = vsyncpa [#allocation12], 1
    %4833 = vsyncpa [#allocation15], 1
    %4834 = vsyncpa [#allocation4], 1
    %s4835 = scalar_lea.sflag [#allocation4], 1
    %4836 = vsyncpa %s4835, 1

</llo_original>
